<compile_context>
chip_gen: v7x
topology: tpu7x:2x2x1
jax: 0.10.0
libtpu: 0.0.40
codegen_flags: <defaults>
</compile_context>

<pallas_src>
import jax
import jax.numpy as jnp
from jax import lax
from jax.experimental import pallas as pl
from jax.experimental.pallas import tpu as pltpu

# DevignModel(input_dim, output_dim, max_edge_types, num_steps) hyperparameters.
INPUT_DIM = 32
OUTPUT_DIM = 32                       # GatedGraphConv out_channels (== input_dim, no zero-pad of x)
CONCAT_DIM = INPUT_DIM + OUTPUT_DIM   # 64
MAX_EDGE_TYPES = 4
NUM_STEPS = 2
B = 2                                 # graphs in the batch
N = 16                                # max nodes per graph (de_batchify padding length)
TOT_NODES = B * N                     # 32
LANES = 128
OUT_ROWS = 8                          # lane/sublane-dense output slab
BN_EPS = 1e-5


# --------------------------------------------------------------------------
# Parameter packing: one lane-dense (rows, 128) slab + static row layout.
# --------------------------------------------------------------------------
def pack_params(p):
    D, C = OUTPUT_DIM, CONCAT_DIM
    wih, whh, bih, bhh = p["wih"], p["whh"], p["bih"], p["bhh"]

    entries = []
    for s in range(NUM_STEPS):
        entries.append((f"ggnn_w{s}", p["ggnn_w"][s]))                    # (D, D)
    # GRUCell split per gate (PyTorch gate order r | z | n); r/z biases combined.
    entries += [
        ("wir", wih[:, 0:D]), ("wiz", wih[:, D:2 * D]), ("win", wih[:, 2 * D:3 * D]),
        ("whr", whh[:, 0:D]), ("whz", whh[:, D:2 * D]), ("whn", whh[:, 2 * D:3 * D]),
        ("br", bih[:, 0:D] + bhh[:, 0:D]),
        ("bz", bih[:, D:2 * D] + bhh[:, D:2 * D]),
        ("bin", bih[:, 2 * D:3 * D]),
        ("bhn", bhh[:, 2 * D:3 * D]),
    ]
    for k in range(3):
        entries.append((f"c1w{k}", p["c1w"][k]))                          # (D, D)
    entries += [("c1b", p["c1b"]), ("bn1s", p["bn1s"]), ("bn1b", p["bn1b"]),
                ("c2w", p["c2w"]), ("c2b", p["c2b"])]
    # concat-branch k=3 conv weights split along Cin: rows [0:D] hit h, [D:] hit x.
    for k in range(3):
        entries.append((f"cc1wh{k}", p["cc1w"][k][:OUTPUT_DIM, :]))       # (D, C)
        entries.append((f"cc1wx{k}", p["cc1w"][k][OUTPUT_DIM:, :]))       # (Din, C)
    entries += [("cc1b", p["cc1b"]), ("bncs", p["bncs"]), ("bncb", p["bncb"]),
                ("cc2w", p["cc2w"]), ("cc2b", p["cc2b"])]
    # Heads zero-padded to 128 output lanes -> lane-dense results downstream.
    entries += [("myw", jnp.pad(p["myw"], ((0, 0), (0, LANES - 2)))),
                ("myb", jnp.pad(p["myb"], ((0, 0), (0, LANES - 2)))),
                ("mzw", jnp.pad(p["mzw"], ((0, 0), (0, LANES - 2)))),
                ("mzb", jnp.pad(p["mzb"], ((0, 0), (0, LANES - 2))))]

    layout = {}
    blocks = []
    off = 0
    for name, arr in entries:
        arr = jnp.asarray(arr, jnp.float32)
        r, c = arr.shape
        layout[name] = (off, r, c)
        arr = jnp.pad(arr, ((0, (-r) % 8), (0, LANES - c)))   # 8-row aligned, 128 lanes
        blocks.append(arr)
        off += arr.shape[0]
    slab = jnp.concatenate(blocks, axis=0)                    # (rows, 128)
    return slab, layout


# --------------------------------------------------------------------------
# The fused kernel (single invocation, all graphs batched).
# --------------------------------------------------------------------------
def make_kernel(layout):
    D = OUTPUT_DIM
    L1 = N - 2                     # conv1d(k=3) output length per graph   (14)
    P1 = (L1 - 3) // 2 + 1         # maxpool1d(3, stride=2) output length  (6)
    P2 = P1 // 2                   # maxpool1d(2, stride=2) output length  (3)

    def kernel(lens_ref, adj_ref, x_ref, slab_ref, out_ref):
        def prm(name):
            o, r, c = layout[name]
            blk = slab_ref[o:o + r, :]            # aligned full-lane load
            return blk if c == LANES else blk[:, 0:c]

        A = adj_ref[...]                          # (B*N, B*N) block-diag adjacency
        x = x_ref[...]                            # (B*N, INPUT_DIM), padded rows zero

        # ---------------- GatedGraphConv: num_steps x (propagate + GRUCell) --------
        wir, wiz, win = prm("wir"), prm("wiz"), prm("win")
        whr, whz, whn = prm("whr"), prm("whz"), prm("whn")
        br, bz, bin_, bhn = prm("br"), prm("bz"), prm("bin"), prm("bhn")

        h = x                                     # input_dim == output_dim
        for s in range(NUM_STEPS):
            msg = jnp.dot(h, prm(f"ggnn_w{s}"), preferred_element_type=jnp.float32)
            m = jnp.dot(A, msg, preferred_element_type=jnp.float32)       # aggr='add'
            r = jax.nn.sigmoid(jnp.dot(m, wir, preferred_element_type=jnp.float32)
                               + jnp.dot(h, whr, preferred_element_type=jnp.float32) + br)
            z = jax.nn.sigmoid(jnp.dot(m, wiz, preferred_element_type=jnp.float32)
                               + jnp.dot(h, whz, preferred_element_type=jnp.float32) + bz)
            n = jnp.tanh(jnp.dot(m, win, preferred_element_type=jnp.float32) + bin_
                         + r * (jnp.dot(h, whn, preferred_element_type=jnp.float32) + bhn))
            h = (1.0 - z) * n + z * h

        # de_batchify_graphs zero-pads rows beyond each graph's size -> mask them.
        row = lax.broadcasted_iota(jnp.int32, (TOT_NODES, D), 0)
        local = row
        limit = jnp.zeros_like(row) + lens_ref[0]
        for g in range(1, B):
            in_g = row >= g * N
            local = jnp.where(in_g, row - g * N, local)
            limit = jnp.where(in_g, lens_ref[g], limit)
        h = h * (local < limit).astype(jnp.float32)

        # ---------------- conv taps on full aligned blocks (batched over graphs) ----
        taps_y = [jnp.dot(h, prm(f"c1w{k}"), preferred_element_type=jnp.float32)
                  for k in range(3)]
        # concat branch: conv1d([h, x]) == conv_h(h) + conv_x(x)  (weights pre-split)
        taps_z = [jnp.dot(h, prm(f"cc1wh{k}"), preferred_element_type=jnp.float32)
                  + jnp.dot(x, prm(f"cc1wx{k}"), preferred_element_type=jnp.float32)
                  for k in range(3)]

        def branch(taps, b1, bn_s, bn_b, w2, b2, wm, bm):
            # conv1d(k=3, no pad) via shifted adds -> BN -> relu -> maxpool(3, 2)
            pooled = []
            for g in range(B):
                o = g * N
                y = (taps[0][o:o + L1]
                     + taps[1][o + 1:o + 1 + L1]
                     + taps[2][o + 2:o + 2 + L1] + b1)
                y = jnp.maximum(y * bn_s + bn_b, 0.0)
                for i in range(P1):
                    pooled.append(jnp.max(y[2 * i:2 * i + 3, :], axis=0, keepdims=True))
            yb = jnp.concatenate(pooled, axis=0)                  # (B*P1, C)
            # conv1d(k=1) -> BN (same module) -> relu -> maxpool(2, 2), batched
            yb = jnp.dot(yb, w2, preferred_element_type=jnp.float32) + b2
            yb = jnp.maximum(yb * bn_s + bn_b, 0.0)
            pooled2 = [jnp.max(yb[2 * i:2 * i + 2, :], axis=0, keepdims=True)
                       for i in range(B * P2)]
            yb2 = jnp.concatenate(pooled2, axis=0)                # (B*P2, C)
            # linear head (weights pre-padded to 128 lanes -> lane-dense result)
            return jnp.dot(yb2, wm, preferred_element_type=jnp.float32) + bm

        yo = branch(taps_y, prm("c1b"), prm("bn1s"), prm("bn1b"),
                    prm("c2w"), prm("c2b"), prm("myw"), prm("myb"))   # (B*P2, 128)
        zo = branch(taps_z, prm("cc1b"), prm("bncs"), prm("bncb"),
                    prm("cc2w"), prm("cc2b"), prm("mzw"), prm("mzb"))  # (B*P2, 128)

        prod = yo * zo                                             # lanes >=2 are exactly 0
        rows = [jnp.sum(prod[g * P2:(g + 1) * P2, :], axis=0, keepdims=True) * (1.0 / P2)
                for g in range(B)]
        rows.append(jnp.zeros((OUT_ROWS - B, LANES), jnp.float32))
        out_ref[...] = jnp.concatenate(rows, axis=0)               # single lane-dense store

    return kernel


def devign_forward(lens, adj_bd, x_flat, slab, layout):
    kernel = make_kernel(layout)
    out = pl.pallas_call(
        kernel,
        out_shape=jax.ShapeDtypeStruct((OUT_ROWS, LANES), jnp.float32),
        grid=(1,),
        in_specs=[
            pl.BlockSpec(memory_space=pltpu.MemorySpace.SMEM),          # per-graph node counts
            pl.BlockSpec(adj_bd.shape, lambda i: (0, 0)),               # block-diag adjacency
            pl.BlockSpec(x_flat.shape, lambda i: (0, 0)),               # padded node features
            pl.BlockSpec(slab.shape, lambda i: (0, 0)),                 # packed parameter slab
        ],
        out_specs=pl.BlockSpec((OUT_ROWS, LANES), lambda i: (0, 0)),
    )(lens, adj_bd, x_flat, slab)
    return out[:B, :2]                                                  # (B, 2)


# --------------------------------------------------------------------------
# Plain-JAX reference (same math, original parameter forms) for validation.
# --------------------------------------------------------------------------
def forward_ref(lens, adj, x_pad, p):
    D = OUTPUT_DIM

    def one(A, xb, nb):
        h = xb
        for s in range(NUM_STEPS):
            m = A @ (h @ p["ggnn_w"][s])
            gi = m @ p["wih"] + p["bih"][0]
            gh = h @ p["whh"] + p["bhh"][0]
            r = jax.nn.sigmoid(gi[:, :D] + gh[:, :D])
            z = jax.nn.sigmoid(gi[:, D:2 * D] + gh[:, D:2 * D])
            n = jnp.tanh(gi[:, 2 * D:] + r * gh[:, 2 * D:])
            h = (1.0 - z) * n + z * h
        msk = (jnp.arange(N)[:, None] < nb).astype(jnp.float32)
        h = h * msk
        c = jnp.concatenate([h, xb], axis=-1)

        def branch(inp, w1, b1, s_, t_, w2, b2):
            L1 = N - 2
            y = inp[0:L1] @ w1[0] + inp[1:L1 + 1] @ w1[1] + inp[2:L1 + 2] @ w1[2] + b1[0]
            y = jnp.maximum(y * s_[0] + t_[0], 0.0)
            P1 = (L1 - 3) // 2 + 1
            y = jnp.stack([jnp.max(y[2 * i:2 * i + 3], axis=0) for i in range(P1)])
            y = y @ w2 + b2[0]
            y = jnp.maximum(y * s_[0] + t_[0], 0.0)
            y = jnp.stack([jnp.max(y[2 * i:2 * i + 2], axis=0) for i in range(P1 // 2)])
            return y

        Y2 = branch(h, p["c1w"], p["c1b"], p["bn1s"], p["bn1b"], p["c2w"], p["c2b"])
        Z2 = branch(c, p["cc1w"], p["cc1b"], p["bncs"], p["bncb"], p["cc2w"], p["cc2b"])
        yo = Y2 @ p["myw"] + p["myb"][0]
        zo = Z2 @ p["mzw"] + p["mzb"][0]
        return jnp.mean(yo * zo, axis=0)

    return jax.vmap(one)(adj, x_pad, lens)


if __name__ == "__main__":
    key = jax.random.PRNGKey(0)
    ks = jax.random.split(key, 8)

    # ---- synthetic batched graph (torch_geometric-style flat layout) ----
    n_nodes = jnp.array([16, 12], dtype=jnp.int32)                    # nodes per graph
    total_nodes = int(n_nodes.sum())
    batch = jnp.concatenate([jnp.full((int(n_nodes[i]),), i, dtype=jnp.int32) for i in range(B)])
    offsets = jnp.concatenate([jnp.zeros((1,), jnp.int32), jnp.cumsum(n_nodes)[:-1]])

    x_nodes = jax.random.normal(ks[0], (total_nodes, INPUT_DIM), jnp.float32)

    E = 60
    e_graph = jax.random.randint(ks[1], (E,), 0, B)
    src_loc = jax.random.randint(ks[2], (E,), 0, N) % n_nodes[e_graph]
    dst_loc = jax.random.randint(ks[3], (E,), 0, N) % n_nodes[e_graph]
    src = offsets[e_graph] + src_loc
    dst = offsets[e_graph] + dst_loc
    # edge_attr is passed as GatedGraphConv's edge_weight (3rd positional arg)
    edge_attr = jax.random.randint(ks[4], (E,), 0, MAX_EDGE_TYPES).astype(jnp.float32)

    # ---- plain-JAX glue: de_batchify_graphs + dense / block-diag adjacency ----
    local_idx = jnp.arange(total_nodes, dtype=jnp.int32) - offsets[batch]
    x_pad = jnp.zeros((B, N, INPUT_DIM), jnp.float32).at[batch, local_idx].set(x_nodes)
    b_e = batch[src]
    adj = jnp.zeros((B, N, N), jnp.float32).at[b_e, dst_loc, src_loc].add(edge_attr)

    x_flat = x_pad.reshape(TOT_NODES, INPUT_DIM)                       # (B*N, Din)
    adj_bd = jnp.zeros((TOT_NODES, TOT_NODES), jnp.float32).at[
        b_e * N + dst_loc, b_e * N + src_loc].add(edge_attr)           # block-diagonal

    # ---- deterministic synthetic parameters ----
    def rnd(k, shape, scale=0.2):
        return scale * jax.random.normal(k, shape, jnp.float32)

    D, C = OUTPUT_DIM, CONCAT_DIM
    gk = jax.random.split(ks[5], 24)
    params = {
        "ggnn_w": rnd(gk[0], (NUM_STEPS, D, D)),       # GatedGraphConv per-layer weight
        "wih": rnd(gk[1], (D, 3 * D)),                 # GRUCell weight_ih^T (gates r|z|n)
        "whh": rnd(gk[2], (D, 3 * D)),                 # GRUCell weight_hh^T
        "bih": rnd(gk[3], (1, 3 * D)),
        "bhh": rnd(gk[4], (1, 3 * D)),
        "c1w": rnd(gk[5], (3, D, D)),                  # Conv1d(D, D, 3) as (K, Cin, Cout)
        "c1b": rnd(gk[6], (1, D)),
        "c2w": rnd(gk[7], (D, D)),                     # Conv1d(D, D, 1) as (Cin, Cout)
        "c2b": rnd(gk[8], (1, D)),
        "cc1w": rnd(gk[9], (3, C, C)),                 # Conv1d(C, C, 3)
        "cc1b": rnd(gk[10], (1, C)),
        "cc2w": rnd(gk[11], (C, C)),                   # Conv1d(C, C, 1)
        "cc2b": rnd(gk[12], (1, C)),
        "myw": rnd(gk[13], (D, 2)),                    # mlp_y
        "myb": rnd(gk[14], (1, 2)),
        "mzw": rnd(gk[15], (C, 2)),                    # mlp_z
        "mzb": rnd(gk[16], (1, 2)),
    }
    # BatchNorm1d eval mode (running_mean=0, running_var=1) folded to scale/shift.
    gamma1 = 1.0 + rnd(gk[17], (1, D)); beta1 = rnd(gk[18], (1, D))
    gammac = 1.0 + rnd(gk[19], (1, C)); betac = rnd(gk[20], (1, C))
    params["bn1s"] = gamma1 / jnp.sqrt(1.0 + BN_EPS); params["bn1b"] = beta1
    params["bncs"] = gammac / jnp.sqrt(1.0 + BN_EPS); params["bncb"] = betac

    slab, layout = pack_params(params)

    out = devign_forward(n_nodes, adj_bd, x_flat, slab, layout)
    out = jax.block_until_ready(out)

    ref = forward_ref(n_nodes, adj, x_pad, params)
    if not bool(jnp.allclose(out, ref, rtol=1e-3, atol=1e-3)):
        raise AssertionError(f"Pallas output mismatch:\n{out}\nvs\n{ref}")
    print("KERNEL_OK")
</pallas_src>

<mosaic_0001>
module attributes {stable_mosaic.version = 11 : i64} {
  func.func @kernel(%arg0: i32, %arg1: memref<2xi32, #tpu.memory_space<smem>>, %arg2: memref<32x32xf32, #tpu.memory_space<vmem>>, %arg3: memref<32x32xf32, #tpu.memory_space<vmem>>, %arg4: memref<848x128xf32, #tpu.memory_space<vmem>>, %arg5: memref<8x128xf32, #tpu.memory_space<vmem>>) attributes {dimension_semantics = [#tpu.dimension_semantics<arbitrary>], iteration_bounds = array<i64: 1>, scalar_prefetch = 0 : i64, scratch_operands = 0 : i64, tpu.core_type = #tpu.core_type<tc>, window_params = [{transform_indices = @transform_0, window_bounds = array<i64: 2>}, {pipeline_mode = #tpu.pipeline_mode<synchronous>, transform_indices = @transform_1, window_bounds = array<i64: 32, 32>}, {pipeline_mode = #tpu.pipeline_mode<synchronous>, transform_indices = @transform_2, window_bounds = array<i64: 32, 32>}, {pipeline_mode = #tpu.pipeline_mode<synchronous>, transform_indices = @transform_3, window_bounds = array<i64: 848, 128>}, {pipeline_mode = #tpu.pipeline_mode<synchronous>, transform_indices = @transform_4, window_bounds = array<i64: 8, 128>}]} {
    %c0 = arith.constant 0 : index
    %c0_0 = arith.constant 0 : index
    %0 = vector.load %arg2[%c0, %c0_0] : memref<32x32xf32, #tpu.memory_space<vmem>>, vector<32x32xf32>
    %c0_1 = arith.constant 0 : index
    %c0_2 = arith.constant 0 : index
    %1 = vector.load %arg3[%c0_1, %c0_2] : memref<32x32xf32, #tpu.memory_space<vmem>>, vector<32x32xf32>
    %c64 = arith.constant 64 : index
    %c0_3 = arith.constant 0 : index
    %2 = vector.load %arg4[%c64, %c0_3] : memref<848x128xf32, #tpu.memory_space<vmem>>, vector<32x128xf32>
    %3 = vector.extract_strided_slice %2 {offsets = [0, 0], sizes = [32, 32], strides = [1, 1]} : vector<32x128xf32> to vector<32x32xf32>
    %c96 = arith.constant 96 : index
    %c0_4 = arith.constant 0 : index
    %4 = vector.load %arg4[%c96, %c0_4] : memref<848x128xf32, #tpu.memory_space<vmem>>, vector<32x128xf32>
    %5 = vector.extract_strided_slice %4 {offsets = [0, 0], sizes = [32, 32], strides = [1, 1]} : vector<32x128xf32> to vector<32x32xf32>
    %c128 = arith.constant 128 : index
    %c0_5 = arith.constant 0 : index
    %6 = vector.load %arg4[%c128, %c0_5] : memref<848x128xf32, #tpu.memory_space<vmem>>, vector<32x128xf32>
    %7 = vector.extract_strided_slice %6 {offsets = [0, 0], sizes = [32, 32], strides = [1, 1]} : vector<32x128xf32> to vector<32x32xf32>
    %c160 = arith.constant 160 : index
    %c0_6 = arith.constant 0 : index
    %8 = vector.load %arg4[%c160, %c0_6] : memref<848x128xf32, #tpu.memory_space<vmem>>, vector<32x128xf32>
    %9 = vector.extract_strided_slice %8 {offsets = [0, 0], sizes = [32, 32], strides = [1, 1]} : vector<32x128xf32> to vector<32x32xf32>
    %c192 = arith.constant 192 : index
    %c0_7 = arith.constant 0 : index
    %10 = vector.load %arg4[%c192, %c0_7] : memref<848x128xf32, #tpu.memory_space<vmem>>, vector<32x128xf32>
    %11 = vector.extract_strided_slice %10 {offsets = [0, 0], sizes = [32, 32], strides = [1, 1]} : vector<32x128xf32> to vector<32x32xf32>
    %c224 = arith.constant 224 : index
    %c0_8 = arith.constant 0 : index
    %12 = vector.load %arg4[%c224, %c0_8] : memref<848x128xf32, #tpu.memory_space<vmem>>, vector<32x128xf32>
    %13 = vector.extract_strided_slice %12 {offsets = [0, 0], sizes = [32, 32], strides = [1, 1]} : vector<32x128xf32> to vector<32x32xf32>
    %c256 = arith.constant 256 : index
    %c0_9 = arith.constant 0 : index
    %14 = vector.load %arg4[%c256, %c0_9] : memref<848x128xf32, #tpu.memory_space<vmem>>, vector<1x128xf32>
    %15 = vector.extract_strided_slice %14 {offsets = [0, 0], sizes = [1, 32], strides = [1, 1]} : vector<1x128xf32> to vector<1x32xf32>
    %c264 = arith.constant 264 : index
    %c0_10 = arith.constant 0 : index
    %16 = vector.load %arg4[%c264, %c0_10] : memref<848x128xf32, #tpu.memory_space<vmem>>, vector<1x128xf32>
    %17 = vector.extract_strided_slice %16 {offsets = [0, 0], sizes = [1, 32], strides = [1, 1]} : vector<1x128xf32> to vector<1x32xf32>
    %c272 = arith.constant 272 : index
    %c0_11 = arith.constant 0 : index
    %18 = vector.load %arg4[%c272, %c0_11] : memref<848x128xf32, #tpu.memory_space<vmem>>, vector<1x128xf32>
    %19 = vector.extract_strided_slice %18 {offsets = [0, 0], sizes = [1, 32], strides = [1, 1]} : vector<1x128xf32> to vector<1x32xf32>
    %c280 = arith.constant 280 : index
    %c0_12 = arith.constant 0 : index
    %20 = vector.load %arg4[%c280, %c0_12] : memref<848x128xf32, #tpu.memory_space<vmem>>, vector<1x128xf32>
    %21 = vector.extract_strided_slice %20 {offsets = [0, 0], sizes = [1, 32], strides = [1, 1]} : vector<1x128xf32> to vector<1x32xf32>
    %c0_13 = arith.constant 0 : index
    %c0_14 = arith.constant 0 : index
    %22 = vector.load %arg4[%c0_13, %c0_14] : memref<848x128xf32, #tpu.memory_space<vmem>>, vector<32x128xf32>
    %23 = vector.extract_strided_slice %22 {offsets = [0, 0], sizes = [32, 32], strides = [1, 1]} : vector<32x128xf32> to vector<32x32xf32>
    %cst = arith.constant dense<0.000000e+00> : vector<32x32xf32>
    %24 = tpu.matmul %1, %23, %cst {dimension_numbers = #tpu.dot_dimension_numbers<[1], [0], [0], [1], [0, 0, 1, 1], [], []>} : vector<32x32xf32>, vector<32x32xf32>, vector<32x32xf32> -> vector<32x32xf32>
    %cst_15 = arith.constant dense<0.000000e+00> : vector<32x32xf32>
    %25 = tpu.matmul %0, %24, %cst_15 {dimension_numbers = #tpu.dot_dimension_numbers<[1], [0], [0], [1], [0, 0, 1, 1], [], []>} : vector<32x32xf32>, vector<32x32xf32>, vector<32x32xf32> -> vector<32x32xf32>
    %cst_16 = arith.constant dense<0.000000e+00> : vector<32x32xf32>
    %26 = tpu.matmul %25, %3, %cst_16 {dimension_numbers = #tpu.dot_dimension_numbers<[1], [0], [0], [1], [0, 0, 1, 1], [], []>} : vector<32x32xf32>, vector<32x32xf32>, vector<32x32xf32> -> vector<32x32xf32>
    %cst_17 = arith.constant dense<0.000000e+00> : vector<32x32xf32>
    %27 = tpu.matmul %1, %9, %cst_17 {dimension_numbers = #tpu.dot_dimension_numbers<[1], [0], [0], [1], [0, 0, 1, 1], [], []>} : vector<32x32xf32>, vector<32x32xf32>, vector<32x32xf32> -> vector<32x32xf32>
    %28 = arith.addf %26, %27 : vector<32x32xf32>
    %29 = vector.broadcast %15 : vector<1x32xf32> to vector<32x32xf32>
    %30 = arith.addf %28, %29 : vector<32x32xf32>
    %31 = arith.negf %30 : vector<32x32xf32>
    %32 = math.exp %31 : vector<32x32xf32>
    %cst_18 = arith.constant 1.000000e+00 : f32
    %33 = vector.broadcast %cst_18 : f32 to vector<32x32xf32>
    %34 = arith.addf %33, %32 : vector<32x32xf32>
    %35 = arith.divf %33, %34 : vector<32x32xf32>
    %cst_19 = arith.constant dense<0.000000e+00> : vector<32x32xf32>
    %36 = tpu.matmul %25, %5, %cst_19 {dimension_numbers = #tpu.dot_dimension_numbers<[1], [0], [0], [1], [0, 0, 1, 1], [], []>} : vector<32x32xf32>, vector<32x32xf32>, vector<32x32xf32> -> vector<32x32xf32>
    %cst_20 = arith.constant dense<0.000000e+00> : vector<32x32xf32>
    %37 = tpu.matmul %1, %11, %cst_20 {dimension_numbers = #tpu.dot_dimension_numbers<[1], [0], [0], [1], [0, 0, 1, 1], [], []>} : vector<32x32xf32>, vector<32x32xf32>, vector<32x32xf32> -> vector<32x32xf32>
    %38 = arith.addf %36, %37 : vector<32x32xf32>
    %39 = vector.broadcast %17 : vector<1x32xf32> to vector<32x32xf32>
    %40 = arith.addf %38, %39 : vector<32x32xf32>
    %41 = arith.negf %40 : vector<32x32xf32>
    %42 = math.exp %41 : vector<32x32xf32>
    %cst_21 = arith.constant 1.000000e+00 : f32
    %43 = vector.broadcast %cst_21 : f32 to vector<32x32xf32>
    %44 = arith.addf %43, %42 : vector<32x32xf32>
    %45 = arith.divf %43, %44 : vector<32x32xf32>
    %cst_22 = arith.constant dense<0.000000e+00> : vector<32x32xf32>
    %46 = tpu.matmul %25, %7, %cst_22 {dimension_numbers = #tpu.dot_dimension_numbers<[1], [0], [0], [1], [0, 0, 1, 1], [], []>} : vector<32x32xf32>, vector<32x32xf32>, vector<32x32xf32> -> vector<32x32xf32>
    %47 = vector.broadcast %19 : vector<1x32xf32> to vector<32x32xf32>
    %48 = arith.addf %46, %47 : vector<32x32xf32>
    %cst_23 = arith.constant dense<0.000000e+00> : vector<32x32xf32>
    %49 = tpu.matmul %1, %13, %cst_23 {dimension_numbers = #tpu.dot_dimension_numbers<[1], [0], [0], [1], [0, 0, 1, 1], [], []>} : vector<32x32xf32>, vector<32x32xf32>, vector<32x32xf32> -> vector<32x32xf32>
    %50 = vector.broadcast %21 : vector<1x32xf32> to vector<32x32xf32>
    %51 = arith.addf %49, %50 : vector<32x32xf32>
    %52 = arith.mulf %35, %51 : vector<32x32xf32>
    %53 = arith.addf %48, %52 : vector<32x32xf32>
    %54 = math.tanh %53 : vector<32x32xf32>
    %cst_24 = arith.constant 1.000000e+00 : f32
    %55 = vector.broadcast %cst_24 : f32 to vector<32x32xf32>
    %56 = arith.subf %55, %45 : vector<32x32xf32>
    %57 = arith.mulf %56, %54 : vector<32x32xf32>
    %58 = arith.mulf %45, %1 : vector<32x32xf32>
    %59 = arith.addf %57, %58 : vector<32x32xf32>
    %c32 = arith.constant 32 : index
    %c0_25 = arith.constant 0 : index
    %60 = vector.load %arg4[%c32, %c0_25] : memref<848x128xf32, #tpu.memory_space<vmem>>, vector<32x128xf32>
    %61 = vector.extract_strided_slice %60 {offsets = [0, 0], sizes = [32, 32], strides = [1, 1]} : vector<32x128xf32> to vector<32x32xf32>
    %cst_26 = arith.constant dense<0.000000e+00> : vector<32x32xf32>
    %62 = tpu.matmul %59, %61, %cst_26 {dimension_numbers = #tpu.dot_dimension_numbers<[1], [0], [0], [1], [0, 0, 1, 1], [], []>} : vector<32x32xf32>, vector<32x32xf32>, vector<32x32xf32> -> vector<32x32xf32>
    %cst_27 = arith.constant dense<0.000000e+00> : vector<32x32xf32>
    %63 = tpu.matmul %0, %62, %cst_27 {dimension_numbers = #tpu.dot_dimension_numbers<[1], [0], [0], [1], [0, 0, 1, 1], [], []>} : vector<32x32xf32>, vector<32x32xf32>, vector<32x32xf32> -> vector<32x32xf32>
    %cst_28 = arith.constant dense<0.000000e+00> : vector<32x32xf32>
    %64 = tpu.matmul %63, %3, %cst_28 {dimension_numbers = #tpu.dot_dimension_numbers<[1], [0], [0], [1], [0, 0, 1, 1], [], []>} : vector<32x32xf32>, vector<32x32xf32>, vector<32x32xf32> -> vector<32x32xf32>
    %cst_29 = arith.constant dense<0.000000e+00> : vector<32x32xf32>
    %65 = tpu.matmul %59, %9, %cst_29 {dimension_numbers = #tpu.dot_dimension_numbers<[1], [0], [0], [1], [0, 0, 1, 1], [], []>} : vector<32x32xf32>, vector<32x32xf32>, vector<32x32xf32> -> vector<32x32xf32>
    %66 = arith.addf %64, %65 : vector<32x32xf32>
    %67 = vector.broadcast %15 : vector<1x32xf32> to vector<32x32xf32>
    %68 = arith.addf %66, %67 : vector<32x32xf32>
    %69 = arith.negf %68 : vector<32x32xf32>
    %70 = math.exp %69 : vector<32x32xf32>
    %cst_30 = arith.constant 1.000000e+00 : f32
    %71 = vector.broadcast %cst_30 : f32 to vector<32x32xf32>
    %72 = arith.addf %71, %70 : vector<32x32xf32>
    %73 = arith.divf %71, %72 : vector<32x32xf32>
    %cst_31 = arith.constant dense<0.000000e+00> : vector<32x32xf32>
    %74 = tpu.matmul %63, %5, %cst_31 {dimension_numbers = #tpu.dot_dimension_numbers<[1], [0], [0], [1], [0, 0, 1, 1], [], []>} : vector<32x32xf32>, vector<32x32xf32>, vector<32x32xf32> -> vector<32x32xf32>
    %cst_32 = arith.constant dense<0.000000e+00> : vector<32x32xf32>
    %75 = tpu.matmul %59, %11, %cst_32 {dimension_numbers = #tpu.dot_dimension_numbers<[1], [0], [0], [1], [0, 0, 1, 1], [], []>} : vector<32x32xf32>, vector<32x32xf32>, vector<32x32xf32> -> vector<32x32xf32>
    %76 = arith.addf %74, %75 : vector<32x32xf32>
    %77 = vector.broadcast %17 : vector<1x32xf32> to vector<32x32xf32>
    %78 = arith.addf %76, %77 : vector<32x32xf32>
    %79 = arith.negf %78 : vector<32x32xf32>
    %80 = math.exp %79 : vector<32x32xf32>
    %cst_33 = arith.constant 1.000000e+00 : f32
    %81 = vector.broadcast %cst_33 : f32 to vector<32x32xf32>
    %82 = arith.addf %81, %80 : vector<32x32xf32>
    %83 = arith.divf %81, %82 : vector<32x32xf32>
    %cst_34 = arith.constant dense<0.000000e+00> : vector<32x32xf32>
    %84 = tpu.matmul %63, %7, %cst_34 {dimension_numbers = #tpu.dot_dimension_numbers<[1], [0], [0], [1], [0, 0, 1, 1], [], []>} : vector<32x32xf32>, vector<32x32xf32>, vector<32x32xf32> -> vector<32x32xf32>
    %85 = vector.broadcast %19 : vector<1x32xf32> to vector<32x32xf32>
    %86 = arith.addf %84, %85 : vector<32x32xf32>
    %cst_35 = arith.constant dense<0.000000e+00> : vector<32x32xf32>
    %87 = tpu.matmul %59, %13, %cst_35 {dimension_numbers = #tpu.dot_dimension_numbers<[1], [0], [0], [1], [0, 0, 1, 1], [], []>} : vector<32x32xf32>, vector<32x32xf32>, vector<32x32xf32> -> vector<32x32xf32>
    %88 = vector.broadcast %21 : vector<1x32xf32> to vector<32x32xf32>
    %89 = arith.addf %87, %88 : vector<32x32xf32>
    %90 = arith.mulf %73, %89 : vector<32x32xf32>
    %91 = arith.addf %86, %90 : vector<32x32xf32>
    %92 = math.tanh %91 : vector<32x32xf32>
    %cst_36 = arith.constant 1.000000e+00 : f32
    %93 = vector.broadcast %cst_36 : f32 to vector<32x32xf32>
    %94 = arith.subf %93, %83 : vector<32x32xf32>
    %95 = arith.mulf %94, %92 : vector<32x32xf32>
    %96 = arith.mulf %83, %59 : vector<32x32xf32>
    %97 = arith.addf %95, %96 : vector<32x32xf32>
    %98 = tpu.iota {dimensions = array<i32: 0>} : vector<32x32xi32>
    %c0_i32 = arith.constant 0 : i32
    %99 = vector.broadcast %c0_i32 : i32 to vector<32x32xi32>
    %c0_37 = arith.constant 0 : index
    %100 = memref.load %arg1[%c0_37] : memref<2xi32, #tpu.memory_space<smem>>
    %101 = vector.broadcast %100 : i32 to vector<32x32xi32>
    %102 = arith.addi %99, %101 : vector<32x32xi32>
    %c16_i32 = arith.constant 16 : i32
    %103 = vector.broadcast %c16_i32 : i32 to vector<32x32xi32>
    %104 = arith.cmpi sge, %98, %103 : vector<32x32xi32>
    %c16_i32_38 = arith.constant 16 : i32
    %105 = vector.broadcast %c16_i32_38 : i32 to vector<32x32xi32>
    %106 = arith.subi %98, %105 : vector<32x32xi32>
    %107 = arith.select %104, %106, %98 : vector<32x32xi1>, vector<32x32xi32>
    %c1 = arith.constant 1 : index
    %108 = memref.load %arg1[%c1] : memref<2xi32, #tpu.memory_space<smem>>
    %109 = vector.broadcast %108 : i32 to vector<32x32xi32>
    %110 = arith.select %104, %109, %102 : vector<32x32xi1>, vector<32x32xi32>
    %111 = arith.cmpi slt, %107, %110 : vector<32x32xi32>
    %112 = arith.extui %111 : vector<32x32xi1> to vector<32x32xi32>
    %113 = arith.sitofp %112 : vector<32x32xi32> to vector<32x32xf32>
    %114 = arith.mulf %97, %113 : vector<32x32xf32>
    %c288 = arith.constant 288 : index
    %c0_39 = arith.constant 0 : index
    %115 = vector.load %arg4[%c288, %c0_39] : memref<848x128xf32, #tpu.memory_space<vmem>>, vector<32x128xf32>
    %116 = vector.extract_strided_slice %115 {offsets = [0, 0], sizes = [32, 32], strides = [1, 1]} : vector<32x128xf32> to vector<32x32xf32>
    %cst_40 = arith.constant dense<0.000000e+00> : vector<32x32xf32>
    %117 = tpu.matmul %114, %116, %cst_40 {dimension_numbers = #tpu.dot_dimension_numbers<[1], [0], [0], [1], [0, 0, 1, 1], [], []>} : vector<32x32xf32>, vector<32x32xf32>, vector<32x32xf32> -> vector<32x32xf32>
    %c320 = arith.constant 320 : index
    %c0_41 = arith.constant 0 : index
    %118 = vector.load %arg4[%c320, %c0_41] : memref<848x128xf32, #tpu.memory_space<vmem>>, vector<32x128xf32>
    %119 = vector.extract_strided_slice %118 {offsets = [0, 0], sizes = [32, 32], strides = [1, 1]} : vector<32x128xf32> to vector<32x32xf32>
    %cst_42 = arith.constant dense<0.000000e+00> : vector<32x32xf32>
    %120 = tpu.matmul %114, %119, %cst_42 {dimension_numbers = #tpu.dot_dimension_numbers<[1], [0], [0], [1], [0, 0, 1, 1], [], []>} : vector<32x32xf32>, vector<32x32xf32>, vector<32x32xf32> -> vector<32x32xf32>
    %c352 = arith.constant 352 : index
    %c0_43 = arith.constant 0 : index
    %121 = vector.load %arg4[%c352, %c0_43] : memref<848x128xf32, #tpu.memory_space<vmem>>, vector<32x128xf32>
    %122 = vector.extract_strided_slice %121 {offsets = [0, 0], sizes = [32, 32], strides = [1, 1]} : vector<32x128xf32> to vector<32x32xf32>
    %cst_44 = arith.constant dense<0.000000e+00> : vector<32x32xf32>
    %123 = tpu.matmul %114, %122, %cst_44 {dimension_numbers = #tpu.dot_dimension_numbers<[1], [0], [0], [1], [0, 0, 1, 1], [], []>} : vector<32x32xf32>, vector<32x32xf32>, vector<32x32xf32> -> vector<32x32xf32>
    %c448 = arith.constant 448 : index
    %c0_45 = arith.constant 0 : index
    %124 = vector.load %arg4[%c448, %c0_45] : memref<848x128xf32, #tpu.memory_space<vmem>>, vector<32x128xf32>
    %125 = vector.extract_strided_slice %124 {offsets = [0, 0], sizes = [32, 64], strides = [1, 1]} : vector<32x128xf32> to vector<32x64xf32>
    %cst_46 = arith.constant dense<0.000000e+00> : vector<32x64xf32>
    %126 = tpu.matmul %114, %125, %cst_46 {dimension_numbers = #tpu.dot_dimension_numbers<[1], [0], [0], [1], [0, 0, 1, 1], [], []>} : vector<32x32xf32>, vector<32x64xf32>, vector<32x64xf32> -> vector<32x64xf32>
    %c480 = arith.constant 480 : index
    %c0_47 = arith.constant 0 : index
    %127 = vector.load %arg4[%c480, %c0_47] : memref<848x128xf32, #tpu.memory_space<vmem>>, vector<32x128xf32>
    %128 = vector.extract_strided_slice %127 {offsets = [0, 0], sizes = [32, 64], strides = [1, 1]} : vector<32x128xf32> to vector<32x64xf32>
    %cst_48 = arith.constant dense<0.000000e+00> : vector<32x64xf32>
    %129 = tpu.matmul %1, %128, %cst_48 {dimension_numbers = #tpu.dot_dimension_numbers<[1], [0], [0], [1], [0, 0, 1, 1], [], []>} : vector<32x32xf32>, vector<32x64xf32>, vector<32x64xf32> -> vector<32x64xf32>
    %130 = arith.addf %126, %129 : vector<32x64xf32>
    %c512 = arith.constant 512 : index
    %c0_49 = arith.constant 0 : index
    %131 = vector.load %arg4[%c512, %c0_49] : memref<848x128xf32, #tpu.memory_space<vmem>>, vector<32x128xf32>
    %132 = vector.extract_strided_slice %131 {offsets = [0, 0], sizes = [32, 64], strides = [1, 1]} : vector<32x128xf32> to vector<32x64xf32>
    %cst_50 = arith.constant dense<0.000000e+00> : vector<32x64xf32>
    %133 = tpu.matmul %114, %132, %cst_50 {dimension_numbers = #tpu.dot_dimension_numbers<[1], [0], [0], [1], [0, 0, 1, 1], [], []>} : vector<32x32xf32>, vector<32x64xf32>, vector<32x64xf32> -> vector<32x64xf32>
    %c544 = arith.constant 544 : index
    %c0_51 = arith.constant 0 : index
    %134 = vector.load %arg4[%c544, %c0_51] : memref<848x128xf32, #tpu.memory_space<vmem>>, vector<32x128xf32>
    %135 = vector.extract_strided_slice %134 {offsets = [0, 0], sizes = [32, 64], strides = [1, 1]} : vector<32x128xf32> to vector<32x64xf32>
    %cst_52 = arith.constant dense<0.000000e+00> : vector<32x64xf32>
    %136 = tpu.matmul %1, %135, %cst_52 {dimension_numbers = #tpu.dot_dimension_numbers<[1], [0], [0], [1], [0, 0, 1, 1], [], []>} : vector<32x32xf32>, vector<32x64xf32>, vector<32x64xf32> -> vector<32x64xf32>
    %137 = arith.addf %133, %136 : vector<32x64xf32>
    %c576 = arith.constant 576 : index
    %c0_53 = arith.constant 0 : index
    %138 = vector.load %arg4[%c576, %c0_53] : memref<848x128xf32, #tpu.memory_space<vmem>>, vector<32x128xf32>
    %139 = vector.extract_strided_slice %138 {offsets = [0, 0], sizes = [32, 64], strides = [1, 1]} : vector<32x128xf32> to vector<32x64xf32>
    %cst_54 = arith.constant dense<0.000000e+00> : vector<32x64xf32>
    %140 = tpu.matmul %114, %139, %cst_54 {dimension_numbers = #tpu.dot_dimension_numbers<[1], [0], [0], [1], [0, 0, 1, 1], [], []>} : vector<32x32xf32>, vector<32x64xf32>, vector<32x64xf32> -> vector<32x64xf32>
    %c608 = arith.constant 608 : index
    %c0_55 = arith.constant 0 : index
    %141 = vector.load %arg4[%c608, %c0_55] : memref<848x128xf32, #tpu.memory_space<vmem>>, vector<32x128xf32>
    %142 = vector.extract_strided_slice %141 {offsets = [0, 0], sizes = [32, 64], strides = [1, 1]} : vector<32x128xf32> to vector<32x64xf32>
    %cst_56 = arith.constant dense<0.000000e+00> : vector<32x64xf32>
    %143 = tpu.matmul %1, %142, %cst_56 {dimension_numbers = #tpu.dot_dimension_numbers<[1], [0], [0], [1], [0, 0, 1, 1], [], []>} : vector<32x32xf32>, vector<32x64xf32>, vector<32x64xf32> -> vector<32x64xf32>
    %144 = arith.addf %140, %143 : vector<32x64xf32>
    %c384 = arith.constant 384 : index
    %c0_57 = arith.constant 0 : index
    %145 = vector.load %arg4[%c384, %c0_57] : memref<848x128xf32, #tpu.memory_space<vmem>>, vector<1x128xf32>
    %146 = vector.extract_strided_slice %145 {offsets = [0, 0], sizes = [1, 32], strides = [1, 1]} : vector<1x128xf32> to vector<1x32xf32>
    %c392 = arith.constant 392 : index
    %c0_58 = arith.constant 0 : index
    %147 = vector.load %arg4[%c392, %c0_58] : memref<848x128xf32, #tpu.memory_space<vmem>>, vector<1x128xf32>
    %148 = vector.extract_strided_slice %147 {offsets = [0, 0], sizes = [1, 32], strides = [1, 1]} : vector<1x128xf32> to vector<1x32xf32>
    %c400 = arith.constant 400 : index
    %c0_59 = arith.constant 0 : index
    %149 = vector.load %arg4[%c400, %c0_59] : memref<848x128xf32, #tpu.memory_space<vmem>>, vector<1x128xf32>
    %150 = vector.extract_strided_slice %149 {offsets = [0, 0], sizes = [1, 32], strides = [1, 1]} : vector<1x128xf32> to vector<1x32xf32>
    %c408 = arith.constant 408 : index
    %c0_60 = arith.constant 0 : index
    %151 = vector.load %arg4[%c408, %c0_60] : memref<848x128xf32, #tpu.memory_space<vmem>>, vector<32x128xf32>
    %152 = vector.extract_strided_slice %151 {offsets = [0, 0], sizes = [32, 32], strides = [1, 1]} : vector<32x128xf32> to vector<32x32xf32>
    %c440 = arith.constant 440 : index
    %c0_61 = arith.constant 0 : index
    %153 = vector.load %arg4[%c440, %c0_61] : memref<848x128xf32, #tpu.memory_space<vmem>>, vector<1x128xf32>
    %154 = vector.extract_strided_slice %153 {offsets = [0, 0], sizes = [1, 32], strides = [1, 1]} : vector<1x128xf32> to vector<1x32xf32>
    %c736 = arith.constant 736 : index
    %c0_62 = arith.constant 0 : index
    %155 = vector.load %arg4[%c736, %c0_62] : memref<848x128xf32, #tpu.memory_space<vmem>>, vector<32x128xf32>
    %c768 = arith.constant 768 : index
    %c0_63 = arith.constant 0 : index
    %156 = vector.load %arg4[%c768, %c0_63] : memref<848x128xf32, #tpu.memory_space<vmem>>, vector<1x128xf32>
    %157 = vector.extract_strided_slice %117 {offsets = [0, 0], sizes = [14, 32], strides = [1, 1]} : vector<32x32xf32> to vector<14x32xf32>
    %158 = vector.extract_strided_slice %120 {offsets = [1, 0], sizes = [14, 32], strides = [1, 1]} : vector<32x32xf32> to vector<14x32xf32>
    %159 = arith.addf %157, %158 : vector<14x32xf32>
    %160 = vector.extract_strided_slice %123 {offsets = [2, 0], sizes = [14, 32], strides = [1, 1]} : vector<32x32xf32> to vector<14x32xf32>
    %161 = arith.addf %159, %160 : vector<14x32xf32>
    %162 = vector.broadcast %146 : vector<1x32xf32> to vector<14x32xf32>
    %163 = arith.addf %161, %162 : vector<14x32xf32>
    %164 = vector.broadcast %148 : vector<1x32xf32> to vector<14x32xf32>
    %165 = arith.mulf %163, %164 : vector<14x32xf32>
    %166 = vector.broadcast %150 : vector<1x32xf32> to vector<14x32xf32>
    %167 = arith.addf %165, %166 : vector<14x32xf32>
    %cst_64 = arith.constant 0.000000e+00 : f32
    %168 = vector.broadcast %cst_64 : f32 to vector<14x32xf32>
    %169 = arith.maximumf %167, %168 : vector<14x32xf32>
    %170 = vector.extract_strided_slice %169 {offsets = [0, 0], sizes = [3, 32], strides = [1, 1]} : vector<14x32xf32> to vector<3x32xf32>
    %cst_65 = arith.constant dense<0xFF800000> : vector<32xf32>
    %171 = vector.multi_reduction <maximumf>, %170, %cst_65 [0] : vector<3x32xf32> to vector<32xf32>
    %172 = vector.shape_cast %171 : vector<32xf32> to vector<1x32xf32>
    %173 = vector.extract_strided_slice %169 {offsets = [2, 0], sizes = [3, 32], strides = [1, 1]} : vector<14x32xf32> to vector<3x32xf32>
    %cst_66 = arith.constant dense<0xFF800000> : vector<32xf32>
    %174 = vector.multi_reduction <maximumf>, %173, %cst_66 [0] : vector<3x32xf32> to vector<32xf32>
    %175 = vector.shape_cast %174 : vector<32xf32> to vector<1x32xf32>
    %176 = vector.extract_strided_slice %169 {offsets = [4, 0], sizes = [3, 32], strides = [1, 1]} : vector<14x32xf32> to vector<3x32xf32>
    %cst_67 = arith.constant dense<0xFF800000> : vector<32xf32>
    %177 = vector.multi_reduction <maximumf>, %176, %cst_67 [0] : vector<3x32xf32> to vector<32xf32>
    %178 = vector.shape_cast %177 : vector<32xf32> to vector<1x32xf32>
    %179 = vector.extract_strided_slice %169 {offsets = [6, 0], sizes = [3, 32], strides = [1, 1]} : vector<14x32xf32> to vector<3x32xf32>
    %cst_68 = arith.constant dense<0xFF800000> : vector<32xf32>
    %180 = vector.multi_reduction <maximumf>, %179, %cst_68 [0] : vector<3x32xf32> to vector<32xf32>
    %181 = vector.shape_cast %180 : vector<32xf32> to vector<1x32xf32>
    %182 = vector.extract_strided_slice %169 {offsets = [8, 0], sizes = [3, 32], strides = [1, 1]} : vector<14x32xf32> to vector<3x32xf32>
    %cst_69 = arith.constant dense<0xFF800000> : vector<32xf32>
    %183 = vector.multi_reduction <maximumf>, %182, %cst_69 [0] : vector<3x32xf32> to vector<32xf32>
    %184 = vector.shape_cast %183 : vector<32xf32> to vector<1x32xf32>
    %185 = vector.extract_strided_slice %169 {offsets = [10, 0], sizes = [3, 32], strides = [1, 1]} : vector<14x32xf32> to vector<3x32xf32>
    %cst_70 = arith.constant dense<0xFF800000> : vector<32xf32>
    %186 = vector.multi_reduction <maximumf>, %185, %cst_70 [0] : vector<3x32xf32> to vector<32xf32>
    %187 = vector.shape_cast %186 : vector<32xf32> to vector<1x32xf32>
    %188 = vector.extract_strided_slice %117 {offsets = [16, 0], sizes = [14, 32], strides = [1, 1]} : vector<32x32xf32> to vector<14x32xf32>
    %189 = vector.extract_strided_slice %120 {offsets = [17, 0], sizes = [14, 32], strides = [1, 1]} : vector<32x32xf32> to vector<14x32xf32>
    %190 = arith.addf %188, %189 : vector<14x32xf32>
    %191 = vector.extract_strided_slice %123 {offsets = [18, 0], sizes = [14, 32], strides = [1, 1]} : vector<32x32xf32> to vector<14x32xf32>
    %192 = arith.addf %190, %191 : vector<14x32xf32>
    %193 = vector.broadcast %146 : vector<1x32xf32> to vector<14x32xf32>
    %194 = arith.addf %192, %193 : vector<14x32xf32>
    %195 = vector.broadcast %148 : vector<1x32xf32> to vector<14x32xf32>
    %196 = arith.mulf %194, %195 : vector<14x32xf32>
    %197 = vector.broadcast %150 : vector<1x32xf32> to vector<14x32xf32>
    %198 = arith.addf %196, %197 : vector<14x32xf32>
    %cst_71 = arith.constant 0.000000e+00 : f32
    %199 = vector.broadcast %cst_71 : f32 to vector<14x32xf32>
    %200 = arith.maximumf %198, %199 : vector<14x32xf32>
    %201 = vector.extract_strided_slice %200 {offsets = [0, 0], sizes = [3, 32], strides = [1, 1]} : vector<14x32xf32> to vector<3x32xf32>
    %cst_72 = arith.constant dense<0xFF800000> : vector<32xf32>
    %202 = vector.multi_reduction <maximumf>, %201, %cst_72 [0] : vector<3x32xf32> to vector<32xf32>
    %203 = vector.shape_cast %202 : vector<32xf32> to vector<1x32xf32>
    %204 = vector.extract_strided_slice %200 {offsets = [2, 0], sizes = [3, 32], strides = [1, 1]} : vector<14x32xf32> to vector<3x32xf32>
    %cst_73 = arith.constant dense<0xFF800000> : vector<32xf32>
    %205 = vector.multi_reduction <maximumf>, %204, %cst_73 [0] : vector<3x32xf32> to vector<32xf32>
    %206 = vector.shape_cast %205 : vector<32xf32> to vector<1x32xf32>
    %207 = vector.extract_strided_slice %200 {offsets = [4, 0], sizes = [3, 32], strides = [1, 1]} : vector<14x32xf32> to vector<3x32xf32>
    %cst_74 = arith.constant dense<0xFF800000> : vector<32xf32>
    %208 = vector.multi_reduction <maximumf>, %207, %cst_74 [0] : vector<3x32xf32> to vector<32xf32>
    %209 = vector.shape_cast %208 : vector<32xf32> to vector<1x32xf32>
    %210 = vector.extract_strided_slice %200 {offsets = [6, 0], sizes = [3, 32], strides = [1, 1]} : vector<14x32xf32> to vector<3x32xf32>
    %cst_75 = arith.constant dense<0xFF800000> : vector<32xf32>
    %211 = vector.multi_reduction <maximumf>, %210, %cst_75 [0] : vector<3x32xf32> to vector<32xf32>
    %212 = vector.shape_cast %211 : vector<32xf32> to vector<1x32xf32>
    %213 = vector.extract_strided_slice %200 {offsets = [8, 0], sizes = [3, 32], strides = [1, 1]} : vector<14x32xf32> to vector<3x32xf32>
    %cst_76 = arith.constant dense<0xFF800000> : vector<32xf32>
    %214 = vector.multi_reduction <maximumf>, %213, %cst_76 [0] : vector<3x32xf32> to vector<32xf32>
    %215 = vector.shape_cast %214 : vector<32xf32> to vector<1x32xf32>
    %216 = vector.extract_strided_slice %200 {offsets = [10, 0], sizes = [3, 32], strides = [1, 1]} : vector<14x32xf32> to vector<3x32xf32>
    %cst_77 = arith.constant dense<0xFF800000> : vector<32xf32>
    %217 = vector.multi_reduction <maximumf>, %216, %cst_77 [0] : vector<3x32xf32> to vector<32xf32>
    %218 = vector.shape_cast %217 : vector<32xf32> to vector<1x32xf32>
    %219 = tpu.concatenate %172, %175, %178, %181, %184, %187, %203, %206, %209, %212, %215, %218 in 0 : vector<1x32xf32>, vector<1x32xf32>, vector<1x32xf32>, vector<1x32xf32>, vector<1x32xf32>, vector<1x32xf32>, vector<1x32xf32>, vector<1x32xf32>, vector<1x32xf32>, vector<1x32xf32>, vector<1x32xf32>, vector<1x32xf32> -> vector<12x32xf32>
    %cst_78 = arith.constant dense<0.000000e+00> : vector<12x32xf32>
    %220 = tpu.matmul %219, %152, %cst_78 {dimension_numbers = #tpu.dot_dimension_numbers<[1], [0], [0], [1], [0, 0, 1, 1], [], []>} : vector<12x32xf32>, vector<32x32xf32>, vector<12x32xf32> -> vector<12x32xf32>
    %221 = vector.broadcast %154 : vector<1x32xf32> to vector<12x32xf32>
    %222 = arith.addf %220, %221 : vector<12x32xf32>
    %223 = vector.broadcast %148 : vector<1x32xf32> to vector<12x32xf32>
    %224 = arith.mulf %222, %223 : vector<12x32xf32>
    %225 = vector.broadcast %150 : vector<1x32xf32> to vector<12x32xf32>
    %226 = arith.addf %224, %225 : vector<12x32xf32>
    %cst_79 = arith.constant 0.000000e+00 : f32
    %227 = vector.broadcast %cst_79 : f32 to vector<12x32xf32>
    %228 = arith.maximumf %226, %227 : vector<12x32xf32>
    %229 = vector.extract_strided_slice %228 {offsets = [0, 0], sizes = [2, 32], strides = [1, 1]} : vector<12x32xf32> to vector<2x32xf32>
    %cst_80 = arith.constant dense<0xFF800000> : vector<32xf32>
    %230 = vector.multi_reduction <maximumf>, %229, %cst_80 [0] : vector<2x32xf32> to vector<32xf32>
    %231 = vector.shape_cast %230 : vector<32xf32> to vector<1x32xf32>
    %232 = vector.extract_strided_slice %228 {offsets = [2, 0], sizes = [2, 32], strides = [1, 1]} : vector<12x32xf32> to vector<2x32xf32>
    %cst_81 = arith.constant dense<0xFF800000> : vector<32xf32>
    %233 = vector.multi_reduction <maximumf>, %232, %cst_81 [0] : vector<2x32xf32> to vector<32xf32>
    %234 = vector.shape_cast %233 : vector<32xf32> to vector<1x32xf32>
    %235 = vector.extract_strided_slice %228 {offsets = [4, 0], sizes = [2, 32], strides = [1, 1]} : vector<12x32xf32> to vector<2x32xf32>
    %cst_82 = arith.constant dense<0xFF800000> : vector<32xf32>
    %236 = vector.multi_reduction <maximumf>, %235, %cst_82 [0] : vector<2x32xf32> to vector<32xf32>
    %237 = vector.shape_cast %236 : vector<32xf32> to vector<1x32xf32>
    %238 = vector.extract_strided_slice %228 {offsets = [6, 0], sizes = [2, 32], strides = [1, 1]} : vector<12x32xf32> to vector<2x32xf32>
    %cst_83 = arith.constant dense<0xFF800000> : vector<32xf32>
    %239 = vector.multi_reduction <maximumf>, %238, %cst_83 [0] : vector<2x32xf32> to vector<32xf32>
    %240 = vector.shape_cast %239 : vector<32xf32> to vector<1x32xf32>
    %241 = vector.extract_strided_slice %228 {offsets = [8, 0], sizes = [2, 32], strides = [1, 1]} : vector<12x32xf32> to vector<2x32xf32>
    %cst_84 = arith.constant dense<0xFF800000> : vector<32xf32>
    %242 = vector.multi_reduction <maximumf>, %241, %cst_84 [0] : vector<2x32xf32> to vector<32xf32>
    %243 = vector.shape_cast %242 : vector<32xf32> to vector<1x32xf32>
    %244 = vector.extract_strided_slice %228 {offsets = [10, 0], sizes = [2, 32], strides = [1, 1]} : vector<12x32xf32> to vector<2x32xf32>
    %cst_85 = arith.constant dense<0xFF800000> : vector<32xf32>
    %245 = vector.multi_reduction <maximumf>, %244, %cst_85 [0] : vector<2x32xf32> to vector<32xf32>
    %246 = vector.shape_cast %245 : vector<32xf32> to vector<1x32xf32>
    %247 = tpu.concatenate %231, %234, %237, %240, %243, %246 in 0 : vector<1x32xf32>, vector<1x32xf32>, vector<1x32xf32>, vector<1x32xf32>, vector<1x32xf32>, vector<1x32xf32> -> vector<6x32xf32>
    %cst_86 = arith.constant dense<0.000000e+00> : vector<6x128xf32>
    %248 = tpu.matmul %247, %155, %cst_86 {dimension_numbers = #tpu.dot_dimension_numbers<[1], [0], [0], [1], [0, 0, 1, 1], [], []>} : vector<6x32xf32>, vector<32x128xf32>, vector<6x128xf32> -> vector<6x128xf32>
    %249 = vector.broadcast %156 : vector<1x128xf32> to vector<6x128xf32>
    %250 = arith.addf %248, %249 : vector<6x128xf32>
    %c640 = arith.constant 640 : index
    %c0_87 = arith.constant 0 : index
    %251 = vector.load %arg4[%c640, %c0_87] : memref<848x128xf32, #tpu.memory_space<vmem>>, vector<1x128xf32>
    %252 = vector.extract_strided_slice %251 {offsets = [0, 0], sizes = [1, 64], strides = [1, 1]} : vector<1x128xf32> to vector<1x64xf32>
    %c648 = arith.constant 648 : index
    %c0_88 = arith.constant 0 : index
    %253 = vector.load %arg4[%c648, %c0_88] : memref<848x128xf32, #tpu.memory_space<vmem>>, vector<1x128xf32>
    %254 = vector.extract_strided_slice %253 {offsets = [0, 0], sizes = [1, 64], strides = [1, 1]} : vector<1x128xf32> to vector<1x64xf32>
    %c656 = arith.constant 656 : index
    %c0_89 = arith.constant 0 : index
    %255 = vector.load %arg4[%c656, %c0_89] : memref<848x128xf32, #tpu.memory_space<vmem>>, vector<1x128xf32>
    %256 = vector.extract_strided_slice %255 {offsets = [0, 0], sizes = [1, 64], strides = [1, 1]} : vector<1x128xf32> to vector<1x64xf32>
    %c664 = arith.constant 664 : index
    %c0_90 = arith.constant 0 : index
    %257 = vector.load %arg4[%c664, %c0_90] : memref<848x128xf32, #tpu.memory_space<vmem>>, vector<64x128xf32>
    %258 = vector.extract_strided_slice %257 {offsets = [0, 0], sizes = [64, 64], strides = [1, 1]} : vector<64x128xf32> to vector<64x64xf32>
    %c728 = arith.constant 728 : index
    %c0_91 = arith.constant 0 : index
    %259 = vector.load %arg4[%c728, %c0_91] : memref<848x128xf32, #tpu.memory_space<vmem>>, vector<1x128xf32>
    %260 = vector.extract_strided_slice %259 {offsets = [0, 0], sizes = [1, 64], strides = [1, 1]} : vector<1x128xf32> to vector<1x64xf32>
    %c776 = arith.constant 776 : index
    %c0_92 = arith.constant 0 : index
    %261 = vector.load %arg4[%c776, %c0_92] : memref<848x128xf32, #tpu.memory_space<vmem>>, vector<64x128xf32>
    %c840 = arith.constant 840 : index
    %c0_93 = arith.constant 0 : index
    %262 = vector.load %arg4[%c840, %c0_93] : memref<848x128xf32, #tpu.memory_space<vmem>>, vector<1x128xf32>
    %263 = vector.extract_strided_slice %130 {offsets = [0, 0], sizes = [14, 64], strides = [1, 1]} : vector<32x64xf32> to vector<14x64xf32>
    %264 = vector.extract_strided_slice %137 {offsets = [1, 0], sizes = [14, 64], strides = [1, 1]} : vector<32x64xf32> to vector<14x64xf32>
    %265 = arith.addf %263, %264 : vector<14x64xf32>
    %266 = vector.extract_strided_slice %144 {offsets = [2, 0], sizes = [14, 64], strides = [1, 1]} : vector<32x64xf32> to vector<14x64xf32>
    %267 = arith.addf %265, %266 : vector<14x64xf32>
    %268 = vector.broadcast %252 : vector<1x64xf32> to vector<14x64xf32>
    %269 = arith.addf %267, %268 : vector<14x64xf32>
    %270 = vector.broadcast %254 : vector<1x64xf32> to vector<14x64xf32>
    %271 = arith.mulf %269, %270 : vector<14x64xf32>
    %272 = vector.broadcast %256 : vector<1x64xf32> to vector<14x64xf32>
    %273 = arith.addf %271, %272 : vector<14x64xf32>
    %cst_94 = arith.constant 0.000000e+00 : f32
    %274 = vector.broadcast %cst_94 : f32 to vector<14x64xf32>
    %275 = arith.maximumf %273, %274 : vector<14x64xf32>
    %276 = vector.extract_strided_slice %275 {offsets = [0, 0], sizes = [3, 64], strides = [1, 1]} : vector<14x64xf32> to vector<3x64xf32>
    %cst_95 = arith.constant dense<0xFF800000> : vector<64xf32>
    %277 = vector.multi_reduction <maximumf>, %276, %cst_95 [0] : vector<3x64xf32> to vector<64xf32>
    %278 = vector.shape_cast %277 : vector<64xf32> to vector<1x64xf32>
    %279 = vector.extract_strided_slice %275 {offsets = [2, 0], sizes = [3, 64], strides = [1, 1]} : vector<14x64xf32> to vector<3x64xf32>
    %cst_96 = arith.constant dense<0xFF800000> : vector<64xf32>
    %280 = vector.multi_reduction <maximumf>, %279, %cst_96 [0] : vector<3x64xf32> to vector<64xf32>
    %281 = vector.shape_cast %280 : vector<64xf32> to vector<1x64xf32>
    %282 = vector.extract_strided_slice %275 {offsets = [4, 0], sizes = [3, 64], strides = [1, 1]} : vector<14x64xf32> to vector<3x64xf32>
    %cst_97 = arith.constant dense<0xFF800000> : vector<64xf32>
    %283 = vector.multi_reduction <maximumf>, %282, %cst_97 [0] : vector<3x64xf32> to vector<64xf32>
    %284 = vector.shape_cast %283 : vector<64xf32> to vector<1x64xf32>
    %285 = vector.extract_strided_slice %275 {offsets = [6, 0], sizes = [3, 64], strides = [1, 1]} : vector<14x64xf32> to vector<3x64xf32>
    %cst_98 = arith.constant dense<0xFF800000> : vector<64xf32>
    %286 = vector.multi_reduction <maximumf>, %285, %cst_98 [0] : vector<3x64xf32> to vector<64xf32>
    %287 = vector.shape_cast %286 : vector<64xf32> to vector<1x64xf32>
    %288 = vector.extract_strided_slice %275 {offsets = [8, 0], sizes = [3, 64], strides = [1, 1]} : vector<14x64xf32> to vector<3x64xf32>
    %cst_99 = arith.constant dense<0xFF800000> : vector<64xf32>
    %289 = vector.multi_reduction <maximumf>, %288, %cst_99 [0] : vector<3x64xf32> to vector<64xf32>
    %290 = vector.shape_cast %289 : vector<64xf32> to vector<1x64xf32>
    %291 = vector.extract_strided_slice %275 {offsets = [10, 0], sizes = [3, 64], strides = [1, 1]} : vector<14x64xf32> to vector<3x64xf32>
    %cst_100 = arith.constant dense<0xFF800000> : vector<64xf32>
    %292 = vector.multi_reduction <maximumf>, %291, %cst_100 [0] : vector<3x64xf32> to vector<64xf32>
    %293 = vector.shape_cast %292 : vector<64xf32> to vector<1x64xf32>
    %294 = vector.extract_strided_slice %130 {offsets = [16, 0], sizes = [14, 64], strides = [1, 1]} : vector<32x64xf32> to vector<14x64xf32>
    %295 = vector.extract_strided_slice %137 {offsets = [17, 0], sizes = [14, 64], strides = [1, 1]} : vector<32x64xf32> to vector<14x64xf32>
    %296 = arith.addf %294, %295 : vector<14x64xf32>
    %297 = vector.extract_strided_slice %144 {offsets = [18, 0], sizes = [14, 64], strides = [1, 1]} : vector<32x64xf32> to vector<14x64xf32>
    %298 = arith.addf %296, %297 : vector<14x64xf32>
    %299 = vector.broadcast %252 : vector<1x64xf32> to vector<14x64xf32>
    %300 = arith.addf %298, %299 : vector<14x64xf32>
    %301 = vector.broadcast %254 : vector<1x64xf32> to vector<14x64xf32>
    %302 = arith.mulf %300, %301 : vector<14x64xf32>
    %303 = vector.broadcast %256 : vector<1x64xf32> to vector<14x64xf32>
    %304 = arith.addf %302, %303 : vector<14x64xf32>
    %cst_101 = arith.constant 0.000000e+00 : f32
    %305 = vector.broadcast %cst_101 : f32 to vector<14x64xf32>
    %306 = arith.maximumf %304, %305 : vector<14x64xf32>
    %307 = vector.extract_strided_slice %306 {offsets = [0, 0], sizes = [3, 64], strides = [1, 1]} : vector<14x64xf32> to vector<3x64xf32>
    %cst_102 = arith.constant dense<0xFF800000> : vector<64xf32>
    %308 = vector.multi_reduction <maximumf>, %307, %cst_102 [0] : vector<3x64xf32> to vector<64xf32>
    %309 = vector.shape_cast %308 : vector<64xf32> to vector<1x64xf32>
    %310 = vector.extract_strided_slice %306 {offsets = [2, 0], sizes = [3, 64], strides = [1, 1]} : vector<14x64xf32> to vector<3x64xf32>
    %cst_103 = arith.constant dense<0xFF800000> : vector<64xf32>
    %311 = vector.multi_reduction <maximumf>, %310, %cst_103 [0] : vector<3x64xf32> to vector<64xf32>
    %312 = vector.shape_cast %311 : vector<64xf32> to vector<1x64xf32>
    %313 = vector.extract_strided_slice %306 {offsets = [4, 0], sizes = [3, 64], strides = [1, 1]} : vector<14x64xf32> to vector<3x64xf32>
    %cst_104 = arith.constant dense<0xFF800000> : vector<64xf32>
    %314 = vector.multi_reduction <maximumf>, %313, %cst_104 [0] : vector<3x64xf32> to vector<64xf32>
    %315 = vector.shape_cast %314 : vector<64xf32> to vector<1x64xf32>
    %316 = vector.extract_strided_slice %306 {offsets = [6, 0], sizes = [3, 64], strides = [1, 1]} : vector<14x64xf32> to vector<3x64xf32>
    %cst_105 = arith.constant dense<0xFF800000> : vector<64xf32>
    %317 = vector.multi_reduction <maximumf>, %316, %cst_105 [0] : vector<3x64xf32> to vector<64xf32>
    %318 = vector.shape_cast %317 : vector<64xf32> to vector<1x64xf32>
    %319 = vector.extract_strided_slice %306 {offsets = [8, 0], sizes = [3, 64], strides = [1, 1]} : vector<14x64xf32> to vector<3x64xf32>
    %cst_106 = arith.constant dense<0xFF800000> : vector<64xf32>
    %320 = vector.multi_reduction <maximumf>, %319, %cst_106 [0] : vector<3x64xf32> to vector<64xf32>
    %321 = vector.shape_cast %320 : vector<64xf32> to vector<1x64xf32>
    %322 = vector.extract_strided_slice %306 {offsets = [10, 0], sizes = [3, 64], strides = [1, 1]} : vector<14x64xf32> to vector<3x64xf32>
    %cst_107 = arith.constant dense<0xFF800000> : vector<64xf32>
    %323 = vector.multi_reduction <maximumf>, %322, %cst_107 [0] : vector<3x64xf32> to vector<64xf32>
    %324 = vector.shape_cast %323 : vector<64xf32> to vector<1x64xf32>
    %325 = tpu.concatenate %278, %281, %284, %287, %290, %293, %309, %312, %315, %318, %321, %324 in 0 : vector<1x64xf32>, vector<1x64xf32>, vector<1x64xf32>, vector<1x64xf32>, vector<1x64xf32>, vector<1x64xf32>, vector<1x64xf32>, vector<1x64xf32>, vector<1x64xf32>, vector<1x64xf32>, vector<1x64xf32>, vector<1x64xf32> -> vector<12x64xf32>
    %cst_108 = arith.constant dense<0.000000e+00> : vector<12x64xf32>
    %326 = tpu.matmul %325, %258, %cst_108 {dimension_numbers = #tpu.dot_dimension_numbers<[1], [0], [0], [1], [0, 0, 1, 1], [], []>} : vector<12x64xf32>, vector<64x64xf32>, vector<12x64xf32> -> vector<12x64xf32>
    %327 = vector.broadcast %260 : vector<1x64xf32> to vector<12x64xf32>
    %328 = arith.addf %326, %327 : vector<12x64xf32>
    %329 = vector.broadcast %254 : vector<1x64xf32> to vector<12x64xf32>
    %330 = arith.mulf %328, %329 : vector<12x64xf32>
    %331 = vector.broadcast %256 : vector<1x64xf32> to vector<12x64xf32>
    %332 = arith.addf %330, %331 : vector<12x64xf32>
    %cst_109 = arith.constant 0.000000e+00 : f32
    %333 = vector.broadcast %cst_109 : f32 to vector<12x64xf32>
    %334 = arith.maximumf %332, %333 : vector<12x64xf32>
    %335 = vector.extract_strided_slice %334 {offsets = [0, 0], sizes = [2, 64], strides = [1, 1]} : vector<12x64xf32> to vector<2x64xf32>
    %cst_110 = arith.constant dense<0xFF800000> : vector<64xf32>
    %336 = vector.multi_reduction <maximumf>, %335, %cst_110 [0] : vector<2x64xf32> to vector<64xf32>
    %337 = vector.shape_cast %336 : vector<64xf32> to vector<1x64xf32>
    %338 = vector.extract_strided_slice %334 {offsets = [2, 0], sizes = [2, 64], strides = [1, 1]} : vector<12x64xf32> to vector<2x64xf32>
    %cst_111 = arith.constant dense<0xFF800000> : vector<64xf32>
    %339 = vector.multi_reduction <maximumf>, %338, %cst_111 [0] : vector<2x64xf32> to vector<64xf32>
    %340 = vector.shape_cast %339 : vector<64xf32> to vector<1x64xf32>
    %341 = vector.extract_strided_slice %334 {offsets = [4, 0], sizes = [2, 64], strides = [1, 1]} : vector<12x64xf32> to vector<2x64xf32>
    %cst_112 = arith.constant dense<0xFF800000> : vector<64xf32>
    %342 = vector.multi_reduction <maximumf>, %341, %cst_112 [0] : vector<2x64xf32> to vector<64xf32>
    %343 = vector.shape_cast %342 : vector<64xf32> to vector<1x64xf32>
    %344 = vector.extract_strided_slice %334 {offsets = [6, 0], sizes = [2, 64], strides = [1, 1]} : vector<12x64xf32> to vector<2x64xf32>
    %cst_113 = arith.constant dense<0xFF800000> : vector<64xf32>
    %345 = vector.multi_reduction <maximumf>, %344, %cst_113 [0] : vector<2x64xf32> to vector<64xf32>
    %346 = vector.shape_cast %345 : vector<64xf32> to vector<1x64xf32>
    %347 = vector.extract_strided_slice %334 {offsets = [8, 0], sizes = [2, 64], strides = [1, 1]} : vector<12x64xf32> to vector<2x64xf32>
    %cst_114 = arith.constant dense<0xFF800000> : vector<64xf32>
    %348 = vector.multi_reduction <maximumf>, %347, %cst_114 [0] : vector<2x64xf32> to vector<64xf32>
    %349 = vector.shape_cast %348 : vector<64xf32> to vector<1x64xf32>
    %350 = vector.extract_strided_slice %334 {offsets = [10, 0], sizes = [2, 64], strides = [1, 1]} : vector<12x64xf32> to vector<2x64xf32>
    %cst_115 = arith.constant dense<0xFF800000> : vector<64xf32>
    %351 = vector.multi_reduction <maximumf>, %350, %cst_115 [0] : vector<2x64xf32> to vector<64xf32>
    %352 = vector.shape_cast %351 : vector<64xf32> to vector<1x64xf32>
    %353 = tpu.concatenate %337, %340, %343, %346, %349, %352 in 0 : vector<1x64xf32>, vector<1x64xf32>, vector<1x64xf32>, vector<1x64xf32>, vector<1x64xf32>, vector<1x64xf32> -> vector<6x64xf32>
    %cst_116 = arith.constant dense<0.000000e+00> : vector<6x128xf32>
    %354 = tpu.matmul %353, %261, %cst_116 {dimension_numbers = #tpu.dot_dimension_numbers<[1], [0], [0], [1], [0, 0, 1, 1], [], []>} : vector<6x64xf32>, vector<64x128xf32>, vector<6x128xf32> -> vector<6x128xf32>
    %355 = vector.broadcast %262 : vector<1x128xf32> to vector<6x128xf32>
    %356 = arith.addf %354, %355 : vector<6x128xf32>
    %357 = arith.mulf %250, %356 : vector<6x128xf32>
    %358 = vector.extract_strided_slice %357 {offsets = [0, 0], sizes = [3, 128], strides = [1, 1]} : vector<6x128xf32> to vector<3x128xf32>
    %cst_117 = arith.constant dense<0.000000e+00> : vector<128xf32>
    %359 = vector.multi_reduction <add>, %358, %cst_117 [0] : vector<3x128xf32> to vector<128xf32>
    %360 = vector.shape_cast %359 : vector<128xf32> to vector<1x128xf32>
    %cst_118 = arith.constant 0.333333343 : f32
    %361 = vector.broadcast %cst_118 : f32 to vector<1x128xf32>
    %362 = arith.mulf %360, %361 : vector<1x128xf32>
    %363 = vector.extract_strided_slice %357 {offsets = [3, 0], sizes = [3, 128], strides = [1, 1]} : vector<6x128xf32> to vector<3x128xf32>
    %cst_119 = arith.constant dense<0.000000e+00> : vector<128xf32>
    %364 = vector.multi_reduction <add>, %363, %cst_119 [0] : vector<3x128xf32> to vector<128xf32>
    %365 = vector.shape_cast %364 : vector<128xf32> to vector<1x128xf32>
    %cst_120 = arith.constant 0.333333343 : f32
    %366 = vector.broadcast %cst_120 : f32 to vector<1x128xf32>
    %367 = arith.mulf %365, %366 : vector<1x128xf32>
    %cst_121 = arith.constant 0.000000e+00 : f32
    %368 = vector.broadcast %cst_121 : f32 to vector<6x128xf32>
    %369 = tpu.concatenate %362, %367, %368 in 0 : vector<1x128xf32>, vector<1x128xf32>, vector<6x128xf32> -> vector<8x128xf32>
    %c0_122 = arith.constant 0 : index
    %c0_123 = arith.constant 0 : index
    %370 = vector.load %arg5[%c0_122, %c0_123] : memref<8x128xf32, #tpu.memory_space<vmem>>, vector<8x128xf32>
    tpu.vector_store %arg5[%c0_122, %c0_123], %369 {strides = array<i32>} : memref<8x128xf32, #tpu.memory_space<vmem>>, vector<8x128xf32>,
    return
  }
  func.func @transform_0(%arg0: i32) -> i32 {
    %c0_i32 = arith.constant 0 : i32
    %c0_i32_0 = arith.constant 0 : i32
    return %c0_i32 : i32
  }
  func.func @transform_1(%arg0: i32) -> (i32, i32) {
    %c0_i32 = arith.constant 0 : i32
    %c0_i32_0 = arith.constant 0 : i32
    %c0_i32_1 = arith.constant 0 : i32
    return %c0_i32, %c0_i32_0 : i32, i32
  }
  func.func @transform_2(%arg0: i32) -> (i32, i32) {
    %c0_i32 = arith.constant 0 : i32
    %c0_i32_0 = arith.constant 0 : i32
    %c0_i32_1 = arith.constant 0 : i32
    return %c0_i32, %c0_i32_0 : i32, i32
  }
  func.func @transform_3(%arg0: i32) -> (i32, i32) {
    %c0_i32 = arith.constant 0 : i32
    %c0_i32_0 = arith.constant 0 : i32
    %c0_i32_1 = arith.constant 0 : i32
    return %c0_i32, %c0_i32_0 : i32, i32
  }
  func.func @transform_4(%arg0: i32) -> (i32, i32) {
    %c0_i32 = arith.constant 0 : i32
    %c0_i32_0 = arith.constant 0 : i32
    %c0_i32_1 = arith.constant 0 : i32
    return %c0_i32, %c0_i32_0 : i32, i32
  }
}

</mosaic_0001>

<llo_original>
// kernel: tpu_custom_call.1
$region0: #{tpu_custom_call.1}
  #allocation0 [shape = 'u32[]', space=smem, size = 0x4, offset = 0x4, fixed_abs, tag = 'smem constant byte address 0x4 - core index']
  #allocation1 [shape = 'u32[144,128]{1,0:T(1,128)}', space=vmem, size = 0x12000, scoped, tag = 'internal scratch']
  %s0 = inlined_call_operand.hbm [shape: s32[2], index: 0, kind: input, shape index: {}]
  %s1 = inlined_call_operand.hbm [shape: f32[32,32], index: 1, kind: input, shape index: {}]
  %s2 = inlined_call_operand.hbm [shape: f32[32,32], index: 2, kind: input, shape index: {}]
  %s3 = inlined_call_operand.hbm [shape: f32[848,128], index: 3, kind: input, shape index: {}]
  %s4 = inlined_call_operand.hbm [shape: f32[8,128], index: 4, kind: output, shape index: {}]
  %s5 = sld [smem:[#allocation0]]
  $region42: #{tpu_custom_call.1} parent=0
    _
  %s7 = ssub.s32 1, %s5
  %s8 = scalar_select 0, %s7, %s5
  $region1: #{tpu_custom_call.1} parent=0
    #allocation2 [shape = 'u8[512]{0}', space=smem, size = 0x200, scoped, tag = 'input window, operand 0, single buffered']
    #allocation3 [shape = 's32[1]{0}', space=sflag, size = 0x4, scoped, tag = 'scoped memory for tpu_custom_call.1']
    #allocation4 [shape = 's32[1]{0}', space=sflag, size = 0x4, scoped, tag = 'scoped memory for tpu_custom_call.1']
    #allocation5 [shape = 's32[1]{0}', space=sflag, size = 0x4, scoped, tag = 'scoped memory for tpu_custom_call.1']
    #allocation6 [shape = 'u8[16384]{0}', space=vmem, size = 0x4000, scoped, tag = 'input window, operand 1, single buffered']
    #allocation7 [shape = 'u8[16384]{0}', space=vmem, size = 0x4000, scoped, tag = 'input window, operand 2, single buffered']
    #allocation8 [shape = 's32[1]{0}', space=sflag, size = 0x4, scoped, tag = 'scoped memory for tpu_custom_call.1']
    #allocation9 [shape = 'u8[434176]{0}', space=vmem, size = 0x6a000, scoped, tag = 'input window, operand 3, single buffered']
    #allocation10 [shape = 'u8[4096]{0}', space=vmem, size = 0x1000, scoped, tag = 'output window, operand 0, single buffered']
    %9 = vsyncpa [#allocation5], 0
    %10 = vsyncpa [#allocation3], 0
    %11 = vsyncpa [#allocation8], 0
    %12 = vsyncpa [#allocation4], 0
    // Predicated region
    $region2: #{tpu_custom_call.1} parent=1 // pred_check
      _
    $region3: #{tpu_custom_call.1} parent=1 // pred_check_branch
      %14 = sbr.rel (0) target = $region5
    $region4: #{tpu_custom_call.1} parent=1 // pred_region
      %s16 = ssub.s32 16, 16
      %17 = vsyncadd [#allocation5], %s16
      %20 = dma.hbm_to_smem %s0, 16, [#allocation2], [#allocation5]
    $region5: #{tpu_custom_call.1} parent=1 // pred_fallthru
      _
    // Predicated region
    $region6: #{tpu_custom_call.1} parent=1 // pred_check
      _
    $region7: #{tpu_custom_call.1} parent=1 // pred_check_branch
      %22 = sbr.rel (0) target = $region9
    $region8: #{tpu_custom_call.1} parent=1 // pred_region
      %s24 = ssub.s32 512, 512
      %25 = vsyncadd [#allocation3], %s24
      %s26 = sshll.u32 [#allocation6], 4
      %s27 = int_to_ptr.vmem [resolvable:$true] %s26
      %32 = dma.hbm_to_vmem [thread:$0]  %s1, 512, %s27, [#allocation3], 128, 128, 8
    $region9: #{tpu_custom_call.1} parent=1 // pred_fallthru
      _
    // Predicated region
    $region10: #{tpu_custom_call.1} parent=1 // pred_check
      _
    $region11: #{tpu_custom_call.1} parent=1 // pred_check_branch
      %34 = sbr.rel (0) target = $region13
    $region12: #{tpu_custom_call.1} parent=1 // pred_region
      %s36 = ssub.s32 512, 512
      %37 = vsyncadd [#allocation8], %s36
      %s38 = sshll.u32 [#allocation7], 4
      %s39 = int_to_ptr.vmem [resolvable:$true] %s38
      %44 = dma.hbm_to_vmem [thread:$0]  %s2, 512, %s39, [#allocation8], 128, 128, 8
    $region13: #{tpu_custom_call.1} parent=1 // pred_fallthru
      _
    // Predicated region
    $region14: #{tpu_custom_call.1} parent=1 // pred_check
      _
    $region15: #{tpu_custom_call.1} parent=1 // pred_check_branch
      %46 = sbr.rel (0) target = $region17
    $region16: #{tpu_custom_call.1} parent=1 // pred_region
      %s48 = ssub.s32 13568, 13568
      %49 = vsyncadd [#allocation8], %s48
      %s50 = sshll.u32 [#allocation9], 4
      %s51 = int_to_ptr.vmem [resolvable:$true] %s50
      %56 = dma.hbm_to_vmem [thread:$0]  %s3, 13568, %s51, [#allocation8], 128, 128, 8
    $region17: #{tpu_custom_call.1} parent=1 // pred_fallthru
      _
    // Predicated region
    $region18: #{tpu_custom_call.1} parent=1 // pred_check
      _
    $region19: #{tpu_custom_call.1} parent=1 // pred_check_branch
      %58 = sbr.rel (0) target = $region21
    $region20: #{tpu_custom_call.1} parent=1 // pred_region
      %59 = dma.done [#allocation5], 16
    $region21: #{tpu_custom_call.1} parent=1 // pred_fallthru
      _
    // Predicated region
    $region22: #{tpu_custom_call.1} parent=1 // pred_check
      _
    $region23: #{tpu_custom_call.1} parent=1 // pred_check_branch
      %61 = sbr.rel (0) target = $region25
    $region24: #{tpu_custom_call.1} parent=1 // pred_region
      %62 = dma.done [#allocation3], 512
    $region25: #{tpu_custom_call.1} parent=1 // pred_fallthru
      _
    // Predicated region
    $region26: #{tpu_custom_call.1} parent=1 // pred_check
      _
    $region27: #{tpu_custom_call.1} parent=1 // pred_check_branch
      %64 = sbr.rel (0) target = $region29
    $region28: #{tpu_custom_call.1} parent=1 // pred_region
      %65 = dma.done [#allocation8], 512
    $region29: #{tpu_custom_call.1} parent=1 // pred_fallthru
      _
    // Predicated region
    $region30: #{tpu_custom_call.1} parent=1 // pred_check
      _
    $region31: #{tpu_custom_call.1} parent=1 // pred_check_branch
      %67 = sbr.rel (0) target = $region33
    $region32: #{tpu_custom_call.1} parent=1 // pred_region
      %68 = dma.done [#allocation8], 13568
    $region33: #{tpu_custom_call.1} parent=1 // pred_fallthru
      _
    %69 = sfence
    %v70 = vld [vmem:[#allocation6] sm:$0xff]
    %v71 = vld [vmem:[#allocation6 + $0x8] sm:$0xff]
    %v72 = vld [vmem:[#allocation6 + $0x10] sm:$0xff]
    %v73 = vld [vmem:[#allocation6 + $0x18] sm:$0xff]
    %v74 = vld [vmem:[#allocation7] sm:$0xff]
    %v75 = vld [vmem:[#allocation7 + $0x8] sm:$0xff]
    %v76 = vld [vmem:[#allocation7 + $0x10] sm:$0xff]
    %v77 = vld [vmem:[#allocation7 + $0x18] sm:$0xff]
    %v78 = vld [vmem:[#allocation9 + $0x40] sm:$0xff]
    %v79 = vld [vmem:[#allocation9 + $0x48] sm:$0xff]
    %v80 = vld [vmem:[#allocation9 + $0x50] sm:$0xff]
    %v81 = vld [vmem:[#allocation9 + $0x58] sm:$0xff]
    %v82 = vld [vmem:[#allocation9 + $0x60] sm:$0xff]
    %v83 = vld [vmem:[#allocation9 + $0x68] sm:$0xff]
    %v84 = vld [vmem:[#allocation9 + $0x70] sm:$0xff]
    %v85 = vld [vmem:[#allocation9 + $0x78] sm:$0xff]
    %v86 = vld [vmem:[#allocation9 + $0x80] sm:$0xff]
    %v87 = vld [vmem:[#allocation9 + $0x88] sm:$0xff]
    %v88 = vld [vmem:[#allocation9 + $0x90] sm:$0xff]
    %v89 = vld [vmem:[#allocation9 + $0x98] sm:$0xff]
    %v90 = vld [vmem:[#allocation9 + $0xa0] sm:$0xff]
    %v91 = vld [vmem:[#allocation9 + $0xa8] sm:$0xff]
    %v92 = vld [vmem:[#allocation9 + $0xb0] sm:$0xff]
    %v93 = vld [vmem:[#allocation9 + $0xb8] sm:$0xff]
    %v94 = vld [vmem:[#allocation9 + $0xc0] sm:$0xff]
    %v95 = vld [vmem:[#allocation9 + $0xc8] sm:$0xff]
    %v96 = vld [vmem:[#allocation9 + $0xd0] sm:$0xff]
    %v97 = vld [vmem:[#allocation9 + $0xd8] sm:$0xff]
    %v98 = vld [vmem:[#allocation9 + $0xe0] sm:$0xff]
    %v99 = vld [vmem:[#allocation9 + $0xe8] sm:$0xff]
    %v100 = vld [vmem:[#allocation9 + $0xf0] sm:$0xff]
    %v101 = vld [vmem:[#allocation9 + $0xf8] sm:$0xff]
    %v102 = vld [vmem:[#allocation9 + $0x100] sm:$0x1]
    %v103 = vld [vmem:[#allocation9 + $0x108] sm:$0x1]
    %v104 = vld [vmem:[#allocation9 + $0x110] sm:$0x1]
    %v105 = vld [vmem:[#allocation9 + $0x118] sm:$0x1]
    %v106 = vld [vmem:[#allocation9] sm:$0xff]
    %v107 = vld [vmem:[#allocation9 + $0x8] sm:$0xff]
    %v108 = vld [vmem:[#allocation9 + $0x10] sm:$0xff]
    %v109 = vld [vmem:[#allocation9 + $0x18] sm:$0xff]
    %vm110 = vcmask 261120
    %v112 = vsel %vm110, %v74, 0
    %v115 = vsel %vm110, %v75, 0
    %v118 = vsel %vm110, %v76, 0
    %v121 = vsel %vm110, %v77, 0
    %123 = vmatprep.subr.mxu0 0.0
    %124 = vmatpush1.msra.mxu0 %v106
    %125 = vmatprep.subr.mxu0 0.0
    %126 = vmatpush1.msra.mxu0 %v107
    %127 = vmatprep.subr.mxu0 0.0
    %128 = vmatpush1.msra.mxu0 %v108
    %129 = vmatprep.subr.mxu0 0.0
    %130 = vmatpush1.msra.mxu0 %v109
    %131 = vmatprep.subr.mxu0 0.0
    %132 = vmatpush1.msra.mxu0 0.0
    %133 = vmatprep.subr.mxu0 0.0
    %134 = vmatpush1.msra.mxu0 0.0
    %135 = vmatprep.subr.mxu0 0.0
    %136 = vmatpush1.msra.mxu0 0.0
    %137 = vmatprep.subr.mxu0 0.0
    %138 = vmatpush1.msra.mxu0 0.0
    %139 = vmatprep.subr.mxu0 0.0
    %140 = vmatpush1.msra.mxu0 0.0
    %141 = vmatprep.subr.mxu0 0.0
    %142 = vmatpush1.msra.mxu0 0.0
    %143 = vmatprep.subr.mxu0 0.0
    %144 = vmatpush1.msra.mxu0 0.0
    %145 = vmatprep.subr.mxu0 0.0
    %146 = vmatpush1.msra.mxu0 0.0
    %147 = vmatprep.subr.mxu0 0.0
    %148 = vmatpush1.msra.mxu0 0.0
    %149 = vmatprep.subr.mxu0 0.0
    %150 = vmatpush1.msra.mxu0 0.0
    %151 = vmatprep.subr.mxu0 0.0
    %152 = vmatpush1.msra.mxu0 0.0
    %153 = vmatprep.subr.mxu0 0.0
    %154 = vmatpush1.msra.mxu0 0.0
    %155 = vmatprep.subr.mxu0 0.0
    %156 = vmatpush1.msra.mxu0 0.0
    %157 = vmatprep.subr.mxu0 0.0
    %158 = vmatpush1.msra.mxu0 0.0
    %159 = vmatprep.subr.mxu0 0.0
    %160 = vmatpush1.msra.mxu0 0.0
    %161 = vmatprep.subr.mxu0 0.0
    %162 = vmatpush1.msra.mxu0 0.0
    %163 = vmatprep.subr.mxu0 0.0
    %164 = vmatpush1.msra.mxu0 0.0
    %165 = vmatprep.subr.mxu0 0.0
    %166 = vmatpush1.msra.mxu0 0.0
    %167 = vmatprep.subr.mxu0 0.0
    %168 = vmatpush1.msra.mxu0 0.0
    %169 = vmatprep.subr.mxu0 0.0
    %170 = vmatpush1.msra.mxu0 0.0
    %171 = vmatprep.subr.mxu0 0.0
    %172 = vmatpush1.msra.mxu0 0.0
    %173 = vmatprep.subr.mxu0 0.0
    %174 = vmatpush1.msra.mxu0 0.0
    %175 = vmatprep.subr.mxu0 0.0
    %176 = vmatpush1.msra.mxu0 0.0
    %177 = vmatprep.subr.mxu0 0.0
    %178 = vmatpush1.msra.mxu0 0.0
    %179 = vmatprep.subr.mxu0 0.0
    %180 = vmatpush1.msra.mxu0 0.0
    %181 = vmatprep.subr.mxu0 0.0
    %182 = vmatpush1.msra.mxu0 0.0
    %183 = vmatprep.subr.mxu0 0.0
    %184 = vmatpush1.msra.mxu0 0.0
    %185 = vmatprep.subr.mxu0 0.0
    %186 = vmatpush1.msra.mxu0 0.0
    %187 = vmatprep.mubr.f32.mxu0 0.0
    %188 = vmatmul.mubr.f32.gmra.mrb[0].mxu0 %v112
    %v189 = vpop.f32.mrb[0].mxu0
    %v190 = vadd.f32 0.0, %v189
    %v191 = vpop.f32.mrb[0].mxu0
    %192 = vmatprep.mubr.f32.mxu0 0.0
    %193 = vmatmul.mubr.f32.gmra.mrb[0].mxu0 %v115
    %v194 = vpop.f32.mrb[0].mxu0
    %v195 = vadd.f32 0.0, %v194
    %v196 = vpop.f32.mrb[0].mxu0
    %197 = vmatprep.mubr.f32.mxu0 0.0
    %198 = vmatmul.mubr.f32.gmra.mrb[0].mxu0 %v118
    %v199 = vpop.f32.mrb[0].mxu0
    %v200 = vadd.f32 0.0, %v199
    %v201 = vpop.f32.mrb[0].mxu0
    %202 = vmatprep.mubr.f32.mxu0 0.0
    %203 = vmatmul.mubr.f32.gmra.mrb[0].mxu0 %v121
    %v204 = vpop.f32.mrb[0].mxu0
    %v205 = vadd.f32 0.0, %v204
    %v206 = vpop.f32.mrb[0].mxu0
    %207 = vdwg.mxu0
    %v209 = vsel %vm110, %v70, 0
    %v212 = vsel %vm110, %v71, 0
    %v215 = vsel %vm110, %v72, 0
    %v218 = vsel %vm110, %v73, 0
    %220 = vmatprep.subr.mxu0 0.0
    %221 = vmatpush1.msra.mxu0 %v190
    %222 = vmatprep.subr.mxu0 0.0
    %223 = vmatpush1.msra.mxu0 %v195
    %224 = vmatprep.subr.mxu0 0.0
    %225 = vmatpush1.msra.mxu0 %v200
    %226 = vmatprep.subr.mxu0 0.0
    %227 = vmatpush1.msra.mxu0 %v205
    %228 = vmatprep.subr.mxu0 0.0
    %229 = vmatpush1.msra.mxu0 0.0
    %230 = vmatprep.subr.mxu0 0.0
    %231 = vmatpush1.msra.mxu0 0.0
    %232 = vmatprep.subr.mxu0 0.0
    %233 = vmatpush1.msra.mxu0 0.0
    %234 = vmatprep.subr.mxu0 0.0
    %235 = vmatpush1.msra.mxu0 0.0
    %236 = vmatprep.subr.mxu0 0.0
    %237 = vmatpush1.msra.mxu0 0.0
    %238 = vmatprep.subr.mxu0 0.0
    %239 = vmatpush1.msra.mxu0 0.0
    %240 = vmatprep.subr.mxu0 0.0
    %241 = vmatpush1.msra.mxu0 0.0
    %242 = vmatprep.subr.mxu0 0.0
    %243 = vmatpush1.msra.mxu0 0.0
    %244 = vmatprep.subr.mxu0 0.0
    %245 = vmatpush1.msra.mxu0 0.0
    %246 = vmatprep.subr.mxu0 0.0
    %247 = vmatpush1.msra.mxu0 0.0
    %248 = vmatprep.subr.mxu0 0.0
    %249 = vmatpush1.msra.mxu0 0.0
    %250 = vmatprep.subr.mxu0 0.0
    %251 = vmatpush1.msra.mxu0 0.0
    %252 = vmatprep.subr.mxu0 0.0
    %253 = vmatpush1.msra.mxu0 0.0
    %254 = vmatprep.subr.mxu0 0.0
    %255 = vmatpush1.msra.mxu0 0.0
    %256 = vmatprep.subr.mxu0 0.0
    %257 = vmatpush1.msra.mxu0 0.0
    %258 = vmatprep.subr.mxu0 0.0
    %259 = vmatpush1.msra.mxu0 0.0
    %260 = vmatprep.subr.mxu0 0.0
    %261 = vmatpush1.msra.mxu0 0.0
    %262 = vmatprep.subr.mxu0 0.0
    %263 = vmatpush1.msra.mxu0 0.0
    %264 = vmatprep.subr.mxu0 0.0
    %265 = vmatpush1.msra.mxu0 0.0
    %266 = vmatprep.subr.mxu0 0.0
    %267 = vmatpush1.msra.mxu0 0.0
    %268 = vmatprep.subr.mxu0 0.0
    %269 = vmatpush1.msra.mxu0 0.0
    %270 = vmatprep.subr.mxu0 0.0
    %271 = vmatpush1.msra.mxu0 0.0
    %272 = vmatprep.subr.mxu0 0.0
    %273 = vmatpush1.msra.mxu0 0.0
    %274 = vmatprep.subr.mxu0 0.0
    %275 = vmatpush1.msra.mxu0 0.0
    %276 = vmatprep.subr.mxu0 0.0
    %277 = vmatpush1.msra.mxu0 0.0
    %278 = vmatprep.subr.mxu0 0.0
    %279 = vmatpush1.msra.mxu0 0.0
    %280 = vmatprep.subr.mxu0 0.0
    %281 = vmatpush1.msra.mxu0 0.0
    %282 = vmatprep.subr.mxu0 0.0
    %283 = vmatpush1.msra.mxu0 0.0
    %284 = vmatprep.mubr.f32.mxu0 0.0
    %285 = vmatmul.mubr.f32.gmra.mrb[0].mxu0 %v209
    %v286 = vpop.f32.mrb[0].mxu0
    %v287 = vadd.f32 0.0, %v286
    %v288 = vpop.f32.mrb[0].mxu0
    %289 = vmatprep.mubr.f32.mxu0 0.0
    %290 = vmatmul.mubr.f32.gmra.mrb[0].mxu0 %v212
    %v291 = vpop.f32.mrb[0].mxu0
    %v292 = vadd.f32 0.0, %v291
    %v293 = vpop.f32.mrb[0].mxu0
    %294 = vmatprep.mubr.f32.mxu0 0.0
    %295 = vmatmul.mubr.f32.gmra.mrb[0].mxu0 %v215
    %v296 = vpop.f32.mrb[0].mxu0
    %v297 = vadd.f32 0.0, %v296
    %v298 = vpop.f32.mrb[0].mxu0
    %299 = vmatprep.mubr.f32.mxu0 0.0
    %300 = vmatmul.mubr.f32.gmra.mrb[0].mxu0 %v218
    %v301 = vpop.f32.mrb[0].mxu0
    %v302 = vadd.f32 0.0, %v301
    %v303 = vpop.f32.mrb[0].mxu0
    %304 = vdwg.mxu0
    %305 = vmatprep.subr.mxu0 0.0
    %306 = vmatpush1.msra.mxu0 %v90
    %307 = vmatprep.subr.mxu0 0.0
    %308 = vmatpush1.msra.mxu0 %v91
    %309 = vmatprep.subr.mxu0 0.0
    %310 = vmatpush1.msra.mxu0 %v92
    %311 = vmatprep.subr.mxu0 0.0
    %312 = vmatpush1.msra.mxu0 %v93
    %313 = vmatprep.subr.mxu0 0.0
    %314 = vmatpush1.msra.mxu0 0.0
    %315 = vmatprep.subr.mxu0 0.0
    %316 = vmatpush1.msra.mxu0 0.0
    %317 = vmatprep.subr.mxu0 0.0
    %318 = vmatpush1.msra.mxu0 0.0
    %319 = vmatprep.subr.mxu0 0.0
    %320 = vmatpush1.msra.mxu0 0.0
    %321 = vmatprep.subr.mxu0 0.0
    %322 = vmatpush1.msra.mxu0 0.0
    %323 = vmatprep.subr.mxu0 0.0
    %324 = vmatpush1.msra.mxu0 0.0
    %325 = vmatprep.subr.mxu0 0.0
    %326 = vmatpush1.msra.mxu0 0.0
    %327 = vmatprep.subr.mxu0 0.0
    %328 = vmatpush1.msra.mxu0 0.0
    %329 = vmatprep.subr.mxu0 0.0
    %330 = vmatpush1.msra.mxu0 0.0
    %331 = vmatprep.subr.mxu0 0.0
    %332 = vmatpush1.msra.mxu0 0.0
    %333 = vmatprep.subr.mxu0 0.0
    %334 = vmatpush1.msra.mxu0 0.0
    %335 = vmatprep.subr.mxu0 0.0
    %336 = vmatpush1.msra.mxu0 0.0
    %337 = vmatprep.subr.mxu0 0.0
    %338 = vmatpush1.msra.mxu0 0.0
    %339 = vmatprep.subr.mxu0 0.0
    %340 = vmatpush1.msra.mxu0 0.0
    %341 = vmatprep.subr.mxu0 0.0
    %342 = vmatpush1.msra.mxu0 0.0
    %343 = vmatprep.subr.mxu0 0.0
    %344 = vmatpush1.msra.mxu0 0.0
    %345 = vmatprep.subr.mxu0 0.0
    %346 = vmatpush1.msra.mxu0 0.0
    %347 = vmatprep.subr.mxu0 0.0
    %348 = vmatpush1.msra.mxu0 0.0
    %349 = vmatprep.subr.mxu0 0.0
    %350 = vmatpush1.msra.mxu0 0.0
    %351 = vmatprep.subr.mxu0 0.0
    %352 = vmatpush1.msra.mxu0 0.0
    %353 = vmatprep.subr.mxu0 0.0
    %354 = vmatpush1.msra.mxu0 0.0
    %355 = vmatprep.subr.mxu0 0.0
    %356 = vmatpush1.msra.mxu0 0.0
    %357 = vmatprep.subr.mxu0 0.0
    %358 = vmatpush1.msra.mxu0 0.0
    %359 = vmatprep.subr.mxu0 0.0
    %360 = vmatpush1.msra.mxu0 0.0
    %361 = vmatprep.subr.mxu0 0.0
    %362 = vmatpush1.msra.mxu0 0.0
    %363 = vmatprep.subr.mxu0 0.0
    %364 = vmatpush1.msra.mxu0 0.0
    %365 = vmatprep.subr.mxu0 0.0
    %366 = vmatpush1.msra.mxu0 0.0
    %367 = vmatprep.subr.mxu0 0.0
    %368 = vmatpush1.msra.mxu0 0.0
    %369 = vmatprep.mubr.f32.mxu0 0.0
    %370 = vmatmul.mubr.f32.gmra.mrb[0].mxu0 %v112
    %v371 = vpop.f32.mrb[0].mxu0
    %v372 = vadd.f32 0.0, %v371
    %v373 = vpop.f32.mrb[0].mxu0
    %374 = vmatprep.mubr.f32.mxu0 0.0
    %375 = vmatmul.mubr.f32.gmra.mrb[0].mxu0 %v115
    %v376 = vpop.f32.mrb[0].mxu0
    %v377 = vadd.f32 0.0, %v376
    %v378 = vpop.f32.mrb[0].mxu0
    %379 = vmatprep.mubr.f32.mxu0 0.0
    %380 = vmatmul.mubr.f32.gmra.mrb[0].mxu0 %v118
    %v381 = vpop.f32.mrb[0].mxu0
    %v382 = vadd.f32 0.0, %v381
    %v383 = vpop.f32.mrb[0].mxu0
    %384 = vmatprep.mubr.f32.mxu0 0.0
    %385 = vmatmul.mubr.f32.gmra.mrb[0].mxu0 %v121
    %v386 = vpop.f32.mrb[0].mxu0
    %v387 = vadd.f32 0.0, %v386
    %v388 = vpop.f32.mrb[0].mxu0
    %389 = vdwg.mxu0
    %v391 = vsel %vm110, %v287, 0
    %v394 = vsel %vm110, %v292, 0
    %v397 = vsel %vm110, %v297, 0
    %v400 = vsel %vm110, %v302, 0
    %402 = vmatprep.subr.mxu0 0.0
    %403 = vmatpush1.msra.mxu0 %v78
    %404 = vmatprep.subr.mxu0 0.0
    %405 = vmatpush1.msra.mxu0 %v79
    %406 = vmatprep.subr.mxu0 0.0
    %407 = vmatpush1.msra.mxu0 %v80
    %408 = vmatprep.subr.mxu0 0.0
    %409 = vmatpush1.msra.mxu0 %v81
    %410 = vmatprep.subr.mxu0 0.0
    %411 = vmatpush1.msra.mxu0 0.0
    %412 = vmatprep.subr.mxu0 0.0
    %413 = vmatpush1.msra.mxu0 0.0
    %414 = vmatprep.subr.mxu0 0.0
    %415 = vmatpush1.msra.mxu0 0.0
    %416 = vmatprep.subr.mxu0 0.0
    %417 = vmatpush1.msra.mxu0 0.0
    %418 = vmatprep.subr.mxu0 0.0
    %419 = vmatpush1.msra.mxu0 0.0
    %420 = vmatprep.subr.mxu0 0.0
    %421 = vmatpush1.msra.mxu0 0.0
    %422 = vmatprep.subr.mxu0 0.0
    %423 = vmatpush1.msra.mxu0 0.0
    %424 = vmatprep.subr.mxu0 0.0
    %425 = vmatpush1.msra.mxu0 0.0
    %426 = vmatprep.subr.mxu0 0.0
    %427 = vmatpush1.msra.mxu0 0.0
    %428 = vmatprep.subr.mxu0 0.0
    %429 = vmatpush1.msra.mxu0 0.0
    %430 = vmatprep.subr.mxu0 0.0
    %431 = vmatpush1.msra.mxu0 0.0
    %432 = vmatprep.subr.mxu0 0.0
    %433 = vmatpush1.msra.mxu0 0.0
    %434 = vmatprep.subr.mxu0 0.0
    %435 = vmatpush1.msra.mxu0 0.0
    %436 = vmatprep.subr.mxu0 0.0
    %437 = vmatpush1.msra.mxu0 0.0
    %438 = vmatprep.subr.mxu0 0.0
    %439 = vmatpush1.msra.mxu0 0.0
    %440 = vmatprep.subr.mxu0 0.0
    %441 = vmatpush1.msra.mxu0 0.0
    %442 = vmatprep.subr.mxu0 0.0
    %443 = vmatpush1.msra.mxu0 0.0
    %444 = vmatprep.subr.mxu0 0.0
    %445 = vmatpush1.msra.mxu0 0.0
    %446 = vmatprep.subr.mxu0 0.0
    %447 = vmatpush1.msra.mxu0 0.0
    %448 = vmatprep.subr.mxu0 0.0
    %449 = vmatpush1.msra.mxu0 0.0
    %450 = vmatprep.subr.mxu0 0.0
    %451 = vmatpush1.msra.mxu0 0.0
    %452 = vmatprep.subr.mxu0 0.0
    %453 = vmatpush1.msra.mxu0 0.0
    %454 = vmatprep.subr.mxu0 0.0
    %455 = vmatpush1.msra.mxu0 0.0
    %456 = vmatprep.subr.mxu0 0.0
    %457 = vmatpush1.msra.mxu0 0.0
    %458 = vmatprep.subr.mxu0 0.0
    %459 = vmatpush1.msra.mxu0 0.0
    %460 = vmatprep.subr.mxu0 0.0
    %461 = vmatpush1.msra.mxu0 0.0
    %462 = vmatprep.subr.mxu0 0.0
    %463 = vmatpush1.msra.mxu0 0.0
    %464 = vmatprep.subr.mxu0 0.0
    %465 = vmatpush1.msra.mxu0 0.0
    %466 = vmatprep.mubr.f32.mxu0 0.0
    %467 = vmatmul.mubr.f32.gmra.mrb[0].mxu0 %v391
    %v468 = vpop.f32.mrb[0].mxu0
    %v469 = vadd.f32 %v372, %v468
    %v470 = vpop.f32.mrb[0].mxu0
    %471 = vmatprep.mubr.f32.mxu0 0.0
    %472 = vmatmul.mubr.f32.gmra.mrb[0].mxu0 %v394
    %v473 = vpop.f32.mrb[0].mxu0
    %v474 = vadd.f32 %v377, %v473
    %v475 = vpop.f32.mrb[0].mxu0
    %476 = vmatprep.mubr.f32.mxu0 0.0
    %477 = vmatmul.mubr.f32.gmra.mrb[0].mxu0 %v397
    %v478 = vpop.f32.mrb[0].mxu0
    %v479 = vadd.f32 %v382, %v478
    %v480 = vpop.f32.mrb[0].mxu0
    %481 = vmatprep.mubr.f32.mxu0 0.0
    %482 = vmatmul.mubr.f32.gmra.mrb[0].mxu0 %v400
    %v483 = vpop.f32.mrb[0].mxu0
    %v484 = vadd.f32 %v387, %v483
    %v485 = vpop.f32.mrb[0].mxu0
    %486 = vdwg.mxu0
    %v487 = vlaneseq
    %v488 = vshrl.u32 %v487, 7
    %v489 = vsub.s32 0, %v488
    %v490 = vrot.slane %v102, %v489
    %v491 = vadd.f32 %v469, %v490
    %v492 = vadd.f32 %v474, %v490
    %v493 = vadd.f32 %v479, %v490
    %v494 = vadd.f32 %v484, %v490
    %v495 = vxor.u32 %v491, 2147483648
    %v496 = vxor.u32 %v492, 2147483648
    %v497 = vxor.u32 %v493, 2147483648
    %v498 = vxor.u32 %v494, 2147483648
    %v499 = vmul.f32 %v495, 1.442695
    %v500 = vpow.pop %v499
    %v501 = vmul.f32 %v496, 1.442695
    %v502 = vpow.pop %v501
    %v503 = vmul.f32 %v497, 1.442695
    %v504 = vpow.pop %v503
    %v505 = vmul.f32 %v498, 1.442695
    %v506 = vpow.pop %v505
    %v507 = vadd.f32 %v500, 1.0
    %v508 = vadd.f32 %v502, 1.0
    %v509 = vadd.f32 %v504, 1.0
    %v510 = vadd.f32 %v506, 1.0
    %v511 = vrcp.pop %v507
    %v512 = vmul.f32 1.0, %v511
    %v513 = vrcp.pop %v508
    %v514 = vmul.f32 1.0, %v513
    %v515 = vrcp.pop %v509
    %v516 = vmul.f32 1.0, %v515
    %v517 = vrcp.pop %v510
    %v518 = vmul.f32 1.0, %v517
    %519 = vmatprep.subr.mxu0 0.0
    %520 = vmatpush1.msra.mxu0 %v94
    %521 = vmatprep.subr.mxu0 0.0
    %522 = vmatpush1.msra.mxu0 %v95
    %523 = vmatprep.subr.mxu0 0.0
    %524 = vmatpush1.msra.mxu0 %v96
    %525 = vmatprep.subr.mxu0 0.0
    %526 = vmatpush1.msra.mxu0 %v97
    %527 = vmatprep.subr.mxu0 0.0
    %528 = vmatpush1.msra.mxu0 0.0
    %529 = vmatprep.subr.mxu0 0.0
    %530 = vmatpush1.msra.mxu0 0.0
    %531 = vmatprep.subr.mxu0 0.0
    %532 = vmatpush1.msra.mxu0 0.0
    %533 = vmatprep.subr.mxu0 0.0
    %534 = vmatpush1.msra.mxu0 0.0
    %535 = vmatprep.subr.mxu0 0.0
    %536 = vmatpush1.msra.mxu0 0.0
    %537 = vmatprep.subr.mxu0 0.0
    %538 = vmatpush1.msra.mxu0 0.0
    %539 = vmatprep.subr.mxu0 0.0
    %540 = vmatpush1.msra.mxu0 0.0
    %541 = vmatprep.subr.mxu0 0.0
    %542 = vmatpush1.msra.mxu0 0.0
    %543 = vmatprep.subr.mxu0 0.0
    %544 = vmatpush1.msra.mxu0 0.0
    %545 = vmatprep.subr.mxu0 0.0
    %546 = vmatpush1.msra.mxu0 0.0
    %547 = vmatprep.subr.mxu0 0.0
    %548 = vmatpush1.msra.mxu0 0.0
    %549 = vmatprep.subr.mxu0 0.0
    %550 = vmatpush1.msra.mxu0 0.0
    %551 = vmatprep.subr.mxu0 0.0
    %552 = vmatpush1.msra.mxu0 0.0
    %553 = vmatprep.subr.mxu0 0.0
    %554 = vmatpush1.msra.mxu0 0.0
    %555 = vmatprep.subr.mxu0 0.0
    %556 = vmatpush1.msra.mxu0 0.0
    %557 = vmatprep.subr.mxu0 0.0
    %558 = vmatpush1.msra.mxu0 0.0
    %559 = vmatprep.subr.mxu0 0.0
    %560 = vmatpush1.msra.mxu0 0.0
    %561 = vmatprep.subr.mxu0 0.0
    %562 = vmatpush1.msra.mxu0 0.0
    %563 = vmatprep.subr.mxu0 0.0
    %564 = vmatpush1.msra.mxu0 0.0
    %565 = vmatprep.subr.mxu0 0.0
    %566 = vmatpush1.msra.mxu0 0.0
    %567 = vmatprep.subr.mxu0 0.0
    %568 = vmatpush1.msra.mxu0 0.0
    %569 = vmatprep.subr.mxu0 0.0
    %570 = vmatpush1.msra.mxu0 0.0
    %571 = vmatprep.subr.mxu0 0.0
    %572 = vmatpush1.msra.mxu0 0.0
    %573 = vmatprep.subr.mxu0 0.0
    %574 = vmatpush1.msra.mxu0 0.0
    %575 = vmatprep.subr.mxu0 0.0
    %576 = vmatpush1.msra.mxu0 0.0
    %577 = vmatprep.subr.mxu0 0.0
    %578 = vmatpush1.msra.mxu0 0.0
    %579 = vmatprep.subr.mxu0 0.0
    %580 = vmatpush1.msra.mxu0 0.0
    %581 = vmatprep.subr.mxu0 0.0
    %582 = vmatpush1.msra.mxu0 0.0
    %583 = vmatprep.mubr.f32.mxu0 0.0
    %584 = vmatmul.mubr.f32.gmra.mrb[0].mxu0 %v112
    %v585 = vpop.f32.mrb[0].mxu0
    %v586 = vadd.f32 0.0, %v585
    %v587 = vpop.f32.mrb[0].mxu0
    %588 = vmatprep.mubr.f32.mxu0 0.0
    %589 = vmatmul.mubr.f32.gmra.mrb[0].mxu0 %v115
    %v590 = vpop.f32.mrb[0].mxu0
    %v591 = vadd.f32 0.0, %v590
    %v592 = vpop.f32.mrb[0].mxu0
    %593 = vmatprep.mubr.f32.mxu0 0.0
    %594 = vmatmul.mubr.f32.gmra.mrb[0].mxu0 %v118
    %v595 = vpop.f32.mrb[0].mxu0
    %v596 = vadd.f32 0.0, %v595
    %v597 = vpop.f32.mrb[0].mxu0
    %598 = vmatprep.mubr.f32.mxu0 0.0
    %599 = vmatmul.mubr.f32.gmra.mrb[0].mxu0 %v121
    %v600 = vpop.f32.mrb[0].mxu0
    %v601 = vadd.f32 0.0, %v600
    %v602 = vpop.f32.mrb[0].mxu0
    %603 = vdwg.mxu0
    %604 = vmatprep.subr.mxu0 0.0
    %605 = vmatpush1.msra.mxu0 %v82
    %606 = vmatprep.subr.mxu0 0.0
    %607 = vmatpush1.msra.mxu0 %v83
    %608 = vmatprep.subr.mxu0 0.0
    %609 = vmatpush1.msra.mxu0 %v84
    %610 = vmatprep.subr.mxu0 0.0
    %611 = vmatpush1.msra.mxu0 %v85
    %612 = vmatprep.subr.mxu0 0.0
    %613 = vmatpush1.msra.mxu0 0.0
    %614 = vmatprep.subr.mxu0 0.0
    %615 = vmatpush1.msra.mxu0 0.0
    %616 = vmatprep.subr.mxu0 0.0
    %617 = vmatpush1.msra.mxu0 0.0
    %618 = vmatprep.subr.mxu0 0.0
    %619 = vmatpush1.msra.mxu0 0.0
    %620 = vmatprep.subr.mxu0 0.0
    %621 = vmatpush1.msra.mxu0 0.0
    %622 = vmatprep.subr.mxu0 0.0
    %623 = vmatpush1.msra.mxu0 0.0
    %624 = vmatprep.subr.mxu0 0.0
    %625 = vmatpush1.msra.mxu0 0.0
    %626 = vmatprep.subr.mxu0 0.0
    %627 = vmatpush1.msra.mxu0 0.0
    %628 = vmatprep.subr.mxu0 0.0
    %629 = vmatpush1.msra.mxu0 0.0
    %630 = vmatprep.subr.mxu0 0.0
    %631 = vmatpush1.msra.mxu0 0.0
    %632 = vmatprep.subr.mxu0 0.0
    %633 = vmatpush1.msra.mxu0 0.0
    %634 = vmatprep.subr.mxu0 0.0
    %635 = vmatpush1.msra.mxu0 0.0
    %636 = vmatprep.subr.mxu0 0.0
    %637 = vmatpush1.msra.mxu0 0.0
    %638 = vmatprep.subr.mxu0 0.0
    %639 = vmatpush1.msra.mxu0 0.0
    %640 = vmatprep.subr.mxu0 0.0
    %641 = vmatpush1.msra.mxu0 0.0
    %642 = vmatprep.subr.mxu0 0.0
    %643 = vmatpush1.msra.mxu0 0.0
    %644 = vmatprep.subr.mxu0 0.0
    %645 = vmatpush1.msra.mxu0 0.0
    %646 = vmatprep.subr.mxu0 0.0
    %647 = vmatpush1.msra.mxu0 0.0
    %648 = vmatprep.subr.mxu0 0.0
    %649 = vmatpush1.msra.mxu0 0.0
    %650 = vmatprep.subr.mxu0 0.0
    %651 = vmatpush1.msra.mxu0 0.0
    %652 = vmatprep.subr.mxu0 0.0
    %653 = vmatpush1.msra.mxu0 0.0
    %654 = vmatprep.subr.mxu0 0.0
    %655 = vmatpush1.msra.mxu0 0.0
    %656 = vmatprep.subr.mxu0 0.0
    %657 = vmatpush1.msra.mxu0 0.0
    %658 = vmatprep.subr.mxu0 0.0
    %659 = vmatpush1.msra.mxu0 0.0
    %660 = vmatprep.subr.mxu0 0.0
    %661 = vmatpush1.msra.mxu0 0.0
    %662 = vmatprep.subr.mxu0 0.0
    %663 = vmatpush1.msra.mxu0 0.0
    %664 = vmatprep.subr.mxu0 0.0
    %665 = vmatpush1.msra.mxu0 0.0
    %666 = vmatprep.subr.mxu0 0.0
    %667 = vmatpush1.msra.mxu0 0.0
    %668 = vmatprep.mubr.f32.mxu0 0.0
    %669 = vmatmul.mubr.f32.gmra.mrb[0].mxu0 %v391
    %v670 = vpop.f32.mrb[0].mxu0
    %v671 = vadd.f32 %v586, %v670
    %v672 = vpop.f32.mrb[0].mxu0
    %673 = vmatprep.mubr.f32.mxu0 0.0
    %674 = vmatmul.mubr.f32.gmra.mrb[0].mxu0 %v394
    %v675 = vpop.f32.mrb[0].mxu0
    %v676 = vadd.f32 %v591, %v675
    %v677 = vpop.f32.mrb[0].mxu0
    %678 = vmatprep.mubr.f32.mxu0 0.0
    %679 = vmatmul.mubr.f32.gmra.mrb[0].mxu0 %v397
    %v680 = vpop.f32.mrb[0].mxu0
    %v681 = vadd.f32 %v596, %v680
    %v682 = vpop.f32.mrb[0].mxu0
    %683 = vmatprep.mubr.f32.mxu0 0.0
    %684 = vmatmul.mubr.f32.gmra.mrb[0].mxu0 %v400
    %v685 = vpop.f32.mrb[0].mxu0
    %v686 = vadd.f32 %v601, %v685
    %v687 = vpop.f32.mrb[0].mxu0
    %688 = vdwg.mxu0
    %v689 = vlaneseq
    %v690 = vshrl.u32 %v689, 7
    %v691 = vsub.s32 0, %v690
    %v692 = vrot.slane %v103, %v691
    %v693 = vadd.f32 %v671, %v692
    %v694 = vadd.f32 %v676, %v692
    %v695 = vadd.f32 %v681, %v692
    %v696 = vadd.f32 %v686, %v692
    %v697 = vxor.u32 %v693, 2147483648
    %v698 = vxor.u32 %v694, 2147483648
    %v699 = vxor.u32 %v695, 2147483648
    %v700 = vxor.u32 %v696, 2147483648
    %v701 = vmul.f32 %v697, 1.442695
    %v702 = vpow.pop %v701
    %v703 = vmul.f32 %v698, 1.442695
    %v704 = vpow.pop %v703
    %v705 = vmul.f32 %v699, 1.442695
    %v706 = vpow.pop %v705
    %v707 = vmul.f32 %v700, 1.442695
    %v708 = vpow.pop %v707
    %v709 = vadd.f32 %v702, 1.0
    %v710 = vadd.f32 %v704, 1.0
    %v711 = vadd.f32 %v706, 1.0
    %v712 = vadd.f32 %v708, 1.0
    %v713 = vrcp.pop %v709
    %v714 = vmul.f32 1.0, %v713
    %v715 = vrcp.pop %v710
    %v716 = vmul.f32 1.0, %v715
    %v717 = vrcp.pop %v711
    %v718 = vmul.f32 1.0, %v717
    %v719 = vrcp.pop %v712
    %v720 = vmul.f32 1.0, %v719
    %v721 = vlaneseq
    %v722 = vshrl.u32 %v721, 7
    %v723 = vsub.s32 0, %v722
    %v724 = vrot.slane %v104, %v723
    %725 = vmatprep.subr.mxu0 0.0
    %726 = vmatpush1.msra.mxu0 %v86
    %727 = vmatprep.subr.mxu0 0.0
    %728 = vmatpush1.msra.mxu0 %v87
    %729 = vmatprep.subr.mxu0 0.0
    %730 = vmatpush1.msra.mxu0 %v88
    %731 = vmatprep.subr.mxu0 0.0
    %732 = vmatpush1.msra.mxu0 %v89
    %733 = vmatprep.subr.mxu0 0.0
    %734 = vmatpush1.msra.mxu0 0.0
    %735 = vmatprep.subr.mxu0 0.0
    %736 = vmatpush1.msra.mxu0 0.0
    %737 = vmatprep.subr.mxu0 0.0
    %738 = vmatpush1.msra.mxu0 0.0
    %739 = vmatprep.subr.mxu0 0.0
    %740 = vmatpush1.msra.mxu0 0.0
    %741 = vmatprep.subr.mxu0 0.0
    %742 = vmatpush1.msra.mxu0 0.0
    %743 = vmatprep.subr.mxu0 0.0
    %744 = vmatpush1.msra.mxu0 0.0
    %745 = vmatprep.subr.mxu0 0.0
    %746 = vmatpush1.msra.mxu0 0.0
    %747 = vmatprep.subr.mxu0 0.0
    %748 = vmatpush1.msra.mxu0 0.0
    %749 = vmatprep.subr.mxu0 0.0
    %750 = vmatpush1.msra.mxu0 0.0
    %751 = vmatprep.subr.mxu0 0.0
    %752 = vmatpush1.msra.mxu0 0.0
    %753 = vmatprep.subr.mxu0 0.0
    %754 = vmatpush1.msra.mxu0 0.0
    %755 = vmatprep.subr.mxu0 0.0
    %756 = vmatpush1.msra.mxu0 0.0
    %757 = vmatprep.subr.mxu0 0.0
    %758 = vmatpush1.msra.mxu0 0.0
    %759 = vmatprep.subr.mxu0 0.0
    %760 = vmatpush1.msra.mxu0 0.0
    %761 = vmatprep.subr.mxu0 0.0
    %762 = vmatpush1.msra.mxu0 0.0
    %763 = vmatprep.subr.mxu0 0.0
    %764 = vmatpush1.msra.mxu0 0.0
    %765 = vmatprep.subr.mxu0 0.0
    %766 = vmatpush1.msra.mxu0 0.0
    %767 = vmatprep.subr.mxu0 0.0
    %768 = vmatpush1.msra.mxu0 0.0
    %769 = vmatprep.subr.mxu0 0.0
    %770 = vmatpush1.msra.mxu0 0.0
    %771 = vmatprep.subr.mxu0 0.0
    %772 = vmatpush1.msra.mxu0 0.0
    %773 = vmatprep.subr.mxu0 0.0
    %774 = vmatpush1.msra.mxu0 0.0
    %775 = vmatprep.subr.mxu0 0.0
    %776 = vmatpush1.msra.mxu0 0.0
    %777 = vmatprep.subr.mxu0 0.0
    %778 = vmatpush1.msra.mxu0 0.0
    %779 = vmatprep.subr.mxu0 0.0
    %780 = vmatpush1.msra.mxu0 0.0
    %781 = vmatprep.subr.mxu0 0.0
    %782 = vmatpush1.msra.mxu0 0.0
    %783 = vmatprep.subr.mxu0 0.0
    %784 = vmatpush1.msra.mxu0 0.0
    %785 = vmatprep.subr.mxu0 0.0
    %786 = vmatpush1.msra.mxu0 0.0
    %787 = vmatprep.subr.mxu0 0.0
    %788 = vmatpush1.msra.mxu0 0.0
    %789 = vmatprep.mubr.f32.mxu0 0.0
    %790 = vmatmul.mubr.f32.gmra.mrb[0].mxu0 %v391
    %v791 = vpop.f32.mrb[0].mxu0
    %v792 = vadd.f32 %v724, %v791
    %v793 = vpop.f32.mrb[0].mxu0
    %794 = vmatprep.mubr.f32.mxu0 0.0
    %795 = vmatmul.mubr.f32.gmra.mrb[0].mxu0 %v394
    %v796 = vpop.f32.mrb[0].mxu0
    %v797 = vadd.f32 %v724, %v796
    %v798 = vpop.f32.mrb[0].mxu0
    %799 = vmatprep.mubr.f32.mxu0 0.0
    %800 = vmatmul.mubr.f32.gmra.mrb[0].mxu0 %v397
    %v801 = vpop.f32.mrb[0].mxu0
    %v802 = vadd.f32 %v724, %v801
    %v803 = vpop.f32.mrb[0].mxu0
    %804 = vmatprep.mubr.f32.mxu0 0.0
    %805 = vmatmul.mubr.f32.gmra.mrb[0].mxu0 %v400
    %v806 = vpop.f32.mrb[0].mxu0
    %v807 = vadd.f32 %v724, %v806
    %v808 = vpop.f32.mrb[0].mxu0
    %809 = vdwg.mxu0
    %v810 = vlaneseq
    %v811 = vshrl.u32 %v810, 7
    %v812 = vsub.s32 0, %v811
    %v813 = vrot.slane %v105, %v812
    %814 = vmatprep.subr.mxu0 0.0
    %815 = vmatpush1.msra.mxu0 %v98
    %816 = vmatprep.subr.mxu0 0.0
    %817 = vmatpush1.msra.mxu0 %v99
    %818 = vmatprep.subr.mxu0 0.0
    %819 = vmatpush1.msra.mxu0 %v100
    %820 = vmatprep.subr.mxu0 0.0
    %821 = vmatpush1.msra.mxu0 %v101
    %822 = vmatprep.subr.mxu0 0.0
    %823 = vmatpush1.msra.mxu0 0.0
    %824 = vmatprep.subr.mxu0 0.0
    %825 = vmatpush1.msra.mxu0 0.0
    %826 = vmatprep.subr.mxu0 0.0
    %827 = vmatpush1.msra.mxu0 0.0
    %828 = vmatprep.subr.mxu0 0.0
    %829 = vmatpush1.msra.mxu0 0.0
    %830 = vmatprep.subr.mxu0 0.0
    %831 = vmatpush1.msra.mxu0 0.0
    %832 = vmatprep.subr.mxu0 0.0
    %833 = vmatpush1.msra.mxu0 0.0
    %834 = vmatprep.subr.mxu0 0.0
    %835 = vmatpush1.msra.mxu0 0.0
    %836 = vmatprep.subr.mxu0 0.0
    %837 = vmatpush1.msra.mxu0 0.0
    %838 = vmatprep.subr.mxu0 0.0
    %839 = vmatpush1.msra.mxu0 0.0
    %840 = vmatprep.subr.mxu0 0.0
    %841 = vmatpush1.msra.mxu0 0.0
    %842 = vmatprep.subr.mxu0 0.0
    %843 = vmatpush1.msra.mxu0 0.0
    %844 = vmatprep.subr.mxu0 0.0
    %845 = vmatpush1.msra.mxu0 0.0
    %846 = vmatprep.subr.mxu0 0.0
    %847 = vmatpush1.msra.mxu0 0.0
    %848 = vmatprep.subr.mxu0 0.0
    %849 = vmatpush1.msra.mxu0 0.0
    %850 = vmatprep.subr.mxu0 0.0
    %851 = vmatpush1.msra.mxu0 0.0
    %852 = vmatprep.subr.mxu0 0.0
    %853 = vmatpush1.msra.mxu0 0.0
    %854 = vmatprep.subr.mxu0 0.0
    %855 = vmatpush1.msra.mxu0 0.0
    %856 = vmatprep.subr.mxu0 0.0
    %857 = vmatpush1.msra.mxu0 0.0
    %858 = vmatprep.subr.mxu0 0.0
    %859 = vmatpush1.msra.mxu0 0.0
    %860 = vmatprep.subr.mxu0 0.0
    %861 = vmatpush1.msra.mxu0 0.0
    %862 = vmatprep.subr.mxu0 0.0
    %863 = vmatpush1.msra.mxu0 0.0
    %864 = vmatprep.subr.mxu0 0.0
    %865 = vmatpush1.msra.mxu0 0.0
    %866 = vmatprep.subr.mxu0 0.0
    %867 = vmatpush1.msra.mxu0 0.0
    %868 = vmatprep.subr.mxu0 0.0
    %869 = vmatpush1.msra.mxu0 0.0
    %870 = vmatprep.subr.mxu0 0.0
    %871 = vmatpush1.msra.mxu0 0.0
    %872 = vmatprep.subr.mxu0 0.0
    %873 = vmatpush1.msra.mxu0 0.0
    %874 = vmatprep.subr.mxu0 0.0
    %875 = vmatpush1.msra.mxu0 0.0
    %876 = vmatprep.subr.mxu0 0.0
    %877 = vmatpush1.msra.mxu0 0.0
    %878 = vmatprep.mubr.f32.mxu0 0.0
    %879 = vmatmul.mubr.f32.gmra.mrb[0].mxu0 %v112
    %v880 = vpop.f32.mrb[0].mxu0
    %v881 = vadd.f32 %v813, %v880
    %v882 = vpop.f32.mrb[0].mxu0
    %883 = vmatprep.mubr.f32.mxu0 0.0
    %884 = vmatmul.mubr.f32.gmra.mrb[0].mxu0 %v115
    %v885 = vpop.f32.mrb[0].mxu0
    %v886 = vadd.f32 %v813, %v885
    %v887 = vpop.f32.mrb[0].mxu0
    %888 = vmatprep.mubr.f32.mxu0 0.0
    %889 = vmatmul.mubr.f32.gmra.mrb[0].mxu0 %v118
    %v890 = vpop.f32.mrb[0].mxu0
    %v891 = vadd.f32 %v813, %v890
    %v892 = vpop.f32.mrb[0].mxu0
    %893 = vmatprep.mubr.f32.mxu0 0.0
    %894 = vmatmul.mubr.f32.gmra.mrb[0].mxu0 %v121
    %v895 = vpop.f32.mrb[0].mxu0
    %v896 = vadd.f32 %v813, %v895
    %v897 = vpop.f32.mrb[0].mxu0
    %898 = vdwg.mxu0
    %v899 = vmul.f32 %v512, %v881
    %v900 = vmul.f32 %v514, %v886
    %v901 = vmul.f32 %v516, %v891
    %v902 = vmul.f32 %v518, %v896
    %v903 = vadd.f32 %v792, %v899
    %v904 = vadd.f32 %v797, %v900
    %v905 = vadd.f32 %v802, %v901
    %v906 = vadd.f32 %v807, %v902
    %v907 = vtanh.pop %v903
    %v908 = vtanh.pop %v904
    %v909 = vtanh.pop %v905
    %v910 = vtanh.pop %v906
    %v911 = vsub.f32 1.0, %v714
    %v912 = vsub.f32 1.0, %v716
    %v913 = vsub.f32 1.0, %v718
    %v914 = vsub.f32 1.0, %v720
    %v915 = vmul.f32 %v911, %v907
    %v916 = vmul.f32 %v912, %v908
    %v917 = vmul.f32 %v913, %v909
    %v918 = vmul.f32 %v914, %v910
    %v919 = vmul.f32 %v714, %v74
    %v920 = vmul.f32 %v716, %v75
    %v921 = vmul.f32 %v718, %v76
    %v922 = vmul.f32 %v720, %v77
    %v923 = vadd.f32 %v915, %v919
    %v924 = vadd.f32 %v916, %v920
    %v925 = vadd.f32 %v917, %v921
    %v926 = vadd.f32 %v918, %v922
    %v927 = vld [vmem:[#allocation9 + $0x20] sm:$0xff]
    %v928 = vld [vmem:[#allocation9 + $0x28] sm:$0xff]
    %v929 = vld [vmem:[#allocation9 + $0x30] sm:$0xff]
    %v930 = vld [vmem:[#allocation9 + $0x38] sm:$0xff]
    %v932 = vsel %vm110, %v923, 0
    %v935 = vsel %vm110, %v924, 0
    %v938 = vsel %vm110, %v925, 0
    %v941 = vsel %vm110, %v926, 0
    %943 = vmatprep.subr.mxu0 0.0
    %944 = vmatpush1.msra.mxu0 %v927
    %945 = vmatprep.subr.mxu0 0.0
    %946 = vmatpush1.msra.mxu0 %v928
    %947 = vmatprep.subr.mxu0 0.0
    %948 = vmatpush1.msra.mxu0 %v929
    %949 = vmatprep.subr.mxu0 0.0
    %950 = vmatpush1.msra.mxu0 %v930
    %951 = vmatprep.subr.mxu0 0.0
    %952 = vmatpush1.msra.mxu0 0.0
    %953 = vmatprep.subr.mxu0 0.0
    %954 = vmatpush1.msra.mxu0 0.0
    %955 = vmatprep.subr.mxu0 0.0
    %956 = vmatpush1.msra.mxu0 0.0
    %957 = vmatprep.subr.mxu0 0.0
    %958 = vmatpush1.msra.mxu0 0.0
    %959 = vmatprep.subr.mxu0 0.0
    %960 = vmatpush1.msra.mxu0 0.0
    %961 = vmatprep.subr.mxu0 0.0
    %962 = vmatpush1.msra.mxu0 0.0
    %963 = vmatprep.subr.mxu0 0.0
    %964 = vmatpush1.msra.mxu0 0.0
    %965 = vmatprep.subr.mxu0 0.0
    %966 = vmatpush1.msra.mxu0 0.0
    %967 = vmatprep.subr.mxu0 0.0
    %968 = vmatpush1.msra.mxu0 0.0
    %969 = vmatprep.subr.mxu0 0.0
    %970 = vmatpush1.msra.mxu0 0.0
    %971 = vmatprep.subr.mxu0 0.0
    %972 = vmatpush1.msra.mxu0 0.0
    %973 = vmatprep.subr.mxu0 0.0
    %974 = vmatpush1.msra.mxu0 0.0
    %975 = vmatprep.subr.mxu0 0.0
    %976 = vmatpush1.msra.mxu0 0.0
    %977 = vmatprep.subr.mxu0 0.0
    %978 = vmatpush1.msra.mxu0 0.0
    %979 = vmatprep.subr.mxu0 0.0
    %980 = vmatpush1.msra.mxu0 0.0
    %981 = vmatprep.subr.mxu0 0.0
    %982 = vmatpush1.msra.mxu0 0.0
    %983 = vmatprep.subr.mxu0 0.0
    %984 = vmatpush1.msra.mxu0 0.0
    %985 = vmatprep.subr.mxu0 0.0
    %986 = vmatpush1.msra.mxu0 0.0
    %987 = vmatprep.subr.mxu0 0.0
    %988 = vmatpush1.msra.mxu0 0.0
    %989 = vmatprep.subr.mxu0 0.0
    %990 = vmatpush1.msra.mxu0 0.0
    %991 = vmatprep.subr.mxu0 0.0
    %992 = vmatpush1.msra.mxu0 0.0
    %993 = vmatprep.subr.mxu0 0.0
    %994 = vmatpush1.msra.mxu0 0.0
    %995 = vmatprep.subr.mxu0 0.0
    %996 = vmatpush1.msra.mxu0 0.0
    %997 = vmatprep.subr.mxu0 0.0
    %998 = vmatpush1.msra.mxu0 0.0
    %999 = vmatprep.subr.mxu0 0.0
    %1000 = vmatpush1.msra.mxu0 0.0
    %1001 = vmatprep.subr.mxu0 0.0
    %1002 = vmatpush1.msra.mxu0 0.0
    %1003 = vmatprep.subr.mxu0 0.0
    %1004 = vmatpush1.msra.mxu0 0.0
    %1005 = vmatprep.subr.mxu0 0.0
    %1006 = vmatpush1.msra.mxu0 0.0
    %1007 = vmatprep.mubr.f32.mxu0 0.0
    %1008 = vmatmul.mubr.f32.gmra.mrb[0].mxu0 %v932
    %v1009 = vpop.f32.mrb[0].mxu0
    %v1010 = vadd.f32 0.0, %v1009
    %v1011 = vpop.f32.mrb[0].mxu0
    %1012 = vmatprep.mubr.f32.mxu0 0.0
    %1013 = vmatmul.mubr.f32.gmra.mrb[0].mxu0 %v935
    %v1014 = vpop.f32.mrb[0].mxu0
    %v1015 = vadd.f32 0.0, %v1014
    %v1016 = vpop.f32.mrb[0].mxu0
    %1017 = vmatprep.mubr.f32.mxu0 0.0
    %1018 = vmatmul.mubr.f32.gmra.mrb[0].mxu0 %v938
    %v1019 = vpop.f32.mrb[0].mxu0
    %v1020 = vadd.f32 0.0, %v1019
    %v1021 = vpop.f32.mrb[0].mxu0
    %1022 = vmatprep.mubr.f32.mxu0 0.0
    %1023 = vmatmul.mubr.f32.gmra.mrb[0].mxu0 %v941
    %v1024 = vpop.f32.mrb[0].mxu0
    %v1025 = vadd.f32 0.0, %v1024
    %v1026 = vpop.f32.mrb[0].mxu0
    %1027 = vdwg.mxu0
    %1028 = vmatprep.subr.mxu0 0.0
    %1029 = vmatpush1.msra.mxu0 %v1010
    %1030 = vmatprep.subr.mxu0 0.0
    %1031 = vmatpush1.msra.mxu0 %v1015
    %1032 = vmatprep.subr.mxu0 0.0
    %1033 = vmatpush1.msra.mxu0 %v1020
    %1034 = vmatprep.subr.mxu0 0.0
    %1035 = vmatpush1.msra.mxu0 %v1025
    %1036 = vmatprep.subr.mxu0 0.0
    %1037 = vmatpush1.msra.mxu0 0.0
    %1038 = vmatprep.subr.mxu0 0.0
    %1039 = vmatpush1.msra.mxu0 0.0
    %1040 = vmatprep.subr.mxu0 0.0
    %1041 = vmatpush1.msra.mxu0 0.0
    %1042 = vmatprep.subr.mxu0 0.0
    %1043 = vmatpush1.msra.mxu0 0.0
    %1044 = vmatprep.subr.mxu0 0.0
    %1045 = vmatpush1.msra.mxu0 0.0
    %1046 = vmatprep.subr.mxu0 0.0
    %1047 = vmatpush1.msra.mxu0 0.0
    %1048 = vmatprep.subr.mxu0 0.0
    %1049 = vmatpush1.msra.mxu0 0.0
    %1050 = vmatprep.subr.mxu0 0.0
    %1051 = vmatpush1.msra.mxu0 0.0
    %1052 = vmatprep.subr.mxu0 0.0
    %1053 = vmatpush1.msra.mxu0 0.0
    %1054 = vmatprep.subr.mxu0 0.0
    %1055 = vmatpush1.msra.mxu0 0.0
    %1056 = vmatprep.subr.mxu0 0.0
    %1057 = vmatpush1.msra.mxu0 0.0
    %1058 = vmatprep.subr.mxu0 0.0
    %1059 = vmatpush1.msra.mxu0 0.0
    %1060 = vmatprep.subr.mxu0 0.0
    %1061 = vmatpush1.msra.mxu0 0.0
    %1062 = vmatprep.subr.mxu0 0.0
    %1063 = vmatpush1.msra.mxu0 0.0
    %1064 = vmatprep.subr.mxu0 0.0
    %1065 = vmatpush1.msra.mxu0 0.0
    %1066 = vmatprep.subr.mxu0 0.0
    %1067 = vmatpush1.msra.mxu0 0.0
    %1068 = vmatprep.subr.mxu0 0.0
    %1069 = vmatpush1.msra.mxu0 0.0
    %1070 = vmatprep.subr.mxu0 0.0
    %1071 = vmatpush1.msra.mxu0 0.0
    %1072 = vmatprep.subr.mxu0 0.0
    %1073 = vmatpush1.msra.mxu0 0.0
    %1074 = vmatprep.subr.mxu0 0.0
    %1075 = vmatpush1.msra.mxu0 0.0
    %1076 = vmatprep.subr.mxu0 0.0
    %1077 = vmatpush1.msra.mxu0 0.0
    %1078 = vmatprep.subr.mxu0 0.0
    %1079 = vmatpush1.msra.mxu0 0.0
    %1080 = vmatprep.subr.mxu0 0.0
    %1081 = vmatpush1.msra.mxu0 0.0
    %1082 = vmatprep.subr.mxu0 0.0
    %1083 = vmatpush1.msra.mxu0 0.0
    %1084 = vmatprep.subr.mxu0 0.0
    %1085 = vmatpush1.msra.mxu0 0.0
    %1086 = vmatprep.subr.mxu0 0.0
    %1087 = vmatpush1.msra.mxu0 0.0
    %1088 = vmatprep.subr.mxu0 0.0
    %1089 = vmatpush1.msra.mxu0 0.0
    %1090 = vmatprep.subr.mxu0 0.0
    %1091 = vmatpush1.msra.mxu0 0.0
    %1092 = vmatprep.mubr.f32.mxu0 0.0
    %1093 = vmatmul.mubr.f32.gmra.mrb[0].mxu0 %v209
    %v1094 = vpop.f32.mrb[0].mxu0
    %v1095 = vadd.f32 0.0, %v1094
    %v1096 = vpop.f32.mrb[0].mxu0
    %1097 = vmatprep.mubr.f32.mxu0 0.0
    %1098 = vmatmul.mubr.f32.gmra.mrb[0].mxu0 %v212
    %v1099 = vpop.f32.mrb[0].mxu0
    %v1100 = vadd.f32 0.0, %v1099
    %v1101 = vpop.f32.mrb[0].mxu0
    %1102 = vmatprep.mubr.f32.mxu0 0.0
    %1103 = vmatmul.mubr.f32.gmra.mrb[0].mxu0 %v215
    %v1104 = vpop.f32.mrb[0].mxu0
    %v1105 = vadd.f32 0.0, %v1104
    %v1106 = vpop.f32.mrb[0].mxu0
    %1107 = vmatprep.mubr.f32.mxu0 0.0
    %1108 = vmatmul.mubr.f32.gmra.mrb[0].mxu0 %v218
    %v1109 = vpop.f32.mrb[0].mxu0
    %v1110 = vadd.f32 0.0, %v1109
    %v1111 = vpop.f32.mrb[0].mxu0
    %1112 = vdwg.mxu0
    %1113 = vmatprep.subr.mxu0 0.0
    %1114 = vmatpush1.msra.mxu0 %v90
    %1115 = vmatprep.subr.mxu0 0.0
    %1116 = vmatpush1.msra.mxu0 %v91
    %1117 = vmatprep.subr.mxu0 0.0
    %1118 = vmatpush1.msra.mxu0 %v92
    %1119 = vmatprep.subr.mxu0 0.0
    %1120 = vmatpush1.msra.mxu0 %v93
    %1121 = vmatprep.subr.mxu0 0.0
    %1122 = vmatpush1.msra.mxu0 0.0
    %1123 = vmatprep.subr.mxu0 0.0
    %1124 = vmatpush1.msra.mxu0 0.0
    %1125 = vmatprep.subr.mxu0 0.0
    %1126 = vmatpush1.msra.mxu0 0.0
    %1127 = vmatprep.subr.mxu0 0.0
    %1128 = vmatpush1.msra.mxu0 0.0
    %1129 = vmatprep.subr.mxu0 0.0
    %1130 = vmatpush1.msra.mxu0 0.0
    %1131 = vmatprep.subr.mxu0 0.0
    %1132 = vmatpush1.msra.mxu0 0.0
    %1133 = vmatprep.subr.mxu0 0.0
    %1134 = vmatpush1.msra.mxu0 0.0
    %1135 = vmatprep.subr.mxu0 0.0
    %1136 = vmatpush1.msra.mxu0 0.0
    %1137 = vmatprep.subr.mxu0 0.0
    %1138 = vmatpush1.msra.mxu0 0.0
    %1139 = vmatprep.subr.mxu0 0.0
    %1140 = vmatpush1.msra.mxu0 0.0
    %1141 = vmatprep.subr.mxu0 0.0
    %1142 = vmatpush1.msra.mxu0 0.0
    %1143 = vmatprep.subr.mxu0 0.0
    %1144 = vmatpush1.msra.mxu0 0.0
    %1145 = vmatprep.subr.mxu0 0.0
    %1146 = vmatpush1.msra.mxu0 0.0
    %1147 = vmatprep.subr.mxu0 0.0
    %1148 = vmatpush1.msra.mxu0 0.0
    %1149 = vmatprep.subr.mxu0 0.0
    %1150 = vmatpush1.msra.mxu0 0.0
    %1151 = vmatprep.subr.mxu0 0.0
    %1152 = vmatpush1.msra.mxu0 0.0
    %1153 = vmatprep.subr.mxu0 0.0
    %1154 = vmatpush1.msra.mxu0 0.0
    %1155 = vmatprep.subr.mxu0 0.0
    %1156 = vmatpush1.msra.mxu0 0.0
    %1157 = vmatprep.subr.mxu0 0.0
    %1158 = vmatpush1.msra.mxu0 0.0
    %1159 = vmatprep.subr.mxu0 0.0
    %1160 = vmatpush1.msra.mxu0 0.0
    %1161 = vmatprep.subr.mxu0 0.0
    %1162 = vmatpush1.msra.mxu0 0.0
    %1163 = vmatprep.subr.mxu0 0.0
    %1164 = vmatpush1.msra.mxu0 0.0
    %1165 = vmatprep.subr.mxu0 0.0
    %1166 = vmatpush1.msra.mxu0 0.0
    %1167 = vmatprep.subr.mxu0 0.0
    %1168 = vmatpush1.msra.mxu0 0.0
    %1169 = vmatprep.subr.mxu0 0.0
    %1170 = vmatpush1.msra.mxu0 0.0
    %1171 = vmatprep.subr.mxu0 0.0
    %1172 = vmatpush1.msra.mxu0 0.0
    %1173 = vmatprep.subr.mxu0 0.0
    %1174 = vmatpush1.msra.mxu0 0.0
    %1175 = vmatprep.subr.mxu0 0.0
    %1176 = vmatpush1.msra.mxu0 0.0
    %1177 = vmatprep.mubr.f32.mxu0 0.0
    %1178 = vmatmul.mubr.f32.gmra.mrb[0].mxu0 %v932
    %v1179 = vpop.f32.mrb[0].mxu0
    %v1180 = vadd.f32 0.0, %v1179
    %v1181 = vpop.f32.mrb[0].mxu0
    %1182 = vmatprep.mubr.f32.mxu0 0.0
    %1183 = vmatmul.mubr.f32.gmra.mrb[0].mxu0 %v935
    %v1184 = vpop.f32.mrb[0].mxu0
    %v1185 = vadd.f32 0.0, %v1184
    %v1186 = vpop.f32.mrb[0].mxu0
    %1187 = vmatprep.mubr.f32.mxu0 0.0
    %1188 = vmatmul.mubr.f32.gmra.mrb[0].mxu0 %v938
    %v1189 = vpop.f32.mrb[0].mxu0
    %v1190 = vadd.f32 0.0, %v1189
    %v1191 = vpop.f32.mrb[0].mxu0
    %1192 = vmatprep.mubr.f32.mxu0 0.0
    %1193 = vmatmul.mubr.f32.gmra.mrb[0].mxu0 %v941
    %v1194 = vpop.f32.mrb[0].mxu0
    %v1195 = vadd.f32 0.0, %v1194
    %v1196 = vpop.f32.mrb[0].mxu0
    %1197 = vdwg.mxu0
    %v1199 = vsel %vm110, %v1095, 0
    %v1202 = vsel %vm110, %v1100, 0
    %v1205 = vsel %vm110, %v1105, 0
    %v1208 = vsel %vm110, %v1110, 0
    %1210 = vmatprep.subr.mxu0 0.0
    %1211 = vmatpush1.msra.mxu0 %v78
    %1212 = vmatprep.subr.mxu0 0.0
    %1213 = vmatpush1.msra.mxu0 %v79
    %1214 = vmatprep.subr.mxu0 0.0
    %1215 = vmatpush1.msra.mxu0 %v80
    %1216 = vmatprep.subr.mxu0 0.0
    %1217 = vmatpush1.msra.mxu0 %v81
    %1218 = vmatprep.subr.mxu0 0.0
    %1219 = vmatpush1.msra.mxu0 0.0
    %1220 = vmatprep.subr.mxu0 0.0
    %1221 = vmatpush1.msra.mxu0 0.0
    %1222 = vmatprep.subr.mxu0 0.0
    %1223 = vmatpush1.msra.mxu0 0.0
    %1224 = vmatprep.subr.mxu0 0.0
    %1225 = vmatpush1.msra.mxu0 0.0
    %1226 = vmatprep.subr.mxu0 0.0
    %1227 = vmatpush1.msra.mxu0 0.0
    %1228 = vmatprep.subr.mxu0 0.0
    %1229 = vmatpush1.msra.mxu0 0.0
    %1230 = vmatprep.subr.mxu0 0.0
    %1231 = vmatpush1.msra.mxu0 0.0
    %1232 = vmatprep.subr.mxu0 0.0
    %1233 = vmatpush1.msra.mxu0 0.0
    %1234 = vmatprep.subr.mxu0 0.0
    %1235 = vmatpush1.msra.mxu0 0.0
    %1236 = vmatprep.subr.mxu0 0.0
    %1237 = vmatpush1.msra.mxu0 0.0
    %1238 = vmatprep.subr.mxu0 0.0
    %1239 = vmatpush1.msra.mxu0 0.0
    %1240 = vmatprep.subr.mxu0 0.0
    %1241 = vmatpush1.msra.mxu0 0.0
    %1242 = vmatprep.subr.mxu0 0.0
    %1243 = vmatpush1.msra.mxu0 0.0
    %1244 = vmatprep.subr.mxu0 0.0
    %1245 = vmatpush1.msra.mxu0 0.0
    %1246 = vmatprep.subr.mxu0 0.0
    %1247 = vmatpush1.msra.mxu0 0.0
    %1248 = vmatprep.subr.mxu0 0.0
    %1249 = vmatpush1.msra.mxu0 0.0
    %1250 = vmatprep.subr.mxu0 0.0
    %1251 = vmatpush1.msra.mxu0 0.0
    %1252 = vmatprep.subr.mxu0 0.0
    %1253 = vmatpush1.msra.mxu0 0.0
    %1254 = vmatprep.subr.mxu0 0.0
    %1255 = vmatpush1.msra.mxu0 0.0
    %1256 = vmatprep.subr.mxu0 0.0
    %1257 = vmatpush1.msra.mxu0 0.0
    %1258 = vmatprep.subr.mxu0 0.0
    %1259 = vmatpush1.msra.mxu0 0.0
    %1260 = vmatprep.subr.mxu0 0.0
    %1261 = vmatpush1.msra.mxu0 0.0
    %1262 = vmatprep.subr.mxu0 0.0
    %1263 = vmatpush1.msra.mxu0 0.0
    %1264 = vmatprep.subr.mxu0 0.0
    %1265 = vmatpush1.msra.mxu0 0.0
    %1266 = vmatprep.subr.mxu0 0.0
    %1267 = vmatpush1.msra.mxu0 0.0
    %1268 = vmatprep.subr.mxu0 0.0
    %1269 = vmatpush1.msra.mxu0 0.0
    %1270 = vmatprep.subr.mxu0 0.0
    %1271 = vmatpush1.msra.mxu0 0.0
    %1272 = vmatprep.subr.mxu0 0.0
    %1273 = vmatpush1.msra.mxu0 0.0
    %1274 = vmatprep.mubr.f32.mxu0 0.0
    %1275 = vmatmul.mubr.f32.gmra.mrb[0].mxu0 %v1199
    %v1276 = vpop.f32.mrb[0].mxu0
    %v1277 = vadd.f32 %v1180, %v1276
    %v1278 = vpop.f32.mrb[0].mxu0
    %1279 = vmatprep.mubr.f32.mxu0 0.0
    %1280 = vmatmul.mubr.f32.gmra.mrb[0].mxu0 %v1202
    %v1281 = vpop.f32.mrb[0].mxu0
    %v1282 = vadd.f32 %v1185, %v1281
    %v1283 = vpop.f32.mrb[0].mxu0
    %1284 = vmatprep.mubr.f32.mxu0 0.0
    %1285 = vmatmul.mubr.f32.gmra.mrb[0].mxu0 %v1205
    %v1286 = vpop.f32.mrb[0].mxu0
    %v1287 = vadd.f32 %v1190, %v1286
    %v1288 = vpop.f32.mrb[0].mxu0
    %1289 = vmatprep.mubr.f32.mxu0 0.0
    %1290 = vmatmul.mubr.f32.gmra.mrb[0].mxu0 %v1208
    %v1291 = vpop.f32.mrb[0].mxu0
    %v1292 = vadd.f32 %v1195, %v1291
    %v1293 = vpop.f32.mrb[0].mxu0
    %1294 = vdwg.mxu0
    %v1295 = vadd.f32 %v1277, %v490
    %v1296 = vadd.f32 %v1282, %v490
    %v1297 = vadd.f32 %v1287, %v490
    %v1298 = vadd.f32 %v1292, %v490
    %v1299 = vxor.u32 %v1295, 2147483648
    %v1300 = vxor.u32 %v1296, 2147483648
    %v1301 = vxor.u32 %v1297, 2147483648
    %v1302 = vxor.u32 %v1298, 2147483648
    %v1303 = vmul.f32 %v1299, 1.442695
    %v1304 = vpow.pop %v1303
    %v1305 = vmul.f32 %v1300, 1.442695
    %v1306 = vpow.pop %v1305
    %v1307 = vmul.f32 %v1301, 1.442695
    %v1308 = vpow.pop %v1307
    %v1309 = vmul.f32 %v1302, 1.442695
    %v1310 = vpow.pop %v1309
    %v1311 = vadd.f32 %v1304, 1.0
    %v1312 = vadd.f32 %v1306, 1.0
    %v1313 = vadd.f32 %v1308, 1.0
    %v1314 = vadd.f32 %v1310, 1.0
    %v1315 = vrcp.pop %v1311
    %v1316 = vmul.f32 1.0, %v1315
    %v1317 = vrcp.pop %v1312
    %v1318 = vmul.f32 1.0, %v1317
    %v1319 = vrcp.pop %v1313
    %v1320 = vmul.f32 1.0, %v1319
    %v1321 = vrcp.pop %v1314
    %v1322 = vmul.f32 1.0, %v1321
    %1323 = vmatprep.subr.mxu0 0.0
    %1324 = vmatpush1.msra.mxu0 %v94
    %1325 = vmatprep.subr.mxu0 0.0
    %1326 = vmatpush1.msra.mxu0 %v95
    %1327 = vmatprep.subr.mxu0 0.0
    %1328 = vmatpush1.msra.mxu0 %v96
    %1329 = vmatprep.subr.mxu0 0.0
    %1330 = vmatpush1.msra.mxu0 %v97
    %1331 = vmatprep.subr.mxu0 0.0
    %1332 = vmatpush1.msra.mxu0 0.0
    %1333 = vmatprep.subr.mxu0 0.0
    %1334 = vmatpush1.msra.mxu0 0.0
    %1335 = vmatprep.subr.mxu0 0.0
    %1336 = vmatpush1.msra.mxu0 0.0
    %1337 = vmatprep.subr.mxu0 0.0
    %1338 = vmatpush1.msra.mxu0 0.0
    %1339 = vmatprep.subr.mxu0 0.0
    %1340 = vmatpush1.msra.mxu0 0.0
    %1341 = vmatprep.subr.mxu0 0.0
    %1342 = vmatpush1.msra.mxu0 0.0
    %1343 = vmatprep.subr.mxu0 0.0
    %1344 = vmatpush1.msra.mxu0 0.0
    %1345 = vmatprep.subr.mxu0 0.0
    %1346 = vmatpush1.msra.mxu0 0.0
    %1347 = vmatprep.subr.mxu0 0.0
    %1348 = vmatpush1.msra.mxu0 0.0
    %1349 = vmatprep.subr.mxu0 0.0
    %1350 = vmatpush1.msra.mxu0 0.0
    %1351 = vmatprep.subr.mxu0 0.0
    %1352 = vmatpush1.msra.mxu0 0.0
    %1353 = vmatprep.subr.mxu0 0.0
    %1354 = vmatpush1.msra.mxu0 0.0
    %1355 = vmatprep.subr.mxu0 0.0
    %1356 = vmatpush1.msra.mxu0 0.0
    %1357 = vmatprep.subr.mxu0 0.0
    %1358 = vmatpush1.msra.mxu0 0.0
    %1359 = vmatprep.subr.mxu0 0.0
    %1360 = vmatpush1.msra.mxu0 0.0
    %1361 = vmatprep.subr.mxu0 0.0
    %1362 = vmatpush1.msra.mxu0 0.0
    %1363 = vmatprep.subr.mxu0 0.0
    %1364 = vmatpush1.msra.mxu0 0.0
    %1365 = vmatprep.subr.mxu0 0.0
    %1366 = vmatpush1.msra.mxu0 0.0
    %1367 = vmatprep.subr.mxu0 0.0
    %1368 = vmatpush1.msra.mxu0 0.0
    %1369 = vmatprep.subr.mxu0 0.0
    %1370 = vmatpush1.msra.mxu0 0.0
    %1371 = vmatprep.subr.mxu0 0.0
    %1372 = vmatpush1.msra.mxu0 0.0
    %1373 = vmatprep.subr.mxu0 0.0
    %1374 = vmatpush1.msra.mxu0 0.0
    %1375 = vmatprep.subr.mxu0 0.0
    %1376 = vmatpush1.msra.mxu0 0.0
    %1377 = vmatprep.subr.mxu0 0.0
    %1378 = vmatpush1.msra.mxu0 0.0
    %1379 = vmatprep.subr.mxu0 0.0
    %1380 = vmatpush1.msra.mxu0 0.0
    %1381 = vmatprep.subr.mxu0 0.0
    %1382 = vmatpush1.msra.mxu0 0.0
    %1383 = vmatprep.subr.mxu0 0.0
    %1384 = vmatpush1.msra.mxu0 0.0
    %1385 = vmatprep.subr.mxu0 0.0
    %1386 = vmatpush1.msra.mxu0 0.0
    %1387 = vmatprep.mubr.f32.mxu0 0.0
    %1388 = vmatmul.mubr.f32.gmra.mrb[0].mxu0 %v932
    %v1389 = vpop.f32.mrb[0].mxu0
    %v1390 = vadd.f32 0.0, %v1389
    %v1391 = vpop.f32.mrb[0].mxu0
    %1392 = vmatprep.mubr.f32.mxu0 0.0
    %1393 = vmatmul.mubr.f32.gmra.mrb[0].mxu0 %v935
    %v1394 = vpop.f32.mrb[0].mxu0
    %v1395 = vadd.f32 0.0, %v1394
    %v1396 = vpop.f32.mrb[0].mxu0
    %1397 = vmatprep.mubr.f32.mxu0 0.0
    %1398 = vmatmul.mubr.f32.gmra.mrb[0].mxu0 %v938
    %v1399 = vpop.f32.mrb[0].mxu0
    %v1400 = vadd.f32 0.0, %v1399
    %v1401 = vpop.f32.mrb[0].mxu0
    %1402 = vmatprep.mubr.f32.mxu0 0.0
    %1403 = vmatmul.mubr.f32.gmra.mrb[0].mxu0 %v941
    %v1404 = vpop.f32.mrb[0].mxu0
    %v1405 = vadd.f32 0.0, %v1404
    %v1406 = vpop.f32.mrb[0].mxu0
    %1407 = vdwg.mxu0
    %1408 = vmatprep.subr.mxu0 0.0
    %1409 = vmatpush1.msra.mxu0 %v82
    %1410 = vmatprep.subr.mxu0 0.0
    %1411 = vmatpush1.msra.mxu0 %v83
    %1412 = vmatprep.subr.mxu0 0.0
    %1413 = vmatpush1.msra.mxu0 %v84
    %1414 = vmatprep.subr.mxu0 0.0
    %1415 = vmatpush1.msra.mxu0 %v85
    %1416 = vmatprep.subr.mxu0 0.0
    %1417 = vmatpush1.msra.mxu0 0.0
    %1418 = vmatprep.subr.mxu0 0.0
    %1419 = vmatpush1.msra.mxu0 0.0
    %1420 = vmatprep.subr.mxu0 0.0
    %1421 = vmatpush1.msra.mxu0 0.0
    %1422 = vmatprep.subr.mxu0 0.0
    %1423 = vmatpush1.msra.mxu0 0.0
    %1424 = vmatprep.subr.mxu0 0.0
    %1425 = vmatpush1.msra.mxu0 0.0
    %1426 = vmatprep.subr.mxu0 0.0
    %1427 = vmatpush1.msra.mxu0 0.0
    %1428 = vmatprep.subr.mxu0 0.0
    %1429 = vmatpush1.msra.mxu0 0.0
    %1430 = vmatprep.subr.mxu0 0.0
    %1431 = vmatpush1.msra.mxu0 0.0
    %1432 = vmatprep.subr.mxu0 0.0
    %1433 = vmatpush1.msra.mxu0 0.0
    %1434 = vmatprep.subr.mxu0 0.0
    %1435 = vmatpush1.msra.mxu0 0.0
    %1436 = vmatprep.subr.mxu0 0.0
    %1437 = vmatpush1.msra.mxu0 0.0
    %1438 = vmatprep.subr.mxu0 0.0
    %1439 = vmatpush1.msra.mxu0 0.0
    %1440 = vmatprep.subr.mxu0 0.0
    %1441 = vmatpush1.msra.mxu0 0.0
    %1442 = vmatprep.subr.mxu0 0.0
    %1443 = vmatpush1.msra.mxu0 0.0
    %1444 = vmatprep.subr.mxu0 0.0
    %1445 = vmatpush1.msra.mxu0 0.0
    %1446 = vmatprep.subr.mxu0 0.0
    %1447 = vmatpush1.msra.mxu0 0.0
    %1448 = vmatprep.subr.mxu0 0.0
    %1449 = vmatpush1.msra.mxu0 0.0
    %1450 = vmatprep.subr.mxu0 0.0
    %1451 = vmatpush1.msra.mxu0 0.0
    %1452 = vmatprep.subr.mxu0 0.0
    %1453 = vmatpush1.msra.mxu0 0.0
    %1454 = vmatprep.subr.mxu0 0.0
    %1455 = vmatpush1.msra.mxu0 0.0
    %1456 = vmatprep.subr.mxu0 0.0
    %1457 = vmatpush1.msra.mxu0 0.0
    %1458 = vmatprep.subr.mxu0 0.0
    %1459 = vmatpush1.msra.mxu0 0.0
    %1460 = vmatprep.subr.mxu0 0.0
    %1461 = vmatpush1.msra.mxu0 0.0
    %1462 = vmatprep.subr.mxu0 0.0
    %1463 = vmatpush1.msra.mxu0 0.0
    %1464 = vmatprep.subr.mxu0 0.0
    %1465 = vmatpush1.msra.mxu0 0.0
    %1466 = vmatprep.subr.mxu0 0.0
    %1467 = vmatpush1.msra.mxu0 0.0
    %1468 = vmatprep.subr.mxu0 0.0
    %1469 = vmatpush1.msra.mxu0 0.0
    %1470 = vmatprep.subr.mxu0 0.0
    %1471 = vmatpush1.msra.mxu0 0.0
    %1472 = vmatprep.mubr.f32.mxu0 0.0
    %1473 = vmatmul.mubr.f32.gmra.mrb[0].mxu0 %v1199
    %v1474 = vpop.f32.mrb[0].mxu0
    %v1475 = vadd.f32 %v1390, %v1474
    %v1476 = vpop.f32.mrb[0].mxu0
    %1477 = vmatprep.mubr.f32.mxu0 0.0
    %1478 = vmatmul.mubr.f32.gmra.mrb[0].mxu0 %v1202
    %v1479 = vpop.f32.mrb[0].mxu0
    %v1480 = vadd.f32 %v1395, %v1479
    %v1481 = vpop.f32.mrb[0].mxu0
    %1482 = vmatprep.mubr.f32.mxu0 0.0
    %1483 = vmatmul.mubr.f32.gmra.mrb[0].mxu0 %v1205
    %v1484 = vpop.f32.mrb[0].mxu0
    %v1485 = vadd.f32 %v1400, %v1484
    %v1486 = vpop.f32.mrb[0].mxu0
    %1487 = vmatprep.mubr.f32.mxu0 0.0
    %1488 = vmatmul.mubr.f32.gmra.mrb[0].mxu0 %v1208
    %v1489 = vpop.f32.mrb[0].mxu0
    %v1490 = vadd.f32 %v1405, %v1489
    %v1491 = vpop.f32.mrb[0].mxu0
    %1492 = vdwg.mxu0
    %v1493 = vadd.f32 %v1475, %v692
    %v1494 = vadd.f32 %v1480, %v692
    %v1495 = vadd.f32 %v1485, %v692
    %v1496 = vadd.f32 %v1490, %v692
    %v1497 = vxor.u32 %v1493, 2147483648
    %v1498 = vxor.u32 %v1494, 2147483648
    %v1499 = vxor.u32 %v1495, 2147483648
    %v1500 = vxor.u32 %v1496, 2147483648
    %v1501 = vmul.f32 %v1497, 1.442695
    %v1502 = vpow.pop %v1501
    %v1503 = vmul.f32 %v1498, 1.442695
    %v1504 = vpow.pop %v1503
    %v1505 = vmul.f32 %v1499, 1.442695
    %v1506 = vpow.pop %v1505
    %v1507 = vmul.f32 %v1500, 1.442695
    %v1508 = vpow.pop %v1507
    %v1509 = vadd.f32 %v1502, 1.0
    %v1510 = vadd.f32 %v1504, 1.0
    %v1511 = vadd.f32 %v1506, 1.0
    %v1512 = vadd.f32 %v1508, 1.0
    %v1513 = vrcp.pop %v1509
    %v1514 = vmul.f32 1.0, %v1513
    %v1515 = vrcp.pop %v1510
    %v1516 = vmul.f32 1.0, %v1515
    %v1517 = vrcp.pop %v1511
    %v1518 = vmul.f32 1.0, %v1517
    %v1519 = vrcp.pop %v1512
    %v1520 = vmul.f32 1.0, %v1519
    %1521 = vmatprep.subr.mxu0 0.0
    %1522 = vmatpush1.msra.mxu0 %v86
    %1523 = vmatprep.subr.mxu0 0.0
    %1524 = vmatpush1.msra.mxu0 %v87
    %1525 = vmatprep.subr.mxu0 0.0
    %1526 = vmatpush1.msra.mxu0 %v88
    %1527 = vmatprep.subr.mxu0 0.0
    %1528 = vmatpush1.msra.mxu0 %v89
    %1529 = vmatprep.subr.mxu0 0.0
    %1530 = vmatpush1.msra.mxu0 0.0
    %1531 = vmatprep.subr.mxu0 0.0
    %1532 = vmatpush1.msra.mxu0 0.0
    %1533 = vmatprep.subr.mxu0 0.0
    %1534 = vmatpush1.msra.mxu0 0.0
    %1535 = vmatprep.subr.mxu0 0.0
    %1536 = vmatpush1.msra.mxu0 0.0
    %1537 = vmatprep.subr.mxu0 0.0
    %1538 = vmatpush1.msra.mxu0 0.0
    %1539 = vmatprep.subr.mxu0 0.0
    %1540 = vmatpush1.msra.mxu0 0.0
    %1541 = vmatprep.subr.mxu0 0.0
    %1542 = vmatpush1.msra.mxu0 0.0
    %1543 = vmatprep.subr.mxu0 0.0
    %1544 = vmatpush1.msra.mxu0 0.0
    %1545 = vmatprep.subr.mxu0 0.0
    %1546 = vmatpush1.msra.mxu0 0.0
    %1547 = vmatprep.subr.mxu0 0.0
    %1548 = vmatpush1.msra.mxu0 0.0
    %1549 = vmatprep.subr.mxu0 0.0
    %1550 = vmatpush1.msra.mxu0 0.0
    %1551 = vmatprep.subr.mxu0 0.0
    %1552 = vmatpush1.msra.mxu0 0.0
    %1553 = vmatprep.subr.mxu0 0.0
    %1554 = vmatpush1.msra.mxu0 0.0
    %1555 = vmatprep.subr.mxu0 0.0
    %1556 = vmatpush1.msra.mxu0 0.0
    %1557 = vmatprep.subr.mxu0 0.0
    %1558 = vmatpush1.msra.mxu0 0.0
    %1559 = vmatprep.subr.mxu0 0.0
    %1560 = vmatpush1.msra.mxu0 0.0
    %1561 = vmatprep.subr.mxu0 0.0
    %1562 = vmatpush1.msra.mxu0 0.0
    %1563 = vmatprep.subr.mxu0 0.0
    %1564 = vmatpush1.msra.mxu0 0.0
    %1565 = vmatprep.subr.mxu0 0.0
    %1566 = vmatpush1.msra.mxu0 0.0
    %1567 = vmatprep.subr.mxu0 0.0
    %1568 = vmatpush1.msra.mxu0 0.0
    %1569 = vmatprep.subr.mxu0 0.0
    %1570 = vmatpush1.msra.mxu0 0.0
    %1571 = vmatprep.subr.mxu0 0.0
    %1572 = vmatpush1.msra.mxu0 0.0
    %1573 = vmatprep.subr.mxu0 0.0
    %1574 = vmatpush1.msra.mxu0 0.0
    %1575 = vmatprep.subr.mxu0 0.0
    %1576 = vmatpush1.msra.mxu0 0.0
    %1577 = vmatprep.subr.mxu0 0.0
    %1578 = vmatpush1.msra.mxu0 0.0
    %1579 = vmatprep.subr.mxu0 0.0
    %1580 = vmatpush1.msra.mxu0 0.0
    %1581 = vmatprep.subr.mxu0 0.0
    %1582 = vmatpush1.msra.mxu0 0.0
    %1583 = vmatprep.subr.mxu0 0.0
    %1584 = vmatpush1.msra.mxu0 0.0
    %1585 = vmatprep.mubr.f32.mxu0 0.0
    %1586 = vmatmul.mubr.f32.gmra.mrb[0].mxu0 %v1199
    %v1587 = vpop.f32.mrb[0].mxu0
    %v1588 = vadd.f32 %v724, %v1587
    %v1589 = vpop.f32.mrb[0].mxu0
    %1590 = vmatprep.mubr.f32.mxu0 0.0
    %1591 = vmatmul.mubr.f32.gmra.mrb[0].mxu0 %v1202
    %v1592 = vpop.f32.mrb[0].mxu0
    %v1593 = vadd.f32 %v724, %v1592
    %v1594 = vpop.f32.mrb[0].mxu0
    %1595 = vmatprep.mubr.f32.mxu0 0.0
    %1596 = vmatmul.mubr.f32.gmra.mrb[0].mxu0 %v1205
    %v1597 = vpop.f32.mrb[0].mxu0
    %v1598 = vadd.f32 %v724, %v1597
    %v1599 = vpop.f32.mrb[0].mxu0
    %1600 = vmatprep.mubr.f32.mxu0 0.0
    %1601 = vmatmul.mubr.f32.gmra.mrb[0].mxu0 %v1208
    %v1602 = vpop.f32.mrb[0].mxu0
    %v1603 = vadd.f32 %v724, %v1602
    %v1604 = vpop.f32.mrb[0].mxu0
    %1605 = vdwg.mxu0
    %1606 = vmatprep.subr.mxu0 0.0
    %1607 = vmatpush1.msra.mxu0 %v98
    %1608 = vmatprep.subr.mxu0 0.0
    %1609 = vmatpush1.msra.mxu0 %v99
    %1610 = vmatprep.subr.mxu0 0.0
    %1611 = vmatpush1.msra.mxu0 %v100
    %1612 = vmatprep.subr.mxu0 0.0
    %1613 = vmatpush1.msra.mxu0 %v101
    %1614 = vmatprep.subr.mxu0 0.0
    %1615 = vmatpush1.msra.mxu0 0.0
    %1616 = vmatprep.subr.mxu0 0.0
    %1617 = vmatpush1.msra.mxu0 0.0
    %1618 = vmatprep.subr.mxu0 0.0
    %1619 = vmatpush1.msra.mxu0 0.0
    %1620 = vmatprep.subr.mxu0 0.0
    %1621 = vmatpush1.msra.mxu0 0.0
    %1622 = vmatprep.subr.mxu0 0.0
    %1623 = vmatpush1.msra.mxu0 0.0
    %1624 = vmatprep.subr.mxu0 0.0
    %1625 = vmatpush1.msra.mxu0 0.0
    %1626 = vmatprep.subr.mxu0 0.0
    %1627 = vmatpush1.msra.mxu0 0.0
    %1628 = vmatprep.subr.mxu0 0.0
    %1629 = vmatpush1.msra.mxu0 0.0
    %1630 = vmatprep.subr.mxu0 0.0
    %1631 = vmatpush1.msra.mxu0 0.0
    %1632 = vmatprep.subr.mxu0 0.0
    %1633 = vmatpush1.msra.mxu0 0.0
    %1634 = vmatprep.subr.mxu0 0.0
    %1635 = vmatpush1.msra.mxu0 0.0
    %1636 = vmatprep.subr.mxu0 0.0
    %1637 = vmatpush1.msra.mxu0 0.0
    %1638 = vmatprep.subr.mxu0 0.0
    %1639 = vmatpush1.msra.mxu0 0.0
    %1640 = vmatprep.subr.mxu0 0.0
    %1641 = vmatpush1.msra.mxu0 0.0
    %1642 = vmatprep.subr.mxu0 0.0
    %1643 = vmatpush1.msra.mxu0 0.0
    %1644 = vmatprep.subr.mxu0 0.0
    %1645 = vmatpush1.msra.mxu0 0.0
    %1646 = vmatprep.subr.mxu0 0.0
    %1647 = vmatpush1.msra.mxu0 0.0
    %1648 = vmatprep.subr.mxu0 0.0
    %1649 = vmatpush1.msra.mxu0 0.0
    %1650 = vmatprep.subr.mxu0 0.0
    %1651 = vmatpush1.msra.mxu0 0.0
    %1652 = vmatprep.subr.mxu0 0.0
    %1653 = vmatpush1.msra.mxu0 0.0
    %1654 = vmatprep.subr.mxu0 0.0
    %1655 = vmatpush1.msra.mxu0 0.0
    %1656 = vmatprep.subr.mxu0 0.0
    %1657 = vmatpush1.msra.mxu0 0.0
    %1658 = vmatprep.subr.mxu0 0.0
    %1659 = vmatpush1.msra.mxu0 0.0
    %1660 = vmatprep.subr.mxu0 0.0
    %1661 = vmatpush1.msra.mxu0 0.0
    %1662 = vmatprep.subr.mxu0 0.0
    %1663 = vmatpush1.msra.mxu0 0.0
    %1664 = vmatprep.subr.mxu0 0.0
    %1665 = vmatpush1.msra.mxu0 0.0
    %1666 = vmatprep.subr.mxu0 0.0
    %1667 = vmatpush1.msra.mxu0 0.0
    %1668 = vmatprep.subr.mxu0 0.0
    %1669 = vmatpush1.msra.mxu0 0.0
    %1670 = vmatprep.mubr.f32.mxu0 0.0
    %1671 = vmatmul.mubr.f32.gmra.mrb[0].mxu0 %v932
    %v1672 = vpop.f32.mrb[0].mxu0
    %v1673 = vadd.f32 %v813, %v1672
    %v1674 = vpop.f32.mrb[0].mxu0
    %1675 = vmatprep.mubr.f32.mxu0 0.0
    %1676 = vmatmul.mubr.f32.gmra.mrb[0].mxu0 %v935
    %v1677 = vpop.f32.mrb[0].mxu0
    %v1678 = vadd.f32 %v813, %v1677
    %v1679 = vpop.f32.mrb[0].mxu0
    %1680 = vmatprep.mubr.f32.mxu0 0.0
    %1681 = vmatmul.mubr.f32.gmra.mrb[0].mxu0 %v938
    %v1682 = vpop.f32.mrb[0].mxu0
    %v1683 = vadd.f32 %v813, %v1682
    %v1684 = vpop.f32.mrb[0].mxu0
    %1685 = vmatprep.mubr.f32.mxu0 0.0
    %1686 = vmatmul.mubr.f32.gmra.mrb[0].mxu0 %v941
    %v1687 = vpop.f32.mrb[0].mxu0
    %v1688 = vadd.f32 %v813, %v1687
    %v1689 = vpop.f32.mrb[0].mxu0
    %1690 = vdwg.mxu0
    %v1691 = vmul.f32 %v1316, %v1673
    %v1692 = vmul.f32 %v1318, %v1678
    %v1693 = vmul.f32 %v1320, %v1683
    %v1694 = vmul.f32 %v1322, %v1688
    %v1695 = vadd.f32 %v1588, %v1691
    %v1696 = vadd.f32 %v1593, %v1692
    %v1697 = vadd.f32 %v1598, %v1693
    %v1698 = vadd.f32 %v1603, %v1694
    %v1699 = vtanh.pop %v1695
    %v1700 = vtanh.pop %v1696
    %v1701 = vtanh.pop %v1697
    %v1702 = vtanh.pop %v1698
    %v1703 = vsub.f32 1.0, %v1514
    %v1704 = vsub.f32 1.0, %v1516
    %v1705 = vsub.f32 1.0, %v1518
    %v1706 = vsub.f32 1.0, %v1520
    %v1707 = vmul.f32 %v1703, %v1699
    %v1708 = vmul.f32 %v1704, %v1700
    %v1709 = vmul.f32 %v1705, %v1701
    %v1710 = vmul.f32 %v1706, %v1702
    %v1711 = vmul.f32 %v1514, %v923
    %v1712 = vmul.f32 %v1516, %v924
    %v1713 = vmul.f32 %v1518, %v925
    %v1714 = vmul.f32 %v1520, %v926
    %v1715 = vadd.f32 %v1707, %v1711
    %v1716 = vadd.f32 %v1708, %v1712
    %v1717 = vadd.f32 %v1709, %v1713
    %v1718 = vadd.f32 %v1710, %v1714
    %v1719 = vlaneseq
    %v1720 = vshrl.u32 %v1719, 7
    %v1721 = vadd.s32 %v1720, 8
    %v1722 = vadd.s32 %v1720, 16
    %v1723 = vadd.s32 %v1720, 24
    %s1724 = sld [smem:[#allocation2]]
    %v1725 = vstv %s1724
    %vm1726 = vcmp.ge.s32.totalorder %v1720, 16
    %vm1727 = vcmp.ge.s32.totalorder %v1721, 16
    %vm1728 = vcmp.ge.s32.totalorder %v1722, 16
    %vm1729 = vcmp.ge.s32.totalorder %v1723, 16
    %v1730 = vsub.s32 %v1720, 16
    %v1731 = vsub.s32 %v1721, 16
    %v1732 = vsub.s32 %v1723, 16
    %v1733 = vsel %vm1726, %v1730, %v1720
    %v1734 = vsel %vm1727, %v1731, %v1721
    %v1735 = vsel %vm1728, %v1720, %v1722
    %v1736 = vsel %vm1729, %v1732, %v1723
    %s1737 = sld [smem:[#allocation2 + $0x1]]
    %v1738 = vstv %s1737
    %v1739 = vsel %vm1726, %v1738, %v1725
    %v1740 = vsel %vm1727, %v1738, %v1725
    %v1741 = vsel %vm1728, %v1738, %v1725
    %v1742 = vsel %vm1729, %v1738, %v1725
    %vm1743 = vcmp.lt.s32.totalorder %v1733, %v1739
    %vm1744 = vcmp.lt.s32.totalorder %v1734, %v1740
    %vm1745 = vcmp.lt.s32.totalorder %v1735, %v1741
    %vm1746 = vcmp.lt.s32.totalorder %v1736, %v1742
    %v1747 = vsel %vm1743, 1, 0
    %v1748 = vsel %vm1744, 1, 0
    %v1749 = vsel %vm1745, 1, 0
    %v1750 = vsel %vm1746, 1, 0
    %v1751 = vcvt.s32.f32 %v1747
    %v1752 = vcvt.s32.f32 %v1748
    %v1753 = vcvt.s32.f32 %v1749
    %v1754 = vcvt.s32.f32 %v1750
    %v1755 = vmul.f32 %v1715, %v1751
    %v1756 = vmul.f32 %v1716, %v1752
    %v1757 = vmul.f32 %v1717, %v1753
    %v1758 = vmul.f32 %v1718, %v1754
    %v1759 = vld [vmem:[#allocation9 + $0x120] sm:$0xff]
    %v1760 = vld [vmem:[#allocation9 + $0x128] sm:$0xff]
    %v1761 = vld [vmem:[#allocation9 + $0x130] sm:$0xff]
    %v1762 = vld [vmem:[#allocation9 + $0x138] sm:$0xff]
    %v1764 = vsel %vm110, %v1755, 0
    %v1767 = vsel %vm110, %v1756, 0
    %v1770 = vsel %vm110, %v1757, 0
    %v1773 = vsel %vm110, %v1758, 0
    %1775 = vmatprep.subr.mxu0 0.0
    %1776 = vmatpush1.msra.mxu0 %v1759
    %1777 = vmatprep.subr.mxu0 0.0
    %1778 = vmatpush1.msra.mxu0 %v1760
    %1779 = vmatprep.subr.mxu0 0.0
    %1780 = vmatpush1.msra.mxu0 %v1761
    %1781 = vmatprep.subr.mxu0 0.0
    %1782 = vmatpush1.msra.mxu0 %v1762
    %1783 = vmatprep.subr.mxu0 0.0
    %1784 = vmatpush1.msra.mxu0 0.0
    %1785 = vmatprep.subr.mxu0 0.0
    %1786 = vmatpush1.msra.mxu0 0.0
    %1787 = vmatprep.subr.mxu0 0.0
    %1788 = vmatpush1.msra.mxu0 0.0
    %1789 = vmatprep.subr.mxu0 0.0
    %1790 = vmatpush1.msra.mxu0 0.0
    %1791 = vmatprep.subr.mxu0 0.0
    %1792 = vmatpush1.msra.mxu0 0.0
    %1793 = vmatprep.subr.mxu0 0.0
    %1794 = vmatpush1.msra.mxu0 0.0
    %1795 = vmatprep.subr.mxu0 0.0
    %1796 = vmatpush1.msra.mxu0 0.0
    %1797 = vmatprep.subr.mxu0 0.0
    %1798 = vmatpush1.msra.mxu0 0.0
    %1799 = vmatprep.subr.mxu0 0.0
    %1800 = vmatpush1.msra.mxu0 0.0
    %1801 = vmatprep.subr.mxu0 0.0
    %1802 = vmatpush1.msra.mxu0 0.0
    %1803 = vmatprep.subr.mxu0 0.0
    %1804 = vmatpush1.msra.mxu0 0.0
    %1805 = vmatprep.subr.mxu0 0.0
    %1806 = vmatpush1.msra.mxu0 0.0
    %1807 = vmatprep.subr.mxu0 0.0
    %1808 = vmatpush1.msra.mxu0 0.0
    %1809 = vmatprep.subr.mxu0 0.0
    %1810 = vmatpush1.msra.mxu0 0.0
    %1811 = vmatprep.subr.mxu0 0.0
    %1812 = vmatpush1.msra.mxu0 0.0
    %1813 = vmatprep.subr.mxu0 0.0
    %1814 = vmatpush1.msra.mxu0 0.0
    %1815 = vmatprep.subr.mxu0 0.0
    %1816 = vmatpush1.msra.mxu0 0.0
    %1817 = vmatprep.subr.mxu0 0.0
    %1818 = vmatpush1.msra.mxu0 0.0
    %1819 = vmatprep.subr.mxu0 0.0
    %1820 = vmatpush1.msra.mxu0 0.0
    %1821 = vmatprep.subr.mxu0 0.0
    %1822 = vmatpush1.msra.mxu0 0.0
    %1823 = vmatprep.subr.mxu0 0.0
    %1824 = vmatpush1.msra.mxu0 0.0
    %1825 = vmatprep.subr.mxu0 0.0
    %1826 = vmatpush1.msra.mxu0 0.0
    %1827 = vmatprep.subr.mxu0 0.0
    %1828 = vmatpush1.msra.mxu0 0.0
    %1829 = vmatprep.subr.mxu0 0.0
    %1830 = vmatpush1.msra.mxu0 0.0
    %1831 = vmatprep.subr.mxu0 0.0
    %1832 = vmatpush1.msra.mxu0 0.0
    %1833 = vmatprep.subr.mxu0 0.0
    %1834 = vmatpush1.msra.mxu0 0.0
    %1835 = vmatprep.subr.mxu0 0.0
    %1836 = vmatpush1.msra.mxu0 0.0
    %1837 = vmatprep.subr.mxu0 0.0
    %1838 = vmatpush1.msra.mxu0 0.0
    %1839 = vmatprep.mubr.f32.mxu0 0.0
    %1840 = vmatmul.mubr.f32.gmra.mrb[0].mxu0 %v1764
    %v1841 = vpop.f32.mrb[0].mxu0
    %v1842 = vadd.f32 0.0, %v1841
    %v1843 = vpop.f32.mrb[0].mxu0
    %1844 = vmatprep.mubr.f32.mxu0 0.0
    %1845 = vmatmul.mubr.f32.gmra.mrb[0].mxu0 %v1767
    %v1846 = vpop.f32.mrb[0].mxu0
    %v1847 = vadd.f32 0.0, %v1846
    %v1848 = vpop.f32.mrb[0].mxu0
    %1849 = vmatprep.mubr.f32.mxu0 0.0
    %1850 = vmatmul.mubr.f32.gmra.mrb[0].mxu0 %v1770
    %v1851 = vpop.f32.mrb[0].mxu0
    %v1852 = vadd.f32 0.0, %v1851
    %v1853 = vpop.f32.mrb[0].mxu0
    %1854 = vmatprep.mubr.f32.mxu0 0.0
    %1855 = vmatmul.mubr.f32.gmra.mrb[0].mxu0 %v1773
    %v1856 = vpop.f32.mrb[0].mxu0
    %v1857 = vadd.f32 0.0, %v1856
    %v1858 = vpop.f32.mrb[0].mxu0
    %1859 = vdwg.mxu0
    %v1860 = vld [vmem:[#allocation9 + $0x140] sm:$0xff]
    %v1861 = vld [vmem:[#allocation9 + $0x148] sm:$0xff]
    %v1862 = vld [vmem:[#allocation9 + $0x150] sm:$0xff]
    %v1863 = vld [vmem:[#allocation9 + $0x158] sm:$0xff]
    %1864 = vmatprep.subr.mxu0 0.0
    %1865 = vmatpush1.msra.mxu0 %v1860
    %1866 = vmatprep.subr.mxu0 0.0
    %1867 = vmatpush1.msra.mxu0 %v1861
    %1868 = vmatprep.subr.mxu0 0.0
    %1869 = vmatpush1.msra.mxu0 %v1862
    %1870 = vmatprep.subr.mxu0 0.0
    %1871 = vmatpush1.msra.mxu0 %v1863
    %1872 = vmatprep.subr.mxu0 0.0
    %1873 = vmatpush1.msra.mxu0 0.0
    %1874 = vmatprep.subr.mxu0 0.0
    %1875 = vmatpush1.msra.mxu0 0.0
    %1876 = vmatprep.subr.mxu0 0.0
    %1877 = vmatpush1.msra.mxu0 0.0
    %1878 = vmatprep.subr.mxu0 0.0
    %1879 = vmatpush1.msra.mxu0 0.0
    %1880 = vmatprep.subr.mxu0 0.0
    %1881 = vmatpush1.msra.mxu0 0.0
    %1882 = vmatprep.subr.mxu0 0.0
    %1883 = vmatpush1.msra.mxu0 0.0
    %1884 = vmatprep.subr.mxu0 0.0
    %1885 = vmatpush1.msra.mxu0 0.0
    %1886 = vmatprep.subr.mxu0 0.0
    %1887 = vmatpush1.msra.mxu0 0.0
    %1888 = vmatprep.subr.mxu0 0.0
    %1889 = vmatpush1.msra.mxu0 0.0
    %1890 = vmatprep.subr.mxu0 0.0
    %1891 = vmatpush1.msra.mxu0 0.0
    %1892 = vmatprep.subr.mxu0 0.0
    %1893 = vmatpush1.msra.mxu0 0.0
    %1894 = vmatprep.subr.mxu0 0.0
    %1895 = vmatpush1.msra.mxu0 0.0
    %1896 = vmatprep.subr.mxu0 0.0
    %1897 = vmatpush1.msra.mxu0 0.0
    %1898 = vmatprep.subr.mxu0 0.0
    %1899 = vmatpush1.msra.mxu0 0.0
    %1900 = vmatprep.subr.mxu0 0.0
    %1901 = vmatpush1.msra.mxu0 0.0
    %1902 = vmatprep.subr.mxu0 0.0
    %1903 = vmatpush1.msra.mxu0 0.0
    %1904 = vmatprep.subr.mxu0 0.0
    %1905 = vmatpush1.msra.mxu0 0.0
    %1906 = vmatprep.subr.mxu0 0.0
    %1907 = vmatpush1.msra.mxu0 0.0
    %1908 = vmatprep.subr.mxu0 0.0
    %1909 = vmatpush1.msra.mxu0 0.0
    %1910 = vmatprep.subr.mxu0 0.0
    %1911 = vmatpush1.msra.mxu0 0.0
    %1912 = vmatprep.subr.mxu0 0.0
    %1913 = vmatpush1.msra.mxu0 0.0
    %1914 = vmatprep.subr.mxu0 0.0
    %1915 = vmatpush1.msra.mxu0 0.0
    %1916 = vmatprep.subr.mxu0 0.0
    %1917 = vmatpush1.msra.mxu0 0.0
    %1918 = vmatprep.subr.mxu0 0.0
    %1919 = vmatpush1.msra.mxu0 0.0
    %1920 = vmatprep.subr.mxu0 0.0
    %1921 = vmatpush1.msra.mxu0 0.0
    %1922 = vmatprep.subr.mxu0 0.0
    %1923 = vmatpush1.msra.mxu0 0.0
    %1924 = vmatprep.subr.mxu0 0.0
    %1925 = vmatpush1.msra.mxu0 0.0
    %1926 = vmatprep.subr.mxu0 0.0
    %1927 = vmatpush1.msra.mxu0 0.0
    %1928 = vmatprep.mubr.f32.mxu0 0.0
    %1929 = vmatmul.mubr.f32.gmra.mrb[0].mxu0 %v1764
    %v1930 = vpop.f32.mrb[0].mxu0
    %v1931 = vadd.f32 0.0, %v1930
    %v1932 = vpop.f32.mrb[0].mxu0
    %1933 = vmatprep.mubr.f32.mxu0 0.0
    %1934 = vmatmul.mubr.f32.gmra.mrb[0].mxu0 %v1767
    %v1935 = vpop.f32.mrb[0].mxu0
    %v1936 = vadd.f32 0.0, %v1935
    %v1937 = vpop.f32.mrb[0].mxu0
    %1938 = vmatprep.mubr.f32.mxu0 0.0
    %1939 = vmatmul.mubr.f32.gmra.mrb[0].mxu0 %v1770
    %v1940 = vpop.f32.mrb[0].mxu0
    %v1941 = vadd.f32 0.0, %v1940
    %v1942 = vpop.f32.mrb[0].mxu0
    %1943 = vmatprep.mubr.f32.mxu0 0.0
    %1944 = vmatmul.mubr.f32.gmra.mrb[0].mxu0 %v1773
    %v1945 = vpop.f32.mrb[0].mxu0
    %v1946 = vadd.f32 0.0, %v1945
    %v1947 = vpop.f32.mrb[0].mxu0
    %1948 = vdwg.mxu0
    %v1949 = vld [vmem:[#allocation9 + $0x160] sm:$0xff]
    %v1950 = vld [vmem:[#allocation9 + $0x168] sm:$0xff]
    %v1951 = vld [vmem:[#allocation9 + $0x170] sm:$0xff]
    %v1952 = vld [vmem:[#allocation9 + $0x178] sm:$0xff]
    %1953 = vmatprep.subr.mxu0 0.0
    %1954 = vmatpush1.msra.mxu0 %v1949
    %1955 = vmatprep.subr.mxu0 0.0
    %1956 = vmatpush1.msra.mxu0 %v1950
    %1957 = vmatprep.subr.mxu0 0.0
    %1958 = vmatpush1.msra.mxu0 %v1951
    %1959 = vmatprep.subr.mxu0 0.0
    %1960 = vmatpush1.msra.mxu0 %v1952
    %1961 = vmatprep.subr.mxu0 0.0
    %1962 = vmatpush1.msra.mxu0 0.0
    %1963 = vmatprep.subr.mxu0 0.0
    %1964 = vmatpush1.msra.mxu0 0.0
    %1965 = vmatprep.subr.mxu0 0.0
    %1966 = vmatpush1.msra.mxu0 0.0
    %1967 = vmatprep.subr.mxu0 0.0
    %1968 = vmatpush1.msra.mxu0 0.0
    %1969 = vmatprep.subr.mxu0 0.0
    %1970 = vmatpush1.msra.mxu0 0.0
    %1971 = vmatprep.subr.mxu0 0.0
    %1972 = vmatpush1.msra.mxu0 0.0
    %1973 = vmatprep.subr.mxu0 0.0
    %1974 = vmatpush1.msra.mxu0 0.0
    %1975 = vmatprep.subr.mxu0 0.0
    %1976 = vmatpush1.msra.mxu0 0.0
    %1977 = vmatprep.subr.mxu0 0.0
    %1978 = vmatpush1.msra.mxu0 0.0
    %1979 = vmatprep.subr.mxu0 0.0
    %1980 = vmatpush1.msra.mxu0 0.0
    %1981 = vmatprep.subr.mxu0 0.0
    %1982 = vmatpush1.msra.mxu0 0.0
    %1983 = vmatprep.subr.mxu0 0.0
    %1984 = vmatpush1.msra.mxu0 0.0
    %1985 = vmatprep.subr.mxu0 0.0
    %1986 = vmatpush1.msra.mxu0 0.0
    %1987 = vmatprep.subr.mxu0 0.0
    %1988 = vmatpush1.msra.mxu0 0.0
    %1989 = vmatprep.subr.mxu0 0.0
    %1990 = vmatpush1.msra.mxu0 0.0
    %1991 = vmatprep.subr.mxu0 0.0
    %1992 = vmatpush1.msra.mxu0 0.0
    %1993 = vmatprep.subr.mxu0 0.0
    %1994 = vmatpush1.msra.mxu0 0.0
    %1995 = vmatprep.subr.mxu0 0.0
    %1996 = vmatpush1.msra.mxu0 0.0
    %1997 = vmatprep.subr.mxu0 0.0
    %1998 = vmatpush1.msra.mxu0 0.0
    %1999 = vmatprep.subr.mxu0 0.0
    %2000 = vmatpush1.msra.mxu0 0.0
    %2001 = vmatprep.subr.mxu0 0.0
    %2002 = vmatpush1.msra.mxu0 0.0
    %2003 = vmatprep.subr.mxu0 0.0
    %2004 = vmatpush1.msra.mxu0 0.0
    %2005 = vmatprep.subr.mxu0 0.0
    %2006 = vmatpush1.msra.mxu0 0.0
    %2007 = vmatprep.subr.mxu0 0.0
    %2008 = vmatpush1.msra.mxu0 0.0
    %2009 = vmatprep.subr.mxu0 0.0
    %2010 = vmatpush1.msra.mxu0 0.0
    %2011 = vmatprep.subr.mxu0 0.0
    %2012 = vmatpush1.msra.mxu0 0.0
    %2013 = vmatprep.subr.mxu0 0.0
    %2014 = vmatpush1.msra.mxu0 0.0
    %2015 = vmatprep.subr.mxu0 0.0
    %2016 = vmatpush1.msra.mxu0 0.0
    %2017 = vmatprep.mubr.f32.mxu0 0.0
    %2018 = vmatmul.mubr.f32.gmra.mrb[0].mxu0 %v1764
    %v2019 = vpop.f32.mrb[0].mxu0
    %v2020 = vadd.f32 0.0, %v2019
    %v2021 = vpop.f32.mrb[0].mxu0
    %2022 = vmatprep.mubr.f32.mxu0 0.0
    %2023 = vmatmul.mubr.f32.gmra.mrb[0].mxu0 %v1767
    %v2024 = vpop.f32.mrb[0].mxu0
    %v2025 = vadd.f32 0.0, %v2024
    %v2026 = vpop.f32.mrb[0].mxu0
    %2027 = vmatprep.mubr.f32.mxu0 0.0
    %2028 = vmatmul.mubr.f32.gmra.mrb[0].mxu0 %v1770
    %v2029 = vpop.f32.mrb[0].mxu0
    %v2030 = vadd.f32 0.0, %v2029
    %v2031 = vpop.f32.mrb[0].mxu0
    %2032 = vmatprep.mubr.f32.mxu0 0.0
    %2033 = vmatmul.mubr.f32.gmra.mrb[0].mxu0 %v1773
    %v2034 = vpop.f32.mrb[0].mxu0
    %v2035 = vadd.f32 0.0, %v2034
    %v2036 = vpop.f32.mrb[0].mxu0
    %2037 = vdwg.mxu0
    %v2038 = vld [vmem:[#allocation9 + $0x1c0] sm:$0xff]
    %v2039 = vld [vmem:[#allocation9 + $0x1c8] sm:$0xff]
    %v2040 = vld [vmem:[#allocation9 + $0x1d0] sm:$0xff]
    %v2041 = vld [vmem:[#allocation9 + $0x1d8] sm:$0xff]
    %v2042 = vld [vmem:[#allocation9 + $0x1e0] sm:$0xff]
    %v2043 = vld [vmem:[#allocation9 + $0x1e8] sm:$0xff]
    %v2044 = vld [vmem:[#allocation9 + $0x1f0] sm:$0xff]
    %v2045 = vld [vmem:[#allocation9 + $0x1f8] sm:$0xff]
    %2046 = vmatprep.subr.mxu0 0.0
    %2047 = vmatpush1.msra.mxu0 %v2042
    %2048 = vmatprep.subr.mxu0 0.0
    %2049 = vmatpush1.msra.mxu0 %v2043
    %2050 = vmatprep.subr.mxu0 0.0
    %2051 = vmatpush1.msra.mxu0 %v2044
    %2052 = vmatprep.subr.mxu0 0.0
    %2053 = vmatpush1.msra.mxu0 %v2045
    %2054 = vmatprep.subr.mxu0 0.0
    %2055 = vmatpush1.msra.mxu0 0.0
    %2056 = vmatprep.subr.mxu0 0.0
    %2057 = vmatpush1.msra.mxu0 0.0
    %2058 = vmatprep.subr.mxu0 0.0
    %2059 = vmatpush1.msra.mxu0 0.0
    %2060 = vmatprep.subr.mxu0 0.0
    %2061 = vmatpush1.msra.mxu0 0.0
    %2062 = vmatprep.subr.mxu0 0.0
    %2063 = vmatpush1.msra.mxu0 0.0
    %2064 = vmatprep.subr.mxu0 0.0
    %2065 = vmatpush1.msra.mxu0 0.0
    %2066 = vmatprep.subr.mxu0 0.0
    %2067 = vmatpush1.msra.mxu0 0.0
    %2068 = vmatprep.subr.mxu0 0.0
    %2069 = vmatpush1.msra.mxu0 0.0
    %2070 = vmatprep.subr.mxu0 0.0
    %2071 = vmatpush1.msra.mxu0 0.0
    %2072 = vmatprep.subr.mxu0 0.0
    %2073 = vmatpush1.msra.mxu0 0.0
    %2074 = vmatprep.subr.mxu0 0.0
    %2075 = vmatpush1.msra.mxu0 0.0
    %2076 = vmatprep.subr.mxu0 0.0
    %2077 = vmatpush1.msra.mxu0 0.0
    %2078 = vmatprep.subr.mxu0 0.0
    %2079 = vmatpush1.msra.mxu0 0.0
    %2080 = vmatprep.subr.mxu0 0.0
    %2081 = vmatpush1.msra.mxu0 0.0
    %2082 = vmatprep.subr.mxu0 0.0
    %2083 = vmatpush1.msra.mxu0 0.0
    %2084 = vmatprep.subr.mxu0 0.0
    %2085 = vmatpush1.msra.mxu0 0.0
    %2086 = vmatprep.subr.mxu0 0.0
    %2087 = vmatpush1.msra.mxu0 0.0
    %2088 = vmatprep.subr.mxu0 0.0
    %2089 = vmatpush1.msra.mxu0 0.0
    %2090 = vmatprep.subr.mxu0 0.0
    %2091 = vmatpush1.msra.mxu0 0.0
    %2092 = vmatprep.subr.mxu0 0.0
    %2093 = vmatpush1.msra.mxu0 0.0
    %2094 = vmatprep.subr.mxu0 0.0
    %2095 = vmatpush1.msra.mxu0 0.0
    %2096 = vmatprep.subr.mxu0 0.0
    %2097 = vmatpush1.msra.mxu0 0.0
    %2098 = vmatprep.subr.mxu0 0.0
    %2099 = vmatpush1.msra.mxu0 0.0
    %2100 = vmatprep.subr.mxu0 0.0
    %2101 = vmatpush1.msra.mxu0 0.0
    %2102 = vmatprep.subr.mxu0 0.0
    %2103 = vmatpush1.msra.mxu0 0.0
    %2104 = vmatprep.subr.mxu0 0.0
    %2105 = vmatpush1.msra.mxu0 0.0
    %2106 = vmatprep.subr.mxu0 0.0
    %2107 = vmatpush1.msra.mxu0 0.0
    %2108 = vmatprep.subr.mxu0 0.0
    %2109 = vmatpush1.msra.mxu0 0.0
    %2110 = vmatprep.mubr.f32.mxu0 0.0
    %2111 = vmatmul.mubr.f32.gmra.mrb[0].mxu0 %v112
    %v2112 = vpop.f32.mrb[0].mxu0
    %v2113 = vadd.f32 0.0, %v2112
    %v2114 = vpop.f32.mrb[0].mxu0
    %2115 = vmatprep.mubr.f32.mxu0 0.0
    %2116 = vmatmul.mubr.f32.gmra.mrb[0].mxu0 %v115
    %v2117 = vpop.f32.mrb[0].mxu0
    %v2118 = vadd.f32 0.0, %v2117
    %v2119 = vpop.f32.mrb[0].mxu0
    %2120 = vmatprep.mubr.f32.mxu0 0.0
    %2121 = vmatmul.mubr.f32.gmra.mrb[0].mxu0 %v118
    %v2122 = vpop.f32.mrb[0].mxu0
    %v2123 = vadd.f32 0.0, %v2122
    %v2124 = vpop.f32.mrb[0].mxu0
    %2125 = vmatprep.mubr.f32.mxu0 0.0
    %2126 = vmatmul.mubr.f32.gmra.mrb[0].mxu0 %v121
    %v2127 = vpop.f32.mrb[0].mxu0
    %v2128 = vadd.f32 0.0, %v2127
    %v2129 = vpop.f32.mrb[0].mxu0
    %2130 = vdwg.mxu0
    %2131 = vmatprep.subr.mxu0 0.0
    %2132 = vmatpush1.msra.mxu0 %v2038
    %2133 = vmatprep.subr.mxu0 0.0
    %2134 = vmatpush1.msra.mxu0 %v2039
    %2135 = vmatprep.subr.mxu0 0.0
    %2136 = vmatpush1.msra.mxu0 %v2040
    %2137 = vmatprep.subr.mxu0 0.0
    %2138 = vmatpush1.msra.mxu0 %v2041
    %2139 = vmatprep.subr.mxu0 0.0
    %2140 = vmatpush1.msra.mxu0 0.0
    %2141 = vmatprep.subr.mxu0 0.0
    %2142 = vmatpush1.msra.mxu0 0.0
    %2143 = vmatprep.subr.mxu0 0.0
    %2144 = vmatpush1.msra.mxu0 0.0
    %2145 = vmatprep.subr.mxu0 0.0
    %2146 = vmatpush1.msra.mxu0 0.0
    %2147 = vmatprep.subr.mxu0 0.0
    %2148 = vmatpush1.msra.mxu0 0.0
    %2149 = vmatprep.subr.mxu0 0.0
    %2150 = vmatpush1.msra.mxu0 0.0
    %2151 = vmatprep.subr.mxu0 0.0
    %2152 = vmatpush1.msra.mxu0 0.0
    %2153 = vmatprep.subr.mxu0 0.0
    %2154 = vmatpush1.msra.mxu0 0.0
    %2155 = vmatprep.subr.mxu0 0.0
    %2156 = vmatpush1.msra.mxu0 0.0
    %2157 = vmatprep.subr.mxu0 0.0
    %2158 = vmatpush1.msra.mxu0 0.0
    %2159 = vmatprep.subr.mxu0 0.0
    %2160 = vmatpush1.msra.mxu0 0.0
    %2161 = vmatprep.subr.mxu0 0.0
    %2162 = vmatpush1.msra.mxu0 0.0
    %2163 = vmatprep.subr.mxu0 0.0
    %2164 = vmatpush1.msra.mxu0 0.0
    %2165 = vmatprep.subr.mxu0 0.0
    %2166 = vmatpush1.msra.mxu0 0.0
    %2167 = vmatprep.subr.mxu0 0.0
    %2168 = vmatpush1.msra.mxu0 0.0
    %2169 = vmatprep.subr.mxu0 0.0
    %2170 = vmatpush1.msra.mxu0 0.0
    %2171 = vmatprep.subr.mxu0 0.0
    %2172 = vmatpush1.msra.mxu0 0.0
    %2173 = vmatprep.subr.mxu0 0.0
    %2174 = vmatpush1.msra.mxu0 0.0
    %2175 = vmatprep.subr.mxu0 0.0
    %2176 = vmatpush1.msra.mxu0 0.0
    %2177 = vmatprep.subr.mxu0 0.0
    %2178 = vmatpush1.msra.mxu0 0.0
    %2179 = vmatprep.subr.mxu0 0.0
    %2180 = vmatpush1.msra.mxu0 0.0
    %2181 = vmatprep.subr.mxu0 0.0
    %2182 = vmatpush1.msra.mxu0 0.0
    %2183 = vmatprep.subr.mxu0 0.0
    %2184 = vmatpush1.msra.mxu0 0.0
    %2185 = vmatprep.subr.mxu0 0.0
    %2186 = vmatpush1.msra.mxu0 0.0
    %2187 = vmatprep.subr.mxu0 0.0
    %2188 = vmatpush1.msra.mxu0 0.0
    %2189 = vmatprep.subr.mxu0 0.0
    %2190 = vmatpush1.msra.mxu0 0.0
    %2191 = vmatprep.subr.mxu0 0.0
    %2192 = vmatpush1.msra.mxu0 0.0
    %2193 = vmatprep.subr.mxu0 0.0
    %2194 = vmatpush1.msra.mxu0 0.0
    %2195 = vmatprep.mubr.f32.mxu0 0.0
    %2196 = vmatmul.mubr.f32.gmra.mrb[0].mxu0 %v1764
    %v2197 = vpop.f32.mrb[0].mxu0
    %v2198 = vadd.f32 %v2113, %v2197
    %v2199 = vpop.f32.mrb[0].mxu0
    %2200 = vmatprep.mubr.f32.mxu0 0.0
    %2201 = vmatmul.mubr.f32.gmra.mrb[0].mxu0 %v1767
    %v2202 = vpop.f32.mrb[0].mxu0
    %v2203 = vadd.f32 %v2118, %v2202
    %v2204 = vpop.f32.mrb[0].mxu0
    %2205 = vmatprep.mubr.f32.mxu0 0.0
    %2206 = vmatmul.mubr.f32.gmra.mrb[0].mxu0 %v1770
    %v2207 = vpop.f32.mrb[0].mxu0
    %v2208 = vadd.f32 %v2123, %v2207
    %v2209 = vpop.f32.mrb[0].mxu0
    %2210 = vmatprep.mubr.f32.mxu0 0.0
    %2211 = vmatmul.mubr.f32.gmra.mrb[0].mxu0 %v1773
    %v2212 = vpop.f32.mrb[0].mxu0
    %v2213 = vadd.f32 %v2128, %v2212
    %v2214 = vpop.f32.mrb[0].mxu0
    %2215 = vdwg.mxu0
    %v2216 = vld [vmem:[#allocation9 + $0x200] sm:$0xff]
    %v2217 = vld [vmem:[#allocation9 + $0x208] sm:$0xff]
    %v2218 = vld [vmem:[#allocation9 + $0x210] sm:$0xff]
    %v2219 = vld [vmem:[#allocation9 + $0x218] sm:$0xff]
    %v2220 = vld [vmem:[#allocation9 + $0x220] sm:$0xff]
    %v2221 = vld [vmem:[#allocation9 + $0x228] sm:$0xff]
    %v2222 = vld [vmem:[#allocation9 + $0x230] sm:$0xff]
    %v2223 = vld [vmem:[#allocation9 + $0x238] sm:$0xff]
    %2224 = vmatprep.subr.mxu0 0.0
    %2225 = vmatpush1.msra.mxu0 %v2220
    %2226 = vmatprep.subr.mxu0 0.0
    %2227 = vmatpush1.msra.mxu0 %v2221
    %2228 = vmatprep.subr.mxu0 0.0
    %2229 = vmatpush1.msra.mxu0 %v2222
    %2230 = vmatprep.subr.mxu0 0.0
    %2231 = vmatpush1.msra.mxu0 %v2223
    %2232 = vmatprep.subr.mxu0 0.0
    %2233 = vmatpush1.msra.mxu0 0.0
    %2234 = vmatprep.subr.mxu0 0.0
    %2235 = vmatpush1.msra.mxu0 0.0
    %2236 = vmatprep.subr.mxu0 0.0
    %2237 = vmatpush1.msra.mxu0 0.0
    %2238 = vmatprep.subr.mxu0 0.0
    %2239 = vmatpush1.msra.mxu0 0.0
    %2240 = vmatprep.subr.mxu0 0.0
    %2241 = vmatpush1.msra.mxu0 0.0
    %2242 = vmatprep.subr.mxu0 0.0
    %2243 = vmatpush1.msra.mxu0 0.0
    %2244 = vmatprep.subr.mxu0 0.0
    %2245 = vmatpush1.msra.mxu0 0.0
    %2246 = vmatprep.subr.mxu0 0.0
    %2247 = vmatpush1.msra.mxu0 0.0
    %2248 = vmatprep.subr.mxu0 0.0
    %2249 = vmatpush1.msra.mxu0 0.0
    %2250 = vmatprep.subr.mxu0 0.0
    %2251 = vmatpush1.msra.mxu0 0.0
    %2252 = vmatprep.subr.mxu0 0.0
    %2253 = vmatpush1.msra.mxu0 0.0
    %2254 = vmatprep.subr.mxu0 0.0
    %2255 = vmatpush1.msra.mxu0 0.0
    %2256 = vmatprep.subr.mxu0 0.0
    %2257 = vmatpush1.msra.mxu0 0.0
    %2258 = vmatprep.subr.mxu0 0.0
    %2259 = vmatpush1.msra.mxu0 0.0
    %2260 = vmatprep.subr.mxu0 0.0
    %2261 = vmatpush1.msra.mxu0 0.0
    %2262 = vmatprep.subr.mxu0 0.0
    %2263 = vmatpush1.msra.mxu0 0.0
    %2264 = vmatprep.subr.mxu0 0.0
    %2265 = vmatpush1.msra.mxu0 0.0
    %2266 = vmatprep.subr.mxu0 0.0
    %2267 = vmatpush1.msra.mxu0 0.0
    %2268 = vmatprep.subr.mxu0 0.0
    %2269 = vmatpush1.msra.mxu0 0.0
    %2270 = vmatprep.subr.mxu0 0.0
    %2271 = vmatpush1.msra.mxu0 0.0
    %2272 = vmatprep.subr.mxu0 0.0
    %2273 = vmatpush1.msra.mxu0 0.0
    %2274 = vmatprep.subr.mxu0 0.0
    %2275 = vmatpush1.msra.mxu0 0.0
    %2276 = vmatprep.subr.mxu0 0.0
    %2277 = vmatpush1.msra.mxu0 0.0
    %2278 = vmatprep.subr.mxu0 0.0
    %2279 = vmatpush1.msra.mxu0 0.0
    %2280 = vmatprep.subr.mxu0 0.0
    %2281 = vmatpush1.msra.mxu0 0.0
    %2282 = vmatprep.subr.mxu0 0.0
    %2283 = vmatpush1.msra.mxu0 0.0
    %2284 = vmatprep.subr.mxu0 0.0
    %2285 = vmatpush1.msra.mxu0 0.0
    %2286 = vmatprep.subr.mxu0 0.0
    %2287 = vmatpush1.msra.mxu0 0.0
    %2288 = vmatprep.mubr.f32.mxu0 0.0
    %2289 = vmatmul.mubr.f32.gmra.mrb[0].mxu0 %v112
    %v2290 = vpop.f32.mrb[0].mxu0
    %v2291 = vadd.f32 0.0, %v2290
    %v2292 = vpop.f32.mrb[0].mxu0
    %2293 = vmatprep.mubr.f32.mxu0 0.0
    %2294 = vmatmul.mubr.f32.gmra.mrb[0].mxu0 %v115
    %v2295 = vpop.f32.mrb[0].mxu0
    %v2296 = vadd.f32 0.0, %v2295
    %v2297 = vpop.f32.mrb[0].mxu0
    %2298 = vmatprep.mubr.f32.mxu0 0.0
    %2299 = vmatmul.mubr.f32.gmra.mrb[0].mxu0 %v118
    %v2300 = vpop.f32.mrb[0].mxu0
    %v2301 = vadd.f32 0.0, %v2300
    %v2302 = vpop.f32.mrb[0].mxu0
    %2303 = vmatprep.mubr.f32.mxu0 0.0
    %2304 = vmatmul.mubr.f32.gmra.mrb[0].mxu0 %v121
    %v2305 = vpop.f32.mrb[0].mxu0
    %v2306 = vadd.f32 0.0, %v2305
    %v2307 = vpop.f32.mrb[0].mxu0
    %2308 = vdwg.mxu0
    %2309 = vmatprep.subr.mxu0 0.0
    %2310 = vmatpush1.msra.mxu0 %v2216
    %2311 = vmatprep.subr.mxu0 0.0
    %2312 = vmatpush1.msra.mxu0 %v2217
    %2313 = vmatprep.subr.mxu0 0.0
    %2314 = vmatpush1.msra.mxu0 %v2218
    %2315 = vmatprep.subr.mxu0 0.0
    %2316 = vmatpush1.msra.mxu0 %v2219
    %2317 = vmatprep.subr.mxu0 0.0
    %2318 = vmatpush1.msra.mxu0 0.0
    %2319 = vmatprep.subr.mxu0 0.0
    %2320 = vmatpush1.msra.mxu0 0.0
    %2321 = vmatprep.subr.mxu0 0.0
    %2322 = vmatpush1.msra.mxu0 0.0
    %2323 = vmatprep.subr.mxu0 0.0
    %2324 = vmatpush1.msra.mxu0 0.0
    %2325 = vmatprep.subr.mxu0 0.0
    %2326 = vmatpush1.msra.mxu0 0.0
    %2327 = vmatprep.subr.mxu0 0.0
    %2328 = vmatpush1.msra.mxu0 0.0
    %2329 = vmatprep.subr.mxu0 0.0
    %2330 = vmatpush1.msra.mxu0 0.0
    %2331 = vmatprep.subr.mxu0 0.0
    %2332 = vmatpush1.msra.mxu0 0.0
    %2333 = vmatprep.subr.mxu0 0.0
    %2334 = vmatpush1.msra.mxu0 0.0
    %2335 = vmatprep.subr.mxu0 0.0
    %2336 = vmatpush1.msra.mxu0 0.0
    %2337 = vmatprep.subr.mxu0 0.0
    %2338 = vmatpush1.msra.mxu0 0.0
    %2339 = vmatprep.subr.mxu0 0.0
    %2340 = vmatpush1.msra.mxu0 0.0
    %2341 = vmatprep.subr.mxu0 0.0
    %2342 = vmatpush1.msra.mxu0 0.0
    %2343 = vmatprep.subr.mxu0 0.0
    %2344 = vmatpush1.msra.mxu0 0.0
    %2345 = vmatprep.subr.mxu0 0.0
    %2346 = vmatpush1.msra.mxu0 0.0
    %2347 = vmatprep.subr.mxu0 0.0
    %2348 = vmatpush1.msra.mxu0 0.0
    %2349 = vmatprep.subr.mxu0 0.0
    %2350 = vmatpush1.msra.mxu0 0.0
    %2351 = vmatprep.subr.mxu0 0.0
    %2352 = vmatpush1.msra.mxu0 0.0
    %2353 = vmatprep.subr.mxu0 0.0
    %2354 = vmatpush1.msra.mxu0 0.0
    %2355 = vmatprep.subr.mxu0 0.0
    %2356 = vmatpush1.msra.mxu0 0.0
    %2357 = vmatprep.subr.mxu0 0.0
    %2358 = vmatpush1.msra.mxu0 0.0
    %2359 = vmatprep.subr.mxu0 0.0
    %2360 = vmatpush1.msra.mxu0 0.0
    %2361 = vmatprep.subr.mxu0 0.0
    %2362 = vmatpush1.msra.mxu0 0.0
    %2363 = vmatprep.subr.mxu0 0.0
    %2364 = vmatpush1.msra.mxu0 0.0
    %2365 = vmatprep.subr.mxu0 0.0
    %2366 = vmatpush1.msra.mxu0 0.0
    %2367 = vmatprep.subr.mxu0 0.0
    %2368 = vmatpush1.msra.mxu0 0.0
    %2369 = vmatprep.subr.mxu0 0.0
    %2370 = vmatpush1.msra.mxu0 0.0
    %2371 = vmatprep.subr.mxu0 0.0
    %2372 = vmatpush1.msra.mxu0 0.0
    %2373 = vmatprep.mubr.f32.mxu0 0.0
    %2374 = vmatmul.mubr.f32.gmra.mrb[0].mxu0 %v1764
    %v2375 = vpop.f32.mrb[0].mxu0
    %v2376 = vadd.f32 %v2291, %v2375
    %v2377 = vpop.f32.mrb[0].mxu0
    %2378 = vmatprep.mubr.f32.mxu0 0.0
    %2379 = vmatmul.mubr.f32.gmra.mrb[0].mxu0 %v1767
    %v2380 = vpop.f32.mrb[0].mxu0
    %v2381 = vadd.f32 %v2296, %v2380
    %v2382 = vpop.f32.mrb[0].mxu0
    %2383 = vmatprep.mubr.f32.mxu0 0.0
    %2384 = vmatmul.mubr.f32.gmra.mrb[0].mxu0 %v1770
    %v2385 = vpop.f32.mrb[0].mxu0
    %v2386 = vadd.f32 %v2301, %v2385
    %v2387 = vpop.f32.mrb[0].mxu0
    %2388 = vmatprep.mubr.f32.mxu0 0.0
    %2389 = vmatmul.mubr.f32.gmra.mrb[0].mxu0 %v1773
    %v2390 = vpop.f32.mrb[0].mxu0
    %v2391 = vadd.f32 %v2306, %v2390
    %v2392 = vpop.f32.mrb[0].mxu0
    %2393 = vdwg.mxu0
    %v2394 = vld [vmem:[#allocation9 + $0x240] sm:$0xff]
    %v2395 = vld [vmem:[#allocation9 + $0x248] sm:$0xff]
    %v2396 = vld [vmem:[#allocation9 + $0x250] sm:$0xff]
    %v2397 = vld [vmem:[#allocation9 + $0x258] sm:$0xff]
    %v2398 = vld [vmem:[#allocation9 + $0x260] sm:$0xff]
    %v2399 = vld [vmem:[#allocation9 + $0x268] sm:$0xff]
    %v2400 = vld [vmem:[#allocation9 + $0x270] sm:$0xff]
    %v2401 = vld [vmem:[#allocation9 + $0x278] sm:$0xff]
    %2402 = vmatprep.subr.mxu0 0.0
    %2403 = vmatpush1.msra.mxu0 %v2398
    %2404 = vmatprep.subr.mxu0 0.0
    %2405 = vmatpush1.msra.mxu0 %v2399
    %2406 = vmatprep.subr.mxu0 0.0
    %2407 = vmatpush1.msra.mxu0 %v2400
    %2408 = vmatprep.subr.mxu0 0.0
    %2409 = vmatpush1.msra.mxu0 %v2401
    %2410 = vmatprep.subr.mxu0 0.0
    %2411 = vmatpush1.msra.mxu0 0.0
    %2412 = vmatprep.subr.mxu0 0.0
    %2413 = vmatpush1.msra.mxu0 0.0
    %2414 = vmatprep.subr.mxu0 0.0
    %2415 = vmatpush1.msra.mxu0 0.0
    %2416 = vmatprep.subr.mxu0 0.0
    %2417 = vmatpush1.msra.mxu0 0.0
    %2418 = vmatprep.subr.mxu0 0.0
    %2419 = vmatpush1.msra.mxu0 0.0
    %2420 = vmatprep.subr.mxu0 0.0
    %2421 = vmatpush1.msra.mxu0 0.0
    %2422 = vmatprep.subr.mxu0 0.0
    %2423 = vmatpush1.msra.mxu0 0.0
    %2424 = vmatprep.subr.mxu0 0.0
    %2425 = vmatpush1.msra.mxu0 0.0
    %2426 = vmatprep.subr.mxu0 0.0
    %2427 = vmatpush1.msra.mxu0 0.0
    %2428 = vmatprep.subr.mxu0 0.0
    %2429 = vmatpush1.msra.mxu0 0.0
    %2430 = vmatprep.subr.mxu0 0.0
    %2431 = vmatpush1.msra.mxu0 0.0
    %2432 = vmatprep.subr.mxu0 0.0
    %2433 = vmatpush1.msra.mxu0 0.0
    %2434 = vmatprep.subr.mxu0 0.0
    %2435 = vmatpush1.msra.mxu0 0.0
    %2436 = vmatprep.subr.mxu0 0.0
    %2437 = vmatpush1.msra.mxu0 0.0
    %2438 = vmatprep.subr.mxu0 0.0
    %2439 = vmatpush1.msra.mxu0 0.0
    %2440 = vmatprep.subr.mxu0 0.0
    %2441 = vmatpush1.msra.mxu0 0.0
    %2442 = vmatprep.subr.mxu0 0.0
    %2443 = vmatpush1.msra.mxu0 0.0
    %2444 = vmatprep.subr.mxu0 0.0
    %2445 = vmatpush1.msra.mxu0 0.0
    %2446 = vmatprep.subr.mxu0 0.0
    %2447 = vmatpush1.msra.mxu0 0.0
    %2448 = vmatprep.subr.mxu0 0.0
    %2449 = vmatpush1.msra.mxu0 0.0
    %2450 = vmatprep.subr.mxu0 0.0
    %2451 = vmatpush1.msra.mxu0 0.0
    %2452 = vmatprep.subr.mxu0 0.0
    %2453 = vmatpush1.msra.mxu0 0.0
    %2454 = vmatprep.subr.mxu0 0.0
    %2455 = vmatpush1.msra.mxu0 0.0
    %2456 = vmatprep.subr.mxu0 0.0
    %2457 = vmatpush1.msra.mxu0 0.0
    %2458 = vmatprep.subr.mxu0 0.0
    %2459 = vmatpush1.msra.mxu0 0.0
    %2460 = vmatprep.subr.mxu0 0.0
    %2461 = vmatpush1.msra.mxu0 0.0
    %2462 = vmatprep.subr.mxu0 0.0
    %2463 = vmatpush1.msra.mxu0 0.0
    %2464 = vmatprep.subr.mxu0 0.0
    %2465 = vmatpush1.msra.mxu0 0.0
    %2466 = vmatprep.mubr.f32.mxu0 0.0
    %2467 = vmatmul.mubr.f32.gmra.mrb[0].mxu0 %v112
    %v2468 = vpop.f32.mrb[0].mxu0
    %v2469 = vadd.f32 0.0, %v2468
    %v2470 = vpop.f32.mrb[0].mxu0
    %2471 = vmatprep.mubr.f32.mxu0 0.0
    %2472 = vmatmul.mubr.f32.gmra.mrb[0].mxu0 %v115
    %v2473 = vpop.f32.mrb[0].mxu0
    %v2474 = vadd.f32 0.0, %v2473
    %v2475 = vpop.f32.mrb[0].mxu0
    %2476 = vmatprep.mubr.f32.mxu0 0.0
    %2477 = vmatmul.mubr.f32.gmra.mrb[0].mxu0 %v118
    %v2478 = vpop.f32.mrb[0].mxu0
    %v2479 = vadd.f32 0.0, %v2478
    %v2480 = vpop.f32.mrb[0].mxu0
    %2481 = vmatprep.mubr.f32.mxu0 0.0
    %2482 = vmatmul.mubr.f32.gmra.mrb[0].mxu0 %v121
    %v2483 = vpop.f32.mrb[0].mxu0
    %v2484 = vadd.f32 0.0, %v2483
    %v2485 = vpop.f32.mrb[0].mxu0
    %2486 = vdwg.mxu0
    %2487 = vmatprep.subr.mxu0 0.0
    %2488 = vmatpush1.msra.mxu0 %v2394
    %2489 = vmatprep.subr.mxu0 0.0
    %2490 = vmatpush1.msra.mxu0 %v2395
    %2491 = vmatprep.subr.mxu0 0.0
    %2492 = vmatpush1.msra.mxu0 %v2396
    %2493 = vmatprep.subr.mxu0 0.0
    %2494 = vmatpush1.msra.mxu0 %v2397
    %2495 = vmatprep.subr.mxu0 0.0
    %2496 = vmatpush1.msra.mxu0 0.0
    %2497 = vmatprep.subr.mxu0 0.0
    %2498 = vmatpush1.msra.mxu0 0.0
    %2499 = vmatprep.subr.mxu0 0.0
    %2500 = vmatpush1.msra.mxu0 0.0
    %2501 = vmatprep.subr.mxu0 0.0
    %2502 = vmatpush1.msra.mxu0 0.0
    %2503 = vmatprep.subr.mxu0 0.0
    %2504 = vmatpush1.msra.mxu0 0.0
    %2505 = vmatprep.subr.mxu0 0.0
    %2506 = vmatpush1.msra.mxu0 0.0
    %2507 = vmatprep.subr.mxu0 0.0
    %2508 = vmatpush1.msra.mxu0 0.0
    %2509 = vmatprep.subr.mxu0 0.0
    %2510 = vmatpush1.msra.mxu0 0.0
    %2511 = vmatprep.subr.mxu0 0.0
    %2512 = vmatpush1.msra.mxu0 0.0
    %2513 = vmatprep.subr.mxu0 0.0
    %2514 = vmatpush1.msra.mxu0 0.0
    %2515 = vmatprep.subr.mxu0 0.0
    %2516 = vmatpush1.msra.mxu0 0.0
    %2517 = vmatprep.subr.mxu0 0.0
    %2518 = vmatpush1.msra.mxu0 0.0
    %2519 = vmatprep.subr.mxu0 0.0
    %2520 = vmatpush1.msra.mxu0 0.0
    %2521 = vmatprep.subr.mxu0 0.0
    %2522 = vmatpush1.msra.mxu0 0.0
    %2523 = vmatprep.subr.mxu0 0.0
    %2524 = vmatpush1.msra.mxu0 0.0
    %2525 = vmatprep.subr.mxu0 0.0
    %2526 = vmatpush1.msra.mxu0 0.0
    %2527 = vmatprep.subr.mxu0 0.0
    %2528 = vmatpush1.msra.mxu0 0.0
    %2529 = vmatprep.subr.mxu0 0.0
    %2530 = vmatpush1.msra.mxu0 0.0
    %2531 = vmatprep.subr.mxu0 0.0
    %2532 = vmatpush1.msra.mxu0 0.0
    %2533 = vmatprep.subr.mxu0 0.0
    %2534 = vmatpush1.msra.mxu0 0.0
    %2535 = vmatprep.subr.mxu0 0.0
    %2536 = vmatpush1.msra.mxu0 0.0
    %2537 = vmatprep.subr.mxu0 0.0
    %2538 = vmatpush1.msra.mxu0 0.0
    %2539 = vmatprep.subr.mxu0 0.0
    %2540 = vmatpush1.msra.mxu0 0.0
    %2541 = vmatprep.subr.mxu0 0.0
    %2542 = vmatpush1.msra.mxu0 0.0
    %2543 = vmatprep.subr.mxu0 0.0
    %2544 = vmatpush1.msra.mxu0 0.0
    %2545 = vmatprep.subr.mxu0 0.0
    %2546 = vmatpush1.msra.mxu0 0.0
    %2547 = vmatprep.subr.mxu0 0.0
    %2548 = vmatpush1.msra.mxu0 0.0
    %2549 = vmatprep.subr.mxu0 0.0
    %2550 = vmatpush1.msra.mxu0 0.0
    %2551 = vmatprep.mubr.f32.mxu0 0.0
    %2552 = vmatmul.mubr.f32.gmra.mrb[0].mxu0 %v1764
    %v2553 = vpop.f32.mrb[0].mxu0
    %v2554 = vadd.f32 %v2469, %v2553
    %v2555 = vpop.f32.mrb[0].mxu0
    %2556 = vmatprep.mubr.f32.mxu0 0.0
    %2557 = vmatmul.mubr.f32.gmra.mrb[0].mxu0 %v1767
    %v2558 = vpop.f32.mrb[0].mxu0
    %v2559 = vadd.f32 %v2474, %v2558
    %v2560 = vpop.f32.mrb[0].mxu0
    %2561 = vmatprep.mubr.f32.mxu0 0.0
    %2562 = vmatmul.mubr.f32.gmra.mrb[0].mxu0 %v1770
    %v2563 = vpop.f32.mrb[0].mxu0
    %v2564 = vadd.f32 %v2479, %v2563
    %v2565 = vpop.f32.mrb[0].mxu0
    %2566 = vmatprep.mubr.f32.mxu0 0.0
    %2567 = vmatmul.mubr.f32.gmra.mrb[0].mxu0 %v1773
    %v2568 = vpop.f32.mrb[0].mxu0
    %v2569 = vadd.f32 %v2484, %v2568
    %v2570 = vpop.f32.mrb[0].mxu0
    %2571 = vdwg.mxu0
    %v2572 = vld [vmem:[#allocation9 + $0x180] sm:$0x1]
    %v2573 = vld [vmem:[#allocation9 + $0x188] sm:$0x1]
    %v2574 = vld [vmem:[#allocation9 + $0x190] sm:$0x1]
    %v2575 = vld [vmem:[#allocation9 + $0x198] sm:$0xff]
    %v2576 = vld [vmem:[#allocation9 + $0x1a0] sm:$0xff]
    %v2577 = vld [vmem:[#allocation9 + $0x1a8] sm:$0xff]
    %v2578 = vld [vmem:[#allocation9 + $0x1b0] sm:$0xff]
    %v2579 = vld [vmem:[#allocation9 + $0x1b8] sm:$0x1]
    %v2580 = vld [vmem:[#allocation9 + $0x2e0] sm:$0xff]
    %v2581 = vld [vmem:[#allocation9 + $0x2e8] sm:$0xff]
    %v2582 = vld [vmem:[#allocation9 + $0x2f0] sm:$0xff]
    %v2583 = vld [vmem:[#allocation9 + $0x2f8] sm:$0xff]
    %v2584 = vld [vmem:[#allocation9 + $0x300] sm:$0x1]
    %vm2587 = vcmask 1046528
    %v2588 = vrot.slane %v1931, 1
    %v2589 = vrot.slane %v1936, 1
    %v2590 = vsel %vm2587, %v2588, %v2589
    %v2593 = vadd.f32 %v1842, %v2590
    %v2594 = vadd.f32 %v1847, %v2589
    %vm2597 = vcmask 1045504
    %v2598 = vrot.slane %v2020, 2
    %v2599 = vrot.slane %v2025, 2
    %v2600 = vsel %vm2597, %v2598, %v2599
    %v2603 = vadd.f32 %v2593, %v2600
    %v2604 = vadd.f32 %v2594, %v2599
    %v2605 = vlaneseq
    %v2606 = vshrl.u32 %v2605, 7
    %v2607 = vsub.s32 0, %v2606
    %v2608 = vrot.slane %v2572, %v2607
    %v2609 = vadd.f32 %v2603, %v2608
    %v2610 = vadd.f32 %v2604, %v2608
    %v2611 = vlaneseq
    %v2612 = vshrl.u32 %v2611, 7
    %v2613 = vsub.s32 0, %v2612
    %v2614 = vrot.slane %v2573, %v2613
    %v2615 = vmul.f32 %v2609, %v2614
    %v2616 = vmul.f32 %v2610, %v2614
    %v2617 = vlaneseq
    %v2618 = vshrl.u32 %v2617, 7
    %v2619 = vsub.s32 0, %v2618
    %v2620 = vrot.slane %v2574, %v2619
    %v2621 = vadd.f32 %v2615, %v2620
    %v2622 = vadd.f32 %v2616, %v2620
    %v2623 = vmax.f32 %v2621, 0.0
    %v2624 = vmax.f32 %v2622, 0.0
    %vm2625 = vcmask 256000
    %v2626 = vsel %vm2625, %v2623, -inf
    %v2627 = vrot.slane %v2626, 4
    %v2628 = vmax.f32 %v2626, %v2627
    %v2629 = vrot.slane %v2628, 2
    %v2630 = vmax.f32 %v2628, %v2629
    %v2631 = vrot.slane %v2630, 1
    %v2632 = vmax.f32 %v2630, %v2631
    %vm2633 = vcmask 258050
    %v2634 = vsel %vm2633, %v2623, -inf
    %v2635 = vrot.slane %v2634, 4
    %v2636 = vmax.f32 %v2634, %v2635
    %v2637 = vrot.slane %v2636, 2
    %v2638 = vmax.f32 %v2636, %v2637
    %v2639 = vrot.slane %v2638, 1
    %v2640 = vmax.f32 %v2638, %v2639
    %vm2641 = vcmask 260100
    %v2642 = vsel %vm2641, %v2623, -inf
    %v2643 = vrot.slane %v2642, 4
    %v2644 = vmax.f32 %v2642, %v2643
    %v2645 = vrot.slane %v2644, 2
    %v2646 = vmax.f32 %v2644, %v2645
    %v2647 = vrot.slane %v2646, 1
    %v2648 = vmax.f32 %v2646, %v2647
    %vm2649 = vcmask 261126
    %v2650 = vsel %vm2649, %v2623, -inf
    %vm2651 = vcmask 253952
    %v2652 = vsel %vm2651, %v2624, -inf
    %v2653 = vmax.f32 %v2650, %v2652
    %v2654 = vrot.slane %v2653, 4
    %v2655 = vmax.f32 %v2653, %v2654
    %v2656 = vrot.slane %v2655, 2
    %v2657 = vmax.f32 %v2655, %v2656
    %v2658 = vrot.slane %v2657, 1
    %v2659 = vmax.f32 %v2657, %v2658
    %v2660 = vsel %vm2625, %v2624, -inf
    %v2661 = vrot.slane %v2660, 4
    %v2662 = vmax.f32 %v2660, %v2661
    %v2663 = vrot.slane %v2662, 2
    %v2664 = vmax.f32 %v2662, %v2663
    %v2665 = vrot.slane %v2664, 1
    %v2666 = vmax.f32 %v2664, %v2665
    %v2667 = vsel %vm2633, %v2624, -inf
    %v2668 = vrot.slane %v2667, 4
    %v2669 = vmax.f32 %v2667, %v2668
    %v2670 = vrot.slane %v2669, 2
    %v2671 = vmax.f32 %v2669, %v2670
    %v2672 = vrot.slane %v2671, 1
    %v2673 = vmax.f32 %v2671, %v2672
    %v2676 = vrot.slane %v1941, 1
    %v2677 = vrot.slane %v1946, 1
    %v2678 = vsel %vm2587, %v2676, %v2677
    %v2681 = vadd.f32 %v1852, %v2678
    %v2682 = vadd.f32 %v1857, %v2677
    %v2685 = vrot.slane %v2030, 2
    %v2686 = vrot.slane %v2035, 2
    %v2687 = vsel %vm2597, %v2685, %v2686
    %v2690 = vadd.f32 %v2681, %v2687
    %v2691 = vadd.f32 %v2682, %v2686
    %v2692 = vadd.f32 %v2690, %v2608
    %v2693 = vadd.f32 %v2691, %v2608
    %v2694 = vmul.f32 %v2692, %v2614
    %v2695 = vmul.f32 %v2693, %v2614
    %v2696 = vadd.f32 %v2694, %v2620
    %v2697 = vadd.f32 %v2695, %v2620
    %v2698 = vmax.f32 %v2696, 0.0
    %v2699 = vmax.f32 %v2697, 0.0
    %v2700 = vsel %vm2625, %v2698, -inf
    %v2701 = vrot.slane %v2700, 4
    %v2702 = vmax.f32 %v2700, %v2701
    %v2703 = vrot.slane %v2702, 2
    %v2704 = vmax.f32 %v2702, %v2703
    %v2705 = vrot.slane %v2704, 1
    %v2706 = vmax.f32 %v2704, %v2705
    %v2707 = vsel %vm2633, %v2698, -inf
    %v2708 = vrot.slane %v2707, 4
    %v2709 = vmax.f32 %v2707, %v2708
    %v2710 = vrot.slane %v2709, 2
    %v2711 = vmax.f32 %v2709, %v2710
    %v2712 = vrot.slane %v2711, 1
    %v2713 = vmax.f32 %v2711, %v2712
    %v2714 = vsel %vm2641, %v2698, -inf
    %v2715 = vrot.slane %v2714, 4
    %v2716 = vmax.f32 %v2714, %v2715
    %v2717 = vrot.slane %v2716, 2
    %v2718 = vmax.f32 %v2716, %v2717
    %v2719 = vrot.slane %v2718, 1
    %v2720 = vmax.f32 %v2718, %v2719
    %v2721 = vsel %vm2649, %v2698, -inf
    %v2722 = vsel %vm2651, %v2699, -inf
    %v2723 = vmax.f32 %v2721, %v2722
    %v2724 = vrot.slane %v2723, 4
    %v2725 = vmax.f32 %v2723, %v2724
    %v2726 = vrot.slane %v2725, 2
    %v2727 = vmax.f32 %v2725, %v2726
    %v2728 = vrot.slane %v2727, 1
    %v2729 = vmax.f32 %v2727, %v2728
    %v2730 = vsel %vm2625, %v2699, -inf
    %v2731 = vrot.slane %v2730, 4
    %v2732 = vmax.f32 %v2730, %v2731
    %v2733 = vrot.slane %v2732, 2
    %v2734 = vmax.f32 %v2732, %v2733
    %v2735 = vrot.slane %v2734, 1
    %v2736 = vmax.f32 %v2734, %v2735
    %v2737 = vsel %vm2633, %v2699, -inf
    %v2738 = vrot.slane %v2737, 4
    %v2739 = vmax.f32 %v2737, %v2738
    %v2740 = vrot.slane %v2739, 2
    %v2741 = vmax.f32 %v2739, %v2740
    %v2742 = vrot.slane %v2741, 1
    %v2743 = vmax.f32 %v2741, %v2742
    %vm2744 = vcmask 1040384
    %v2745 = vsel %vm2744, %v2632, %v2640
    %vm2746 = vcmask 1041408
    %v2747 = vsel %vm2746, %v2745, %v2648
    %vm2748 = vcmask 1042432
    %v2749 = vsel %vm2748, %v2747, %v2659
    %vm2750 = vcmask 1043456
    %v2751 = vsel %vm2750, %v2749, %v2666
    %vm2752 = vcmask 1044480
    %v2753 = vsel %vm2752, %v2751, %v2673
    %v2754 = vsel %vm2597, %v2753, %v2706
    %v2755 = vsel %vm2587, %v2754, %v2713
    %v2756 = vsel %vm2744, %v2720, %v2729
    %v2757 = vsel %vm2746, %v2756, %v2736
    %v2758 = vsel %vm2748, %v2757, %v2743
    %v2759 = vlaneseq
    %v2760 = vshrl.u32 %v2759, 7
    %v2761 = vsub.s32 0, %v2760
    %v2762 = vrot.slane %v2579, %v2761
    %v2764 = vsel %vm110, %v2755, 0
    %v2767 = vsel %vm110, %v2758, 0
    %2769 = vmatprep.subr.mxu0 0.0
    %2770 = vmatpush1.msra.mxu0 %v2575
    %2771 = vmatprep.subr.mxu0 0.0
    %2772 = vmatpush1.msra.mxu0 %v2576
    %2773 = vmatprep.subr.mxu0 0.0
    %2774 = vmatpush1.msra.mxu0 %v2577
    %2775 = vmatprep.subr.mxu0 0.0
    %2776 = vmatpush1.msra.mxu0 %v2578
    %2777 = vmatprep.subr.mxu0 0.0
    %2778 = vmatpush1.msra.mxu0 0.0
    %2779 = vmatprep.subr.mxu0 0.0
    %2780 = vmatpush1.msra.mxu0 0.0
    %2781 = vmatprep.subr.mxu0 0.0
    %2782 = vmatpush1.msra.mxu0 0.0
    %2783 = vmatprep.subr.mxu0 0.0
    %2784 = vmatpush1.msra.mxu0 0.0
    %2785 = vmatprep.subr.mxu0 0.0
    %2786 = vmatpush1.msra.mxu0 0.0
    %2787 = vmatprep.subr.mxu0 0.0
    %2788 = vmatpush1.msra.mxu0 0.0
    %2789 = vmatprep.subr.mxu0 0.0
    %2790 = vmatpush1.msra.mxu0 0.0
    %2791 = vmatprep.subr.mxu0 0.0
    %2792 = vmatpush1.msra.mxu0 0.0
    %2793 = vmatprep.subr.mxu0 0.0
    %2794 = vmatpush1.msra.mxu0 0.0
    %2795 = vmatprep.subr.mxu0 0.0
    %2796 = vmatpush1.msra.mxu0 0.0
    %2797 = vmatprep.subr.mxu0 0.0
    %2798 = vmatpush1.msra.mxu0 0.0
    %2799 = vmatprep.subr.mxu0 0.0
    %2800 = vmatpush1.msra.mxu0 0.0
    %2801 = vmatprep.subr.mxu0 0.0
    %2802 = vmatpush1.msra.mxu0 0.0
    %2803 = vmatprep.subr.mxu0 0.0
    %2804 = vmatpush1.msra.mxu0 0.0
    %2805 = vmatprep.subr.mxu0 0.0
    %2806 = vmatpush1.msra.mxu0 0.0
    %2807 = vmatprep.subr.mxu0 0.0
    %2808 = vmatpush1.msra.mxu0 0.0
    %2809 = vmatprep.subr.mxu0 0.0
    %2810 = vmatpush1.msra.mxu0 0.0
    %2811 = vmatprep.subr.mxu0 0.0
    %2812 = vmatpush1.msra.mxu0 0.0
    %2813 = vmatprep.subr.mxu0 0.0
    %2814 = vmatpush1.msra.mxu0 0.0
    %2815 = vmatprep.subr.mxu0 0.0
    %2816 = vmatpush1.msra.mxu0 0.0
    %2817 = vmatprep.subr.mxu0 0.0
    %2818 = vmatpush1.msra.mxu0 0.0
    %2819 = vmatprep.subr.mxu0 0.0
    %2820 = vmatpush1.msra.mxu0 0.0
    %2821 = vmatprep.subr.mxu0 0.0
    %2822 = vmatpush1.msra.mxu0 0.0
    %2823 = vmatprep.subr.mxu0 0.0
    %2824 = vmatpush1.msra.mxu0 0.0
    %2825 = vmatprep.subr.mxu0 0.0
    %2826 = vmatpush1.msra.mxu0 0.0
    %2827 = vmatprep.subr.mxu0 0.0
    %2828 = vmatpush1.msra.mxu0 0.0
    %2829 = vmatprep.subr.mxu0 0.0
    %2830 = vmatpush1.msra.mxu0 0.0
    %2831 = vmatprep.subr.mxu0 0.0
    %2832 = vmatpush1.msra.mxu0 0.0
    %2833 = vmatprep.mubr.f32.mxu0 0.0
    %2834 = vmatmul.mubr.f32.gmra.mrb[0].mxu0 %v2764
    %v2835 = vpop.f32.mrb[0].mxu0
    %v2836 = vadd.f32 %v2762, %v2835
    %v2837 = vpop.f32.mrb[0].mxu0
    %2838 = vmatprep.mubr.f32.mxu0 0.0
    %2839 = vmatmul.mubr.f32.gmra.mrb[0].mxu0 %v2767
    %v2840 = vpop.f32.mrb[0].mxu0
    %v2841 = vadd.f32 %v2762, %v2840
    %v2842 = vpop.f32.mrb[0].mxu0
    %2843 = vdwg.mxu0
    %v2844 = vmul.f32 %v2836, %v2614
    %v2845 = vmul.f32 %v2841, %v2614
    %v2846 = vadd.f32 %v2844, %v2620
    %v2847 = vadd.f32 %v2845, %v2620
    %v2848 = vmax.f32 %v2846, 0.0
    %v2849 = vmax.f32 %v2847, 0.0
    %vm2850 = vcmask 254976
    %v2851 = vsel %vm2850, %v2848, -inf
    %v2852 = vrot.slane %v2851, 4
    %v2853 = vmax.f32 %v2851, %v2852
    %v2854 = vrot.slane %v2853, 2
    %v2855 = vmax.f32 %v2853, %v2854
    %v2856 = vrot.slane %v2855, 1
    %v2857 = vmax.f32 %v2855, %v2856
    %vm2858 = vcmask 257026
    %v2859 = vsel %vm2858, %v2848, -inf
    %v2860 = vrot.slane %v2859, 4
    %v2861 = vmax.f32 %v2859, %v2860
    %v2862 = vrot.slane %v2861, 2
    %v2863 = vmax.f32 %v2861, %v2862
    %v2864 = vrot.slane %v2863, 1
    %v2865 = vmax.f32 %v2863, %v2864
    %vm2866 = vcmask 259076
    %v2867 = vsel %vm2866, %v2848, -inf
    %v2868 = vrot.slane %v2867, 4
    %v2869 = vmax.f32 %v2867, %v2868
    %v2870 = vrot.slane %v2869, 2
    %v2871 = vmax.f32 %v2869, %v2870
    %v2872 = vrot.slane %v2871, 1
    %v2873 = vmax.f32 %v2871, %v2872
    %v2874 = vsel %vm2649, %v2848, -inf
    %v2875 = vrot.slane %v2874, 4
    %v2876 = vmax.f32 %v2874, %v2875
    %v2877 = vrot.slane %v2876, 2
    %v2878 = vmax.f32 %v2876, %v2877
    %v2879 = vrot.slane %v2878, 1
    %v2880 = vmax.f32 %v2878, %v2879
    %v2881 = vsel %vm2850, %v2849, -inf
    %v2882 = vrot.slane %v2881, 4
    %v2883 = vmax.f32 %v2881, %v2882
    %v2884 = vrot.slane %v2883, 2
    %v2885 = vmax.f32 %v2883, %v2884
    %v2886 = vrot.slane %v2885, 1
    %v2887 = vmax.f32 %v2885, %v2886
    %v2888 = vsel %vm2858, %v2849, -inf
    %v2889 = vrot.slane %v2888, 4
    %v2890 = vmax.f32 %v2888, %v2889
    %v2891 = vrot.slane %v2890, 2
    %v2892 = vmax.f32 %v2890, %v2891
    %v2893 = vrot.slane %v2892, 1
    %v2894 = vmax.f32 %v2892, %v2893
    %v2895 = vsel %vm2744, %v2857, %v2865
    %v2896 = vsel %vm2746, %v2895, %v2873
    %v2897 = vsel %vm2748, %v2896, %v2880
    %v2898 = vsel %vm2750, %v2897, %v2887
    %v2899 = vsel %vm2752, %v2898, %v2894
    %v2900 = vlaneseq
    %v2901 = vshrl.u32 %v2900, 7
    %v2902 = vsub.s32 0, %v2901
    %v2903 = vrot.slane %v2584, %v2902
    %v2905 = vsel %vm110, %v2899, 0
    %2907 = vmatprep.subr.mxu0 0.0
    %2908 = vmatpush1.msra.mxu0 %v2580
    %2909 = vmatprep.subr.mxu0 0.0
    %2910 = vmatpush1.msra.mxu0 %v2581
    %2911 = vmatprep.subr.mxu0 0.0
    %2912 = vmatpush1.msra.mxu0 %v2582
    %2913 = vmatprep.subr.mxu0 0.0
    %2914 = vmatpush1.msra.mxu0 %v2583
    %2915 = vmatprep.subr.mxu0 0.0
    %2916 = vmatpush1.msra.mxu0 0.0
    %2917 = vmatprep.subr.mxu0 0.0
    %2918 = vmatpush1.msra.mxu0 0.0
    %2919 = vmatprep.subr.mxu0 0.0
    %2920 = vmatpush1.msra.mxu0 0.0
    %2921 = vmatprep.subr.mxu0 0.0
    %2922 = vmatpush1.msra.mxu0 0.0
    %2923 = vmatprep.subr.mxu0 0.0
    %2924 = vmatpush1.msra.mxu0 0.0
    %2925 = vmatprep.subr.mxu0 0.0
    %2926 = vmatpush1.msra.mxu0 0.0
    %2927 = vmatprep.subr.mxu0 0.0
    %2928 = vmatpush1.msra.mxu0 0.0
    %2929 = vmatprep.subr.mxu0 0.0
    %2930 = vmatpush1.msra.mxu0 0.0
    %2931 = vmatprep.subr.mxu0 0.0
    %2932 = vmatpush1.msra.mxu0 0.0
    %2933 = vmatprep.subr.mxu0 0.0
    %2934 = vmatpush1.msra.mxu0 0.0
    %2935 = vmatprep.subr.mxu0 0.0
    %2936 = vmatpush1.msra.mxu0 0.0
    %2937 = vmatprep.subr.mxu0 0.0
    %2938 = vmatpush1.msra.mxu0 0.0
    %2939 = vmatprep.subr.mxu0 0.0
    %2940 = vmatpush1.msra.mxu0 0.0
    %2941 = vmatprep.subr.mxu0 0.0
    %2942 = vmatpush1.msra.mxu0 0.0
    %2943 = vmatprep.subr.mxu0 0.0
    %2944 = vmatpush1.msra.mxu0 0.0
    %2945 = vmatprep.subr.mxu0 0.0
    %2946 = vmatpush1.msra.mxu0 0.0
    %2947 = vmatprep.subr.mxu0 0.0
    %2948 = vmatpush1.msra.mxu0 0.0
    %2949 = vmatprep.subr.mxu0 0.0
    %2950 = vmatpush1.msra.mxu0 0.0
    %2951 = vmatprep.subr.mxu0 0.0
    %2952 = vmatpush1.msra.mxu0 0.0
    %2953 = vmatprep.subr.mxu0 0.0
    %2954 = vmatpush1.msra.mxu0 0.0
    %2955 = vmatprep.subr.mxu0 0.0
    %2956 = vmatpush1.msra.mxu0 0.0
    %2957 = vmatprep.subr.mxu0 0.0
    %2958 = vmatpush1.msra.mxu0 0.0
    %2959 = vmatprep.subr.mxu0 0.0
    %2960 = vmatpush1.msra.mxu0 0.0
    %2961 = vmatprep.subr.mxu0 0.0
    %2962 = vmatpush1.msra.mxu0 0.0
    %2963 = vmatprep.subr.mxu0 0.0
    %2964 = vmatpush1.msra.mxu0 0.0
    %2965 = vmatprep.subr.mxu0 0.0
    %2966 = vmatpush1.msra.mxu0 0.0
    %2967 = vmatprep.subr.mxu0 0.0
    %2968 = vmatpush1.msra.mxu0 0.0
    %2969 = vmatprep.subr.mxu0 0.0
    %2970 = vmatpush1.msra.mxu0 0.0
    %2971 = vmatprep.mubr.f32.mxu0 0.0
    %2972 = vmatmul.mubr.f32.gmra.mrb[0].mxu0 %v2905
    %v2973 = vpop.f32.mrb[0].mxu0
    %v2974 = vadd.f32 %v2903, %v2973
    %v2975 = vpop.f32.mrb[0].mxu0
    %2976 = vdwg.mxu0
    %v2977 = vld [vmem:[#allocation9 + $0x280] sm:$0x1]
    %v2978 = vld [vmem:[#allocation9 + $0x288] sm:$0x1]
    %v2979 = vld [vmem:[#allocation9 + $0x290] sm:$0x1]
    %v2980 = vld [vmem:[#allocation9 + $0x298] sm:$0xff]
    %v2981 = vld [vmem:[#allocation9 + $0x2a0] sm:$0xff]
    %v2982 = vld [vmem:[#allocation9 + $0x2a8] sm:$0xff]
    %v2983 = vld [vmem:[#allocation9 + $0x2b0] sm:$0xff]
    %v2984 = vld [vmem:[#allocation9 + $0x2b8] sm:$0xff]
    %v2985 = vld [vmem:[#allocation9 + $0x2c0] sm:$0xff]
    %v2986 = vld [vmem:[#allocation9 + $0x2c8] sm:$0xff]
    %v2987 = vld [vmem:[#allocation9 + $0x2d0] sm:$0xff]
    %v2988 = vld [vmem:[#allocation9 + $0x2d8] sm:$0x1]
    %v2989 = vld [vmem:[#allocation9 + $0x308] sm:$0xff]
    %v2990 = vld [vmem:[#allocation9 + $0x310] sm:$0xff]
    %v2991 = vld [vmem:[#allocation9 + $0x318] sm:$0xff]
    %v2992 = vld [vmem:[#allocation9 + $0x320] sm:$0xff]
    %v2993 = vld [vmem:[#allocation9 + $0x328] sm:$0xff]
    %v2994 = vld [vmem:[#allocation9 + $0x330] sm:$0xff]
    %v2995 = vld [vmem:[#allocation9 + $0x338] sm:$0xff]
    %v2996 = vld [vmem:[#allocation9 + $0x340] sm:$0xff]
    %v2997 = vld [vmem:[#allocation9 + $0x348] sm:$0x1]
    %v3000 = vrot.slane %v2376, 1
    %v3001 = vrot.slane %v2381, 1
    %v3002 = vsel %vm2587, %v3000, %v3001
    %v3005 = vadd.f32 %v2198, %v3002
    %v3006 = vadd.f32 %v2203, %v3001
    %v3009 = vrot.slane %v2554, 2
    %v3010 = vrot.slane %v2559, 2
    %v3011 = vsel %vm2597, %v3009, %v3010
    %v3014 = vadd.f32 %v3005, %v3011
    %v3015 = vadd.f32 %v3006, %v3010
    %v3016 = vlaneseq
    %v3017 = vshrl.u32 %v3016, 7
    %v3018 = vsub.s32 0, %v3017
    %v3019 = vrot.slane %v2977, %v3018
    %v3020 = vadd.f32 %v3014, %v3019
    %v3021 = vadd.f32 %v3015, %v3019
    %v3022 = vlaneseq
    %v3023 = vshrl.u32 %v3022, 7
    %v3024 = vsub.s32 0, %v3023
    %v3025 = vrot.slane %v2978, %v3024
    %v3026 = vmul.f32 %v3020, %v3025
    %v3027 = vmul.f32 %v3021, %v3025
    %v3028 = vlaneseq
    %v3029 = vshrl.u32 %v3028, 7
    %v3030 = vsub.s32 0, %v3029
    %v3031 = vrot.slane %v2979, %v3030
    %v3032 = vadd.f32 %v3026, %v3031
    %v3033 = vadd.f32 %v3027, %v3031
    %v3034 = vmax.f32 %v3032, 0.0
    %v3035 = vmax.f32 %v3033, 0.0
    %vm3036 = vcmask 518144
    %v3037 = vsel %vm3036, %v3034, -inf
    %v3038 = vrot.slane %v3037, 4
    %v3039 = vmax.f32 %v3037, %v3038
    %v3040 = vrot.slane %v3039, 2
    %v3041 = vmax.f32 %v3039, %v3040
    %v3042 = vrot.slane %v3041, 1
    %v3043 = vmax.f32 %v3041, %v3042
    %vm3044 = vcmask 520194
    %v3045 = vsel %vm3044, %v3034, -inf
    %v3046 = vrot.slane %v3045, 4
    %v3047 = vmax.f32 %v3045, %v3046
    %v3048 = vrot.slane %v3047, 2
    %v3049 = vmax.f32 %v3047, %v3048
    %v3050 = vrot.slane %v3049, 1
    %v3051 = vmax.f32 %v3049, %v3050
    %vm3052 = vcmask 522244
    %v3053 = vsel %vm3052, %v3034, -inf
    %v3054 = vrot.slane %v3053, 4
    %v3055 = vmax.f32 %v3053, %v3054
    %v3056 = vrot.slane %v3055, 2
    %v3057 = vmax.f32 %v3055, %v3056
    %v3058 = vrot.slane %v3057, 1
    %v3059 = vmax.f32 %v3057, %v3058
    %vm3060 = vcmask 523270
    %v3061 = vsel %vm3060, %v3034, -inf
    %vm3062 = vcmask 516096
    %v3063 = vsel %vm3062, %v3035, -inf
    %v3064 = vmax.f32 %v3061, %v3063
    %v3065 = vrot.slane %v3064, 4
    %v3066 = vmax.f32 %v3064, %v3065
    %v3067 = vrot.slane %v3066, 2
    %v3068 = vmax.f32 %v3066, %v3067
    %v3069 = vrot.slane %v3068, 1
    %v3070 = vmax.f32 %v3068, %v3069
    %v3071 = vsel %vm3036, %v3035, -inf
    %v3072 = vrot.slane %v3071, 4
    %v3073 = vmax.f32 %v3071, %v3072
    %v3074 = vrot.slane %v3073, 2
    %v3075 = vmax.f32 %v3073, %v3074
    %v3076 = vrot.slane %v3075, 1
    %v3077 = vmax.f32 %v3075, %v3076
    %v3078 = vsel %vm3044, %v3035, -inf
    %v3079 = vrot.slane %v3078, 4
    %v3080 = vmax.f32 %v3078, %v3079
    %v3081 = vrot.slane %v3080, 2
    %v3082 = vmax.f32 %v3080, %v3081
    %v3083 = vrot.slane %v3082, 1
    %v3084 = vmax.f32 %v3082, %v3083
    %v3087 = vrot.slane %v2386, 1
    %v3088 = vrot.slane %v2391, 1
    %v3089 = vsel %vm2587, %v3087, %v3088
    %v3092 = vadd.f32 %v2208, %v3089
    %v3093 = vadd.f32 %v2213, %v3088
    %v3096 = vrot.slane %v2564, 2
    %v3097 = vrot.slane %v2569, 2
    %v3098 = vsel %vm2597, %v3096, %v3097
    %v3101 = vadd.f32 %v3092, %v3098
    %v3102 = vadd.f32 %v3093, %v3097
    %v3103 = vadd.f32 %v3101, %v3019
    %v3104 = vadd.f32 %v3102, %v3019
    %v3105 = vmul.f32 %v3103, %v3025
    %v3106 = vmul.f32 %v3104, %v3025
    %v3107 = vadd.f32 %v3105, %v3031
    %v3108 = vadd.f32 %v3106, %v3031
    %v3109 = vmax.f32 %v3107, 0.0
    %v3110 = vmax.f32 %v3108, 0.0
    %v3111 = vsel %vm3036, %v3109, -inf
    %v3112 = vrot.slane %v3111, 4
    %v3113 = vmax.f32 %v3111, %v3112
    %v3114 = vrot.slane %v3113, 2
    %v3115 = vmax.f32 %v3113, %v3114
    %v3116 = vrot.slane %v3115, 1
    %v3117 = vmax.f32 %v3115, %v3116
    %v3118 = vsel %vm3044, %v3109, -inf
    %v3119 = vrot.slane %v3118, 4
    %v3120 = vmax.f32 %v3118, %v3119
    %v3121 = vrot.slane %v3120, 2
    %v3122 = vmax.f32 %v3120, %v3121
    %v3123 = vrot.slane %v3122, 1
    %v3124 = vmax.f32 %v3122, %v3123
    %v3125 = vsel %vm3052, %v3109, -inf
    %v3126 = vrot.slane %v3125, 4
    %v3127 = vmax.f32 %v3125, %v3126
    %v3128 = vrot.slane %v3127, 2
    %v3129 = vmax.f32 %v3127, %v3128
    %v3130 = vrot.slane %v3129, 1
    %v3131 = vmax.f32 %v3129, %v3130
    %v3132 = vsel %vm3060, %v3109, -inf
    %v3133 = vsel %vm3062, %v3110, -inf
    %v3134 = vmax.f32 %v3132, %v3133
    %v3135 = vrot.slane %v3134, 4
    %v3136 = vmax.f32 %v3134, %v3135
    %v3137 = vrot.slane %v3136, 2
    %v3138 = vmax.f32 %v3136, %v3137
    %v3139 = vrot.slane %v3138, 1
    %v3140 = vmax.f32 %v3138, %v3139
    %v3141 = vsel %vm3036, %v3110, -inf
    %v3142 = vrot.slane %v3141, 4
    %v3143 = vmax.f32 %v3141, %v3142
    %v3144 = vrot.slane %v3143, 2
    %v3145 = vmax.f32 %v3143, %v3144
    %v3146 = vrot.slane %v3145, 1
    %v3147 = vmax.f32 %v3145, %v3146
    %v3148 = vsel %vm3044, %v3110, -inf
    %v3149 = vrot.slane %v3148, 4
    %v3150 = vmax.f32 %v3148, %v3149
    %v3151 = vrot.slane %v3150, 2
    %v3152 = vmax.f32 %v3150, %v3151
    %v3153 = vrot.slane %v3152, 1
    %v3154 = vmax.f32 %v3152, %v3153
    %v3155 = vsel %vm2744, %v3043, %v3051
    %v3156 = vsel %vm2746, %v3155, %v3059
    %v3157 = vsel %vm2748, %v3156, %v3070
    %v3158 = vsel %vm2750, %v3157, %v3077
    %v3159 = vsel %vm2752, %v3158, %v3084
    %v3160 = vsel %vm2597, %v3159, %v3117
    %v3161 = vsel %vm2587, %v3160, %v3124
    %v3162 = vsel %vm2744, %v3131, %v3140
    %v3163 = vsel %vm2746, %v3162, %v3147
    %v3164 = vsel %vm2748, %v3163, %v3154
    %v3165 = vlaneseq
    %v3166 = vshrl.u32 %v3165, 7
    %v3167 = vsub.s32 0, %v3166
    %v3168 = vrot.slane %v2988, %v3167
    %vm3169 = vcmask 523264
    %v3171 = vsel %vm3169, %v3161, 0
    %v3174 = vsel %vm3169, %v3164, 0
    %3176 = vmatprep.subr.mxu0 0.0
    %3177 = vmatpush1.msra.mxu0 %v2980
    %3178 = vmatprep.subr.mxu0 0.0
    %3179 = vmatpush1.msra.mxu0 %v2981
    %3180 = vmatprep.subr.mxu0 0.0
    %3181 = vmatpush1.msra.mxu0 %v2982
    %3182 = vmatprep.subr.mxu0 0.0
    %3183 = vmatpush1.msra.mxu0 %v2983
    %3184 = vmatprep.subr.mxu0 0.0
    %3185 = vmatpush1.msra.mxu0 %v2984
    %3186 = vmatprep.subr.mxu0 0.0
    %3187 = vmatpush1.msra.mxu0 %v2985
    %3188 = vmatprep.subr.mxu0 0.0
    %3189 = vmatpush1.msra.mxu0 %v2986
    %3190 = vmatprep.subr.mxu0 0.0
    %3191 = vmatpush1.msra.mxu0 %v2987
    %3192 = vmatprep.subr.mxu0 0.0
    %3193 = vmatpush1.msra.mxu0 0.0
    %3194 = vmatprep.subr.mxu0 0.0
    %3195 = vmatpush1.msra.mxu0 0.0
    %3196 = vmatprep.subr.mxu0 0.0
    %3197 = vmatpush1.msra.mxu0 0.0
    %3198 = vmatprep.subr.mxu0 0.0
    %3199 = vmatpush1.msra.mxu0 0.0
    %3200 = vmatprep.subr.mxu0 0.0
    %3201 = vmatpush1.msra.mxu0 0.0
    %3202 = vmatprep.subr.mxu0 0.0
    %3203 = vmatpush1.msra.mxu0 0.0
    %3204 = vmatprep.subr.mxu0 0.0
    %3205 = vmatpush1.msra.mxu0 0.0
    %3206 = vmatprep.subr.mxu0 0.0
    %3207 = vmatpush1.msra.mxu0 0.0
    %3208 = vmatprep.subr.mxu0 0.0
    %3209 = vmatpush1.msra.mxu0 0.0
    %3210 = vmatprep.subr.mxu0 0.0
    %3211 = vmatpush1.msra.mxu0 0.0
    %3212 = vmatprep.subr.mxu0 0.0
    %3213 = vmatpush1.msra.mxu0 0.0
    %3214 = vmatprep.subr.mxu0 0.0
    %3215 = vmatpush1.msra.mxu0 0.0
    %3216 = vmatprep.subr.mxu0 0.0
    %3217 = vmatpush1.msra.mxu0 0.0
    %3218 = vmatprep.subr.mxu0 0.0
    %3219 = vmatpush1.msra.mxu0 0.0
    %3220 = vmatprep.subr.mxu0 0.0
    %3221 = vmatpush1.msra.mxu0 0.0
    %3222 = vmatprep.subr.mxu0 0.0
    %3223 = vmatpush1.msra.mxu0 0.0
    %3224 = vmatprep.subr.mxu0 0.0
    %3225 = vmatpush1.msra.mxu0 0.0
    %3226 = vmatprep.subr.mxu0 0.0
    %3227 = vmatpush1.msra.mxu0 0.0
    %3228 = vmatprep.subr.mxu0 0.0
    %3229 = vmatpush1.msra.mxu0 0.0
    %3230 = vmatprep.subr.mxu0 0.0
    %3231 = vmatpush1.msra.mxu0 0.0
    %3232 = vmatprep.subr.mxu0 0.0
    %3233 = vmatpush1.msra.mxu0 0.0
    %3234 = vmatprep.subr.mxu0 0.0
    %3235 = vmatpush1.msra.mxu0 0.0
    %3236 = vmatprep.subr.mxu0 0.0
    %3237 = vmatpush1.msra.mxu0 0.0
    %3238 = vmatprep.subr.mxu0 0.0
    %3239 = vmatpush1.msra.mxu0 0.0
    %3240 = vmatprep.mubr.f32.mxu0 0.0
    %3241 = vmatmul.mubr.f32.gmra.mrb[0].mxu0 %v3171
    %v3242 = vpop.f32.mrb[0].mxu0
    %v3243 = vadd.f32 %v3168, %v3242
    %v3244 = vpop.f32.mrb[0].mxu0
    %3245 = vmatprep.mubr.f32.mxu0 0.0
    %3246 = vmatmul.mubr.f32.gmra.mrb[0].mxu0 %v3174
    %v3247 = vpop.f32.mrb[0].mxu0
    %v3248 = vadd.f32 %v3168, %v3247
    %v3249 = vpop.f32.mrb[0].mxu0
    %3250 = vdwg.mxu0
    %v3251 = vmul.f32 %v3243, %v3025
    %v3252 = vmul.f32 %v3248, %v3025
    %v3253 = vadd.f32 %v3251, %v3031
    %v3254 = vadd.f32 %v3252, %v3031
    %v3255 = vmax.f32 %v3253, 0.0
    %v3256 = vmax.f32 %v3254, 0.0
    %vm3257 = vcmask 517120
    %v3258 = vsel %vm3257, %v3255, -inf
    %v3259 = vrot.slane %v3258, 4
    %v3260 = vmax.f32 %v3258, %v3259
    %v3261 = vrot.slane %v3260, 2
    %v3262 = vmax.f32 %v3260, %v3261
    %v3263 = vrot.slane %v3262, 1
    %v3264 = vmax.f32 %v3262, %v3263
    %vm3265 = vcmask 519170
    %v3266 = vsel %vm3265, %v3255, -inf
    %v3267 = vrot.slane %v3266, 4
    %v3268 = vmax.f32 %v3266, %v3267
    %v3269 = vrot.slane %v3268, 2
    %v3270 = vmax.f32 %v3268, %v3269
    %v3271 = vrot.slane %v3270, 1
    %v3272 = vmax.f32 %v3270, %v3271
    %vm3273 = vcmask 521220
    %v3274 = vsel %vm3273, %v3255, -inf
    %v3275 = vrot.slane %v3274, 4
    %v3276 = vmax.f32 %v3274, %v3275
    %v3277 = vrot.slane %v3276, 2
    %v3278 = vmax.f32 %v3276, %v3277
    %v3279 = vrot.slane %v3278, 1
    %v3280 = vmax.f32 %v3278, %v3279
    %v3281 = vsel %vm3060, %v3255, -inf
    %v3282 = vrot.slane %v3281, 4
    %v3283 = vmax.f32 %v3281, %v3282
    %v3284 = vrot.slane %v3283, 2
    %v3285 = vmax.f32 %v3283, %v3284
    %v3286 = vrot.slane %v3285, 1
    %v3287 = vmax.f32 %v3285, %v3286
    %v3288 = vsel %vm3257, %v3256, -inf
    %v3289 = vrot.slane %v3288, 4
    %v3290 = vmax.f32 %v3288, %v3289
    %v3291 = vrot.slane %v3290, 2
    %v3292 = vmax.f32 %v3290, %v3291
    %v3293 = vrot.slane %v3292, 1
    %v3294 = vmax.f32 %v3292, %v3293
    %v3295 = vsel %vm3265, %v3256, -inf
    %v3296 = vrot.slane %v3295, 4
    %v3297 = vmax.f32 %v3295, %v3296
    %v3298 = vrot.slane %v3297, 2
    %v3299 = vmax.f32 %v3297, %v3298
    %v3300 = vrot.slane %v3299, 1
    %v3301 = vmax.f32 %v3299, %v3300
    %v3302 = vsel %vm2744, %v3264, %v3272
    %v3303 = vsel %vm2746, %v3302, %v3280
    %v3304 = vsel %vm2748, %v3303, %v3287
    %v3305 = vsel %vm2750, %v3304, %v3294
    %v3306 = vsel %vm2752, %v3305, %v3301
    %v3307 = vlaneseq
    %v3308 = vshrl.u32 %v3307, 7
    %v3309 = vsub.s32 0, %v3308
    %v3310 = vrot.slane %v2997, %v3309
    %v3312 = vsel %vm3169, %v3306, 0
    %3314 = vmatprep.subr.mxu0 0.0
    %3315 = vmatpush1.msra.mxu0 %v2989
    %3316 = vmatprep.subr.mxu0 0.0
    %3317 = vmatpush1.msra.mxu0 %v2990
    %3318 = vmatprep.subr.mxu0 0.0
    %3319 = vmatpush1.msra.mxu0 %v2991
    %3320 = vmatprep.subr.mxu0 0.0
    %3321 = vmatpush1.msra.mxu0 %v2992
    %3322 = vmatprep.subr.mxu0 0.0
    %3323 = vmatpush1.msra.mxu0 %v2993
    %3324 = vmatprep.subr.mxu0 0.0
    %3325 = vmatpush1.msra.mxu0 %v2994
    %3326 = vmatprep.subr.mxu0 0.0
    %3327 = vmatpush1.msra.mxu0 %v2995
    %3328 = vmatprep.subr.mxu0 0.0
    %3329 = vmatpush1.msra.mxu0 %v2996
    %3330 = vmatprep.subr.mxu0 0.0
    %3331 = vmatpush1.msra.mxu0 0.0
    %3332 = vmatprep.subr.mxu0 0.0
    %3333 = vmatpush1.msra.mxu0 0.0
    %3334 = vmatprep.subr.mxu0 0.0
    %3335 = vmatpush1.msra.mxu0 0.0
    %3336 = vmatprep.subr.mxu0 0.0
    %3337 = vmatpush1.msra.mxu0 0.0
    %3338 = vmatprep.subr.mxu0 0.0
    %3339 = vmatpush1.msra.mxu0 0.0
    %3340 = vmatprep.subr.mxu0 0.0
    %3341 = vmatpush1.msra.mxu0 0.0
    %3342 = vmatprep.subr.mxu0 0.0
    %3343 = vmatpush1.msra.mxu0 0.0
    %3344 = vmatprep.subr.mxu0 0.0
    %3345 = vmatpush1.msra.mxu0 0.0
    %3346 = vmatprep.subr.mxu0 0.0
    %3347 = vmatpush1.msra.mxu0 0.0
    %3348 = vmatprep.subr.mxu0 0.0
    %3349 = vmatpush1.msra.mxu0 0.0
    %3350 = vmatprep.subr.mxu0 0.0
    %3351 = vmatpush1.msra.mxu0 0.0
    %3352 = vmatprep.subr.mxu0 0.0
    %3353 = vmatpush1.msra.mxu0 0.0
    %3354 = vmatprep.subr.mxu0 0.0
    %3355 = vmatpush1.msra.mxu0 0.0
    %3356 = vmatprep.subr.mxu0 0.0
    %3357 = vmatpush1.msra.mxu0 0.0
    %3358 = vmatprep.subr.mxu0 0.0
    %3359 = vmatpush1.msra.mxu0 0.0
    %3360 = vmatprep.subr.mxu0 0.0
    %3361 = vmatpush1.msra.mxu0 0.0
    %3362 = vmatprep.subr.mxu0 0.0
    %3363 = vmatpush1.msra.mxu0 0.0
    %3364 = vmatprep.subr.mxu0 0.0
    %3365 = vmatpush1.msra.mxu0 0.0
    %3366 = vmatprep.subr.mxu0 0.0
    %3367 = vmatpush1.msra.mxu0 0.0
    %3368 = vmatprep.subr.mxu0 0.0
    %3369 = vmatpush1.msra.mxu0 0.0
    %3370 = vmatprep.subr.mxu0 0.0
    %3371 = vmatpush1.msra.mxu0 0.0
    %3372 = vmatprep.subr.mxu0 0.0
    %3373 = vmatpush1.msra.mxu0 0.0
    %3374 = vmatprep.subr.mxu0 0.0
    %3375 = vmatpush1.msra.mxu0 0.0
    %3376 = vmatprep.subr.mxu0 0.0
    %3377 = vmatpush1.msra.mxu0 0.0
    %3378 = vmatprep.mubr.f32.mxu0 0.0
    %3379 = vmatmul.mubr.f32.gmra.mrb[0].mxu0 %v3312
    %v3380 = vpop.f32.mrb[0].mxu0
    %v3381 = vadd.f32 %v3310, %v3380
    %v3382 = vpop.f32.mrb[0].mxu0
    %3383 = vdwg.mxu0
    %v3384 = vmul.f32 %v2974, %v3381
    %v3385 = vsel %vm2748, %v3384, 0.0
    %v3386 = vrot.slane %v3385, 4
    %v3387 = vadd.f32 %v3385, %v3386
    %v3388 = vrot.slane %v3387, 2
    %v3389 = vadd.f32 %v3387, %v3388
    %v3390 = vrot.slane %v3389, 1
    %v3391 = vadd.f32 %v3389, %v3390
    %v3392 = vmul.f32 %v3391, 0.33333334
    %v3394 = vrot.slane %v3384, 3
    %v3396 = vsel %vm2748, %v3394, 0.0
    %v3397 = vrot.slane %v3396, 4
    %v3398 = vadd.f32 %v3396, %v3397
    %v3399 = vrot.slane %v3398, 2
    %v3400 = vadd.f32 %v3398, %v3399
    %v3401 = vrot.slane %v3400, 1
    %v3402 = vadd.f32 %v3400, %v3401
    %v3403 = vmul.f32 %v3402, 0.33333334
    %v3404 = vsel %vm2744, %v3392, %v3403
    %v3405 = vsel %vm2746, %v3404, 0.0
    %3406 = vst [vmem:[#allocation10] sm:$0xff] %v3405
    // Predicated region
    $region34: #{tpu_custom_call.1} parent=1 // pred_check
      _
    $region35: #{tpu_custom_call.1} parent=1 // pred_check_branch
      %3408 = sbr.rel (0) target = $region37
    $region36: #{tpu_custom_call.1} parent=1 // pred_region
      %s3410 = ssub.s32 128, 128
      %3411 = vsyncadd [#allocation4], %s3410
      %s3413 = sshll.u32 [#allocation10], 4
      %s3414 = int_to_ptr.vmem [resolvable:$true] %s3413
      %3416 = dma.vmem_to_hbm [thread:$0]  %s3414, 128, %s4, [#allocation4]
    $region37: #{tpu_custom_call.1} parent=1 // pred_fallthru
      _
    // Predicated region
    $region38: #{tpu_custom_call.1} parent=1 // pred_check
      _
    $region39: #{tpu_custom_call.1} parent=1 // pred_check_branch
      %3418 = sbr.rel (0) target = $region41
    $region40: #{tpu_custom_call.1} parent=1 // pred_region
      %3419 = dma.done [#allocation4], 128
    $region41: #{tpu_custom_call.1} parent=1 // pred_fallthru
      _
    %3420 = vsyncpa [#allocation3], 1
    %3421 = vsyncpa [#allocation8], 1
    %3422 = vsyncpa [#allocation4], 1
    %3423 = vsyncpa [#allocation5], 1

</llo_original>
